<compile_context>
chip_gen: v7x
topology: tpu7x:2x2x1
jax: 0.10.0
libtpu: 0.0.40
codegen_flags: <defaults>
</compile_context>

<pallas_src>
import jax
import jax.numpy as jnp
from jax.experimental import pallas as pl
from jax.experimental.pallas import tpu as pltpu

LAYER_SIZES = [6, 100, 200, 300, 400, 500, 600, 660]
# Lane-aligned hidden widths; the final width stays 660 so the kernel emits
# the true output width (only the last 20-lane vreg store is masked).
PADDED_SIZES = [6, 128, 256, 384, 512, 512, 640, 660]
LEAKY_SLOPE = 0.01          # nn.LeakyReLU() default negative_slope
TB_MAX = 1024               # batch-tile upper bound (sized for 48 MiB VMEM)


def _round_up(n, m):
    return ((n + m - 1) // m) * m


def mlp_kernel(*refs):
    """refs = (x_ref, w1, b1, w2, b2, ..., w7, b7, out_ref). All blocks in VMEM."""
    x_ref, out_ref = refs[0], refs[-1]
    param_refs = refs[1:-1]
    n_layers = len(param_refs) // 2

    h = x_ref[...]                               # (TB, 6) f32
    for i in range(n_layers):
        w = param_refs[2 * i][...]               # (in_p, out_p)  weight dtype
        b = param_refs[2 * i + 1][...]           # (1, out_p)     f32
        h = jnp.dot(h.astype(w.dtype), w,
                    preferred_element_type=jnp.float32) + b
        if i < n_layers - 1:
            # LeakyReLU (slope < 1 => max form is exact). Dropout(0.0) is identity.
            h = jnp.maximum(h, LEAKY_SLOPE * h)
    out_ref[...] = h.astype(out_ref.dtype)


def init_params(key):
    """Shapes/init matching the torch module (weights stored as (in, out))."""
    params = []
    for fan_in, fan_out in zip(LAYER_SIZES[:-1], LAYER_SIZES[1:]):
        key, kw, kb = jax.random.split(key, 3)
        w_bound = (6.0 / (fan_in + fan_out)) ** 0.5      # xavier_uniform_
        w = jax.random.uniform(kw, (fan_in, fan_out), jnp.float32,
                               minval=-w_bound, maxval=w_bound)
        b_bound = 1.0 / (fan_in ** 0.5)                  # torch Linear bias init
        b = jax.random.uniform(kb, (1, fan_out), jnp.float32,
                               minval=-b_bound, maxval=b_bound)
        params.append((w, b))
    return params


def pad_params(params, weight_dtype=jnp.bfloat16):
    """Zero-pad to lane-aligned widths once; optionally cast weights to bf16."""
    padded = []
    for (w, b), din, dout in zip(params, PADDED_SIZES[:-1], PADDED_SIZES[1:]):
        wp = jnp.pad(w, ((0, din - w.shape[0]), (0, dout - w.shape[1])))
        bp = jnp.pad(b, ((0, 0), (0, dout - b.shape[1])))
        padded.append((wp.astype(weight_dtype), bp.astype(jnp.float32)))
    return padded


def mlp_forward(x, padded_params):
    """x: (B, ...) flattening to 6 features. Returns (B, 660) float32."""
    B = x.shape[0]
    x2d = x.reshape(B, -1).astype(jnp.float32)   # mirrors x.view(B, -1)
    assert x2d.shape[1] == LAYER_SIZES[0]

    # Batch tile: large enough to amortize per-grid-step overhead, but keep
    # the grid >= 2 steps when B allows so both v7x TensorCores get work.
    TB = min(TB_MAX, max(8, _round_up((B + 1) // 2, 8)))
    Bp = _round_up(B, TB)
    if Bp != B:
        x2d = jnp.pad(x2d, ((0, Bp - B), (0, 0)))

    in_dim, out_dim = PADDED_SIZES[0], PADDED_SIZES[-1]

    flat_params = []
    in_specs = [pl.BlockSpec((TB, in_dim), lambda i: (i, 0))]
    for w, b in padded_params:
        flat_params += [w, b]
        # Constant block index => params are DMA'd once and stay VMEM-resident.
        in_specs += [pl.BlockSpec(w.shape, lambda i: (0, 0)),
                     pl.BlockSpec(b.shape, lambda i: (0, 0))]

    flops = 2 * Bp * sum(d_in * d_out
                         for d_in, d_out in zip(LAYER_SIZES[:-1], LAYER_SIZES[1:]))
    param_bytes = sum(int(a.size) * a.dtype.itemsize
                      for w, b in padded_params for a in (w, b))
    cost = pl.CostEstimate(
        flops=flops,
        transcendentals=0,
        bytes_accessed=Bp * (in_dim + out_dim) * 4 + param_bytes)

    out = pl.pallas_call(
        mlp_kernel,
        out_shape=jax.ShapeDtypeStruct((Bp, out_dim), jnp.float32),
        grid=(Bp // TB,),
        in_specs=in_specs,
        out_specs=pl.BlockSpec((TB, out_dim), lambda i: (i, 0)),
        compiler_params=pltpu.CompilerParams(
            dimension_semantics=("parallel",),
            vmem_limit_bytes=48 * 1024 * 1024),
        cost_estimate=cost,
    )(x2d, *flat_params)

    return out if Bp == B else out[:B]


def mlp_reference(x, params, weight_dtype=jnp.float32):
    """Pure-JAX reference (optionally with the same bf16 weight quantization)."""
    h = x.reshape(x.shape[0], -1).astype(jnp.float32)
    n = len(params)
    for i, (w, b) in enumerate(params):
        wq = w.astype(weight_dtype).astype(jnp.float32)
        hq = h.astype(weight_dtype).astype(jnp.float32)
        h = hq @ wq + b
        if i < n - 1:
            h = jnp.maximum(h, LEAKY_SLOPE * h)
    return h


if __name__ == "__main__":
    key = jax.random.PRNGKey(0)
    key, kx = jax.random.split(key)
    params = init_params(key)

    # Small batch; (B, 6) feature layout implied by the module's forward.
    x = jax.random.normal(kx, (8, 6), jnp.float32)

    # f32 weights: matches the original module's semantics.
    out_f32 = jax.block_until_ready(mlp_forward(x, pad_params(params, jnp.float32)))
    ref_f32 = mlp_reference(x, params, jnp.float32)
    assert out_f32.shape == (8, 660), out_f32.shape
    assert jnp.allclose(out_f32, ref_f32, atol=1e-4, rtol=1e-4), \
        float(jnp.max(jnp.abs(out_f32 - ref_f32)))

    # bf16 weights (recommended fast path): compared against a reference that
    # applies the same bf16 rounding so the check stays tight.
    out_bf16 = jax.block_until_ready(mlp_forward(x, pad_params(params, jnp.bfloat16)))
    ref_bf16 = mlp_reference(x, params, jnp.bfloat16)
    assert out_bf16.shape == (8, 660), out_bf16.shape
    assert jnp.allclose(out_bf16, ref_bf16, atol=1e-2, rtol=1e-2), \
        float(jnp.max(jnp.abs(out_bf16 - ref_bf16)))

    print("KERNEL_OK")
</pallas_src>

<mosaic_0001>
module attributes {stable_mosaic.version = 11 : i64} {
  func.func @mlp_kernel(%arg0: i32, %arg1: memref<8x6xf32, #tpu.memory_space<vmem>>, %arg2: memref<6x128xf32, #tpu.memory_space<vmem>>, %arg3: memref<1x128xf32, #tpu.memory_space<vmem>>, %arg4: memref<128x256xf32, #tpu.memory_space<vmem>>, %arg5: memref<1x256xf32, #tpu.memory_space<vmem>>, %arg6: memref<256x384xf32, #tpu.memory_space<vmem>>, %arg7: memref<1x384xf32, #tpu.memory_space<vmem>>, %arg8: memref<384x512xf32, #tpu.memory_space<vmem>>, %arg9: memref<1x512xf32, #tpu.memory_space<vmem>>, %arg10: memref<512x512xf32, #tpu.memory_space<vmem>>, %arg11: memref<1x512xf32, #tpu.memory_space<vmem>>, %arg12: memref<512x640xf32, #tpu.memory_space<vmem>>, %arg13: memref<1x640xf32, #tpu.memory_space<vmem>>, %arg14: memref<640x660xf32, #tpu.memory_space<vmem>>, %arg15: memref<1x660xf32, #tpu.memory_space<vmem>>, %arg16: memref<8x660xf32, #tpu.memory_space<vmem>>) attributes {dimension_semantics = [#tpu.dimension_semantics<parallel>], iteration_bounds = array<i64: 1>, scalar_prefetch = 0 : i64, scratch_operands = 0 : i64, tpu.core_type = #tpu.core_type<tc>, window_params = [{transform_indices = @transform_0, window_bounds = array<i64: 8, 6>}, {pipeline_mode = #tpu.pipeline_mode<synchronous>, transform_indices = @transform_1, window_bounds = array<i64: 6, 128>}, {pipeline_mode = #tpu.pipeline_mode<synchronous>, transform_indices = @transform_2, window_bounds = array<i64: 1, 128>}, {pipeline_mode = #tpu.pipeline_mode<synchronous>, transform_indices = @transform_3, window_bounds = array<i64: 128, 256>}, {pipeline_mode = #tpu.pipeline_mode<synchronous>, transform_indices = @transform_4, window_bounds = array<i64: 1, 256>}, {pipeline_mode = #tpu.pipeline_mode<synchronous>, transform_indices = @transform_5, window_bounds = array<i64: 256, 384>}, {pipeline_mode = #tpu.pipeline_mode<synchronous>, transform_indices = @transform_6, window_bounds = array<i64: 1, 384>}, {pipeline_mode = #tpu.pipeline_mode<synchronous>, transform_indices = @transform_7, window_bounds = array<i64: 384, 512>}, {pipeline_mode = #tpu.pipeline_mode<synchronous>, transform_indices = @transform_8, window_bounds = array<i64: 1, 512>}, {pipeline_mode = #tpu.pipeline_mode<synchronous>, transform_indices = @transform_9, window_bounds = array<i64: 512, 512>}, {pipeline_mode = #tpu.pipeline_mode<synchronous>, transform_indices = @transform_10, window_bounds = array<i64: 1, 512>}, {pipeline_mode = #tpu.pipeline_mode<synchronous>, transform_indices = @transform_11, window_bounds = array<i64: 512, 640>}, {pipeline_mode = #tpu.pipeline_mode<synchronous>, transform_indices = @transform_12, window_bounds = array<i64: 1, 640>}, {pipeline_mode = #tpu.pipeline_mode<synchronous>, transform_indices = @transform_13, window_bounds = array<i64: 640, 660>}, {pipeline_mode = #tpu.pipeline_mode<synchronous>, transform_indices = @transform_14, window_bounds = array<i64: 1, 660>}, {transform_indices = @transform_15, window_bounds = array<i64: 8, 660>}]} {
    %c0 = arith.constant 0 : index
    %c0_0 = arith.constant 0 : index
    %0 = vector.load %arg1[%c0, %c0_0] : memref<8x6xf32, #tpu.memory_space<vmem>>, vector<8x6xf32>
    %c0_1 = arith.constant 0 : index
    %c0_2 = arith.constant 0 : index
    %1 = vector.load %arg2[%c0_1, %c0_2] : memref<6x128xf32, #tpu.memory_space<vmem>>, vector<6x128xf32>
    %c0_3 = arith.constant 0 : index
    %c0_4 = arith.constant 0 : index
    %2 = vector.load %arg3[%c0_3, %c0_4] : memref<1x128xf32, #tpu.memory_space<vmem>>, vector<1x128xf32>
    %cst = arith.constant dense<0.000000e+00> : vector<8x128xf32>
    %3 = tpu.matmul %0, %1, %cst {dimension_numbers = #tpu.dot_dimension_numbers<[1], [0], [0], [1], [0, 0, 1, 1], [], []>} : vector<8x6xf32>, vector<6x128xf32>, vector<8x128xf32> -> vector<8x128xf32>
    %4 = vector.broadcast %2 : vector<1x128xf32> to vector<8x128xf32>
    %5 = arith.addf %3, %4 : vector<8x128xf32>
    %cst_5 = arith.constant 0.00999999977 : f32
    %6 = vector.broadcast %cst_5 : f32 to vector<8x128xf32>
    %7 = arith.mulf %6, %5 : vector<8x128xf32>
    %8 = arith.maximumf %5, %7 : vector<8x128xf32>
    %c0_6 = arith.constant 0 : index
    %c0_7 = arith.constant 0 : index
    %9 = vector.load %arg4[%c0_6, %c0_7] : memref<128x256xf32, #tpu.memory_space<vmem>>, vector<128x256xf32>
    %c0_8 = arith.constant 0 : index
    %c0_9 = arith.constant 0 : index
    %10 = vector.load %arg5[%c0_8, %c0_9] : memref<1x256xf32, #tpu.memory_space<vmem>>, vector<1x256xf32>
    %cst_10 = arith.constant dense<0.000000e+00> : vector<8x256xf32>
    %11 = tpu.matmul %8, %9, %cst_10 {dimension_numbers = #tpu.dot_dimension_numbers<[1], [0], [0], [1], [0, 0, 1, 1], [], []>} : vector<8x128xf32>, vector<128x256xf32>, vector<8x256xf32> -> vector<8x256xf32>
    %12 = vector.broadcast %10 : vector<1x256xf32> to vector<8x256xf32>
    %13 = arith.addf %11, %12 : vector<8x256xf32>
    %cst_11 = arith.constant 0.00999999977 : f32
    %14 = vector.broadcast %cst_11 : f32 to vector<8x256xf32>
    %15 = arith.mulf %14, %13 : vector<8x256xf32>
    %16 = arith.maximumf %13, %15 : vector<8x256xf32>
    %c0_12 = arith.constant 0 : index
    %c0_13 = arith.constant 0 : index
    %17 = vector.load %arg6[%c0_12, %c0_13] : memref<256x384xf32, #tpu.memory_space<vmem>>, vector<256x384xf32>
    %c0_14 = arith.constant 0 : index
    %c0_15 = arith.constant 0 : index
    %18 = vector.load %arg7[%c0_14, %c0_15] : memref<1x384xf32, #tpu.memory_space<vmem>>, vector<1x384xf32>
    %cst_16 = arith.constant dense<0.000000e+00> : vector<8x384xf32>
    %19 = tpu.matmul %16, %17, %cst_16 {dimension_numbers = #tpu.dot_dimension_numbers<[1], [0], [0], [1], [0, 0, 1, 1], [], []>} : vector<8x256xf32>, vector<256x384xf32>, vector<8x384xf32> -> vector<8x384xf32>
    %20 = vector.broadcast %18 : vector<1x384xf32> to vector<8x384xf32>
    %21 = arith.addf %19, %20 : vector<8x384xf32>
    %cst_17 = arith.constant 0.00999999977 : f32
    %22 = vector.broadcast %cst_17 : f32 to vector<8x384xf32>
    %23 = arith.mulf %22, %21 : vector<8x384xf32>
    %24 = arith.maximumf %21, %23 : vector<8x384xf32>
    %c0_18 = arith.constant 0 : index
    %c0_19 = arith.constant 0 : index
    %25 = vector.load %arg8[%c0_18, %c0_19] : memref<384x512xf32, #tpu.memory_space<vmem>>, vector<384x512xf32>
    %c0_20 = arith.constant 0 : index
    %c0_21 = arith.constant 0 : index
    %26 = vector.load %arg9[%c0_20, %c0_21] : memref<1x512xf32, #tpu.memory_space<vmem>>, vector<1x512xf32>
    %cst_22 = arith.constant dense<0.000000e+00> : vector<8x512xf32>
    %27 = tpu.matmul %24, %25, %cst_22 {dimension_numbers = #tpu.dot_dimension_numbers<[1], [0], [0], [1], [0, 0, 1, 1], [], []>} : vector<8x384xf32>, vector<384x512xf32>, vector<8x512xf32> -> vector<8x512xf32>
    %28 = vector.broadcast %26 : vector<1x512xf32> to vector<8x512xf32>
    %29 = arith.addf %27, %28 : vector<8x512xf32>
    %cst_23 = arith.constant 0.00999999977 : f32
    %30 = vector.broadcast %cst_23 : f32 to vector<8x512xf32>
    %31 = arith.mulf %30, %29 : vector<8x512xf32>
    %32 = arith.maximumf %29, %31 : vector<8x512xf32>
    %c0_24 = arith.constant 0 : index
    %c0_25 = arith.constant 0 : index
    %33 = vector.load %arg10[%c0_24, %c0_25] : memref<512x512xf32, #tpu.memory_space<vmem>>, vector<512x512xf32>
    %c0_26 = arith.constant 0 : index
    %c0_27 = arith.constant 0 : index
    %34 = vector.load %arg11[%c0_26, %c0_27] : memref<1x512xf32, #tpu.memory_space<vmem>>, vector<1x512xf32>
    %cst_28 = arith.constant dense<0.000000e+00> : vector<8x512xf32>
    %35 = tpu.matmul %32, %33, %cst_28 {dimension_numbers = #tpu.dot_dimension_numbers<[1], [0], [0], [1], [0, 0, 1, 1], [], []>} : vector<8x512xf32>, vector<512x512xf32>, vector<8x512xf32> -> vector<8x512xf32>
    %36 = vector.broadcast %34 : vector<1x512xf32> to vector<8x512xf32>
    %37 = arith.addf %35, %36 : vector<8x512xf32>
    %cst_29 = arith.constant 0.00999999977 : f32
    %38 = vector.broadcast %cst_29 : f32 to vector<8x512xf32>
    %39 = arith.mulf %38, %37 : vector<8x512xf32>
    %40 = arith.maximumf %37, %39 : vector<8x512xf32>
    %c0_30 = arith.constant 0 : index
    %c0_31 = arith.constant 0 : index
    %41 = vector.load %arg12[%c0_30, %c0_31] : memref<512x640xf32, #tpu.memory_space<vmem>>, vector<512x640xf32>
    %c0_32 = arith.constant 0 : index
    %c0_33 = arith.constant 0 : index
    %42 = vector.load %arg13[%c0_32, %c0_33] : memref<1x640xf32, #tpu.memory_space<vmem>>, vector<1x640xf32>
    %cst_34 = arith.constant dense<0.000000e+00> : vector<8x640xf32>
    %43 = tpu.matmul %40, %41, %cst_34 {dimension_numbers = #tpu.dot_dimension_numbers<[1], [0], [0], [1], [0, 0, 1, 1], [], []>} : vector<8x512xf32>, vector<512x640xf32>, vector<8x640xf32> -> vector<8x640xf32>
    %44 = vector.broadcast %42 : vector<1x640xf32> to vector<8x640xf32>
    %45 = arith.addf %43, %44 : vector<8x640xf32>
    %cst_35 = arith.constant 0.00999999977 : f32
    %46 = vector.broadcast %cst_35 : f32 to vector<8x640xf32>
    %47 = arith.mulf %46, %45 : vector<8x640xf32>
    %48 = arith.maximumf %45, %47 : vector<8x640xf32>
    %c0_36 = arith.constant 0 : index
    %c0_37 = arith.constant 0 : index
    %49 = vector.load %arg14[%c0_36, %c0_37] : memref<640x660xf32, #tpu.memory_space<vmem>>, vector<640x660xf32>
    %c0_38 = arith.constant 0 : index
    %c0_39 = arith.constant 0 : index
    %50 = vector.load %arg15[%c0_38, %c0_39] : memref<1x660xf32, #tpu.memory_space<vmem>>, vector<1x660xf32>
    %cst_40 = arith.constant dense<0.000000e+00> : vector<8x660xf32>
    %51 = tpu.matmul %48, %49, %cst_40 {dimension_numbers = #tpu.dot_dimension_numbers<[1], [0], [0], [1], [0, 0, 1, 1], [], []>} : vector<8x640xf32>, vector<640x660xf32>, vector<8x660xf32> -> vector<8x660xf32>
    %52 = vector.broadcast %50 : vector<1x660xf32> to vector<8x660xf32>
    %53 = arith.addf %51, %52 : vector<8x660xf32>
    %c0_41 = arith.constant 0 : index
    %c0_42 = arith.constant 0 : index
    %54 = vector.load %arg16[%c0_41, %c0_42] : memref<8x660xf32, #tpu.memory_space<vmem>>, vector<8x660xf32>
    tpu.vector_store %arg16[%c0_41, %c0_42], %53 {strides = array<i32>} : memref<8x660xf32, #tpu.memory_space<vmem>>, vector<8x660xf32>,
    return
  }
  func.func @transform_0(%arg0: i32) -> (i32, i32) {
    %c0_i32 = arith.constant 0 : i32
    %c0_i32_0 = arith.constant 0 : i32
    return %arg0, %c0_i32 : i32, i32
  }
  func.func @transform_1(%arg0: i32) -> (i32, i32) {
    %c0_i32 = arith.constant 0 : i32
    %c0_i32_0 = arith.constant 0 : i32
    %c0_i32_1 = arith.constant 0 : i32
    return %c0_i32, %c0_i32_0 : i32, i32
  }
  func.func @transform_2(%arg0: i32) -> (i32, i32) {
    %c0_i32 = arith.constant 0 : i32
    %c0_i32_0 = arith.constant 0 : i32
    %c0_i32_1 = arith.constant 0 : i32
    return %c0_i32, %c0_i32_0 : i32, i32
  }
  func.func @transform_3(%arg0: i32) -> (i32, i32) {
    %c0_i32 = arith.constant 0 : i32
    %c0_i32_0 = arith.constant 0 : i32
    %c0_i32_1 = arith.constant 0 : i32
    return %c0_i32, %c0_i32_0 : i32, i32
  }
  func.func @transform_4(%arg0: i32) -> (i32, i32) {
    %c0_i32 = arith.constant 0 : i32
    %c0_i32_0 = arith.constant 0 : i32
    %c0_i32_1 = arith.constant 0 : i32
    return %c0_i32, %c0_i32_0 : i32, i32
  }
  func.func @transform_5(%arg0: i32) -> (i32, i32) {
    %c0_i32 = arith.constant 0 : i32
    %c0_i32_0 = arith.constant 0 : i32
    %c0_i32_1 = arith.constant 0 : i32
    return %c0_i32, %c0_i32_0 : i32, i32
  }
  func.func @transform_6(%arg0: i32) -> (i32, i32) {
    %c0_i32 = arith.constant 0 : i32
    %c0_i32_0 = arith.constant 0 : i32
    %c0_i32_1 = arith.constant 0 : i32
    return %c0_i32, %c0_i32_0 : i32, i32
  }
  func.func @transform_7(%arg0: i32) -> (i32, i32) {
    %c0_i32 = arith.constant 0 : i32
    %c0_i32_0 = arith.constant 0 : i32
    %c0_i32_1 = arith.constant 0 : i32
    return %c0_i32, %c0_i32_0 : i32, i32
  }
  func.func @transform_8(%arg0: i32) -> (i32, i32) {
    %c0_i32 = arith.constant 0 : i32
    %c0_i32_0 = arith.constant 0 : i32
    %c0_i32_1 = arith.constant 0 : i32
    return %c0_i32, %c0_i32_0 : i32, i32
  }
  func.func @transform_9(%arg0: i32) -> (i32, i32) {
    %c0_i32 = arith.constant 0 : i32
    %c0_i32_0 = arith.constant 0 : i32
    %c0_i32_1 = arith.constant 0 : i32
    return %c0_i32, %c0_i32_0 : i32, i32
  }
  func.func @transform_10(%arg0: i32) -> (i32, i32) {
    %c0_i32 = arith.constant 0 : i32
    %c0_i32_0 = arith.constant 0 : i32
    %c0_i32_1 = arith.constant 0 : i32
    return %c0_i32, %c0_i32_0 : i32, i32
  }
  func.func @transform_11(%arg0: i32) -> (i32, i32) {
    %c0_i32 = arith.constant 0 : i32
    %c0_i32_0 = arith.constant 0 : i32
    %c0_i32_1 = arith.constant 0 : i32
    return %c0_i32, %c0_i32_0 : i32, i32
  }
  func.func @transform_12(%arg0: i32) -> (i32, i32) {
    %c0_i32 = arith.constant 0 : i32
    %c0_i32_0 = arith.constant 0 : i32
    %c0_i32_1 = arith.constant 0 : i32
    return %c0_i32, %c0_i32_0 : i32, i32
  }
  func.func @transform_13(%arg0: i32) -> (i32, i32) {
    %c0_i32 = arith.constant 0 : i32
    %c0_i32_0 = arith.constant 0 : i32
    %c0_i32_1 = arith.constant 0 : i32
    return %c0_i32, %c0_i32_0 : i32, i32
  }
  func.func @transform_14(%arg0: i32) -> (i32, i32) {
    %c0_i32 = arith.constant 0 : i32
    %c0_i32_0 = arith.constant 0 : i32
    %c0_i32_1 = arith.constant 0 : i32
    return %c0_i32, %c0_i32_0 : i32, i32
  }
  func.func @transform_15(%arg0: i32) -> (i32, i32) {
    %c0_i32 = arith.constant 0 : i32
    %c0_i32_0 = arith.constant 0 : i32
    return %arg0, %c0_i32 : i32, i32
  }
}

</mosaic_0001>

<llo_original>
// kernel: tpu_custom_call.1
$region0: #{tpu_custom_call.1}
  #allocation0 [shape = 'u32[]', space=smem, size = 0x4, offset = 0x4, fixed_abs, tag = 'smem constant byte address 0x4 - core index']
  #allocation1 [shape = 'u32[144,128]{1,0:T(1,128)}', space=vmem, size = 0x12000, scoped, tag = 'internal scratch']
  %s0 = inlined_call_operand.vmem [shape: f32[8,6], index: 0, kind: input, shape index: {}]
  %s1 = inlined_call_operand.vmem [shape: f32[6,128], index: 1, kind: input, shape index: {}]
  %s2 = inlined_call_operand.vmem [shape: f32[1,128], index: 2, kind: input, shape index: {}]
  %s3 = inlined_call_operand.hbm [shape: f32[128,256], index: 3, kind: input, shape index: {}]
  %s4 = inlined_call_operand.vmem [shape: f32[1,256], index: 4, kind: input, shape index: {}]
  %s5 = inlined_call_operand.vmem [shape: f32[256,384], index: 5, kind: input, shape index: {}]
  %s6 = inlined_call_operand.vmem [shape: f32[1,384], index: 6, kind: input, shape index: {}]
  %s7 = inlined_call_operand.vmem [shape: f32[384,512], index: 7, kind: input, shape index: {}]
  %s8 = inlined_call_operand.vmem [shape: f32[1,512], index: 8, kind: input, shape index: {}]
  %s9 = inlined_call_operand.vmem [shape: f32[512,512], index: 9, kind: input, shape index: {}]
  %s10 = inlined_call_operand.vmem [shape: f32[1,512], index: 10, kind: input, shape index: {}]
  %s11 = inlined_call_operand.vmem [shape: f32[512,640], index: 11, kind: input, shape index: {}]
  %s12 = inlined_call_operand.vmem [shape: f32[1,640], index: 12, kind: input, shape index: {}]
  %s13 = inlined_call_operand.vmem [shape: f32[640,660], index: 13, kind: input, shape index: {}]
  %s14 = inlined_call_operand.vmem [shape: f32[1,660], index: 14, kind: input, shape index: {}]
  %s15 = inlined_call_operand.hbm [shape: f32[8,660], index: 15, kind: output, shape index: {}]
  %s16 = sld [smem:[#allocation0]]
  $region74: #{tpu_custom_call.1} parent=0
    _
  %s18 = ssub.s32 1, %s16
  %s19 = scalar_select 0, %s18, %s16
  $region1: #{tpu_custom_call.1} parent=0
    #allocation2 [shape = 'u8[131072]{0}', space=vmem, size = 0x20000, scoped, tag = 'input window, operand 3, single buffered']
    #allocation3 [shape = 's32[1]{0}', space=sflag, size = 0x4, scoped, tag = 'scoped memory for tpu_custom_call.1']
    #allocation4 [shape = 's32[1]{0}', space=sflag, size = 0x4, scoped, tag = 'scoped memory for tpu_custom_call.1']
    #allocation5 [shape = 'u8[24576]{0}', space=vmem, size = 0x6000, scoped, tag = 'output window, operand 0, single buffered']
    %20 = vsyncpa [#allocation3], 0
    %21 = vsyncpa [#allocation4], 0
    // Predicated region
    $region2: #{tpu_custom_call.1} parent=1 // pred_check
      _
    $region3: #{tpu_custom_call.1} parent=1 // pred_check_branch
      %23 = sbr.rel (0) target = $region5
    $region4: #{tpu_custom_call.1} parent=1 // pred_region
      _
    $region5: #{tpu_custom_call.1} parent=1 // pred_fallthru
      _
    // Predicated region
    $region6: #{tpu_custom_call.1} parent=1 // pred_check
      _
    $region7: #{tpu_custom_call.1} parent=1 // pred_check_branch
      %25 = sbr.rel (0) target = $region9
    $region8: #{tpu_custom_call.1} parent=1 // pred_region
      _
    $region9: #{tpu_custom_call.1} parent=1 // pred_fallthru
      _
    // Predicated region
    $region10: #{tpu_custom_call.1} parent=1 // pred_check
      _
    $region11: #{tpu_custom_call.1} parent=1 // pred_check_branch
      %27 = sbr.rel (0) target = $region13
    $region12: #{tpu_custom_call.1} parent=1 // pred_region
      _
    $region13: #{tpu_custom_call.1} parent=1 // pred_fallthru
      _
    // Predicated region
    $region14: #{tpu_custom_call.1} parent=1 // pred_check
      _
    $region15: #{tpu_custom_call.1} parent=1 // pred_check_branch
      %29 = sbr.rel (0) target = $region17
    $region16: #{tpu_custom_call.1} parent=1 // pred_region
      %s31 = ssub.s32 4096, 4096
      %32 = vsyncadd [#allocation3], %s31
      %s33 = sshll.u32 [#allocation2], 4
      %s34 = int_to_ptr.vmem [resolvable:$true] %s33
      %39 = dma.hbm_to_vmem [thread:$0]  %s3, 4096, %s34, [#allocation3], 256, 256, 16
    $region17: #{tpu_custom_call.1} parent=1 // pred_fallthru
      _
    // Predicated region
    $region18: #{tpu_custom_call.1} parent=1 // pred_check
      _
    $region19: #{tpu_custom_call.1} parent=1 // pred_check_branch
      %41 = sbr.rel (0) target = $region21
    $region20: #{tpu_custom_call.1} parent=1 // pred_region
      _
    $region21: #{tpu_custom_call.1} parent=1 // pred_fallthru
      _
    // Predicated region
    $region22: #{tpu_custom_call.1} parent=1 // pred_check
      _
    $region23: #{tpu_custom_call.1} parent=1 // pred_check_branch
      %43 = sbr.rel (0) target = $region25
    $region24: #{tpu_custom_call.1} parent=1 // pred_region
      _
    $region25: #{tpu_custom_call.1} parent=1 // pred_fallthru
      _
    // Predicated region
    $region26: #{tpu_custom_call.1} parent=1 // pred_check
      _
    $region27: #{tpu_custom_call.1} parent=1 // pred_check_branch
      %45 = sbr.rel (0) target = $region29
    $region28: #{tpu_custom_call.1} parent=1 // pred_region
      _
    $region29: #{tpu_custom_call.1} parent=1 // pred_fallthru
      _
    // Predicated region
    $region30: #{tpu_custom_call.1} parent=1 // pred_check
      _
    $region31: #{tpu_custom_call.1} parent=1 // pred_check_branch
      %47 = sbr.rel (0) target = $region33
    $region32: #{tpu_custom_call.1} parent=1 // pred_region
      _
    $region33: #{tpu_custom_call.1} parent=1 // pred_fallthru
      _
    // Predicated region
    $region34: #{tpu_custom_call.1} parent=1 // pred_check
      _
    $region35: #{tpu_custom_call.1} parent=1 // pred_check_branch
      %49 = sbr.rel (0) target = $region37
    $region36: #{tpu_custom_call.1} parent=1 // pred_region
      _
    $region37: #{tpu_custom_call.1} parent=1 // pred_fallthru
      _
    // Predicated region
    $region38: #{tpu_custom_call.1} parent=1 // pred_check
      _
    $region39: #{tpu_custom_call.1} parent=1 // pred_check_branch
      %51 = sbr.rel (0) target = $region41
    $region40: #{tpu_custom_call.1} parent=1 // pred_region
      _
    $region41: #{tpu_custom_call.1} parent=1 // pred_fallthru
      _
    // Predicated region
    $region42: #{tpu_custom_call.1} parent=1 // pred_check
      _
    $region43: #{tpu_custom_call.1} parent=1 // pred_check_branch
      %53 = sbr.rel (0) target = $region45
    $region44: #{tpu_custom_call.1} parent=1 // pred_region
      _
    $region45: #{tpu_custom_call.1} parent=1 // pred_fallthru
      _
    // Predicated region
    $region46: #{tpu_custom_call.1} parent=1 // pred_check
      _
    $region47: #{tpu_custom_call.1} parent=1 // pred_check_branch
      %55 = sbr.rel (0) target = $region49
    $region48: #{tpu_custom_call.1} parent=1 // pred_region
      _
    $region49: #{tpu_custom_call.1} parent=1 // pred_fallthru
      _
    // Predicated region
    $region50: #{tpu_custom_call.1} parent=1 // pred_check
      _
    $region51: #{tpu_custom_call.1} parent=1 // pred_check_branch
      %57 = sbr.rel (0) target = $region53
    $region52: #{tpu_custom_call.1} parent=1 // pred_region
      _
    $region53: #{tpu_custom_call.1} parent=1 // pred_fallthru
      _
    // Predicated region
    $region54: #{tpu_custom_call.1} parent=1 // pred_check
      _
    $region55: #{tpu_custom_call.1} parent=1 // pred_check_branch
      %59 = sbr.rel (0) target = $region57
    $region56: #{tpu_custom_call.1} parent=1 // pred_region
      _
    $region57: #{tpu_custom_call.1} parent=1 // pred_fallthru
      _
    // Predicated region
    $region58: #{tpu_custom_call.1} parent=1 // pred_check
      _
    $region59: #{tpu_custom_call.1} parent=1 // pred_check_branch
      %61 = sbr.rel (0) target = $region61
    $region60: #{tpu_custom_call.1} parent=1 // pred_region
      _
    $region61: #{tpu_custom_call.1} parent=1 // pred_fallthru
      _
    // Predicated region
    $region62: #{tpu_custom_call.1} parent=1 // pred_check
      _
    $region63: #{tpu_custom_call.1} parent=1 // pred_check_branch
      %63 = sbr.rel (0) target = $region65
    $region64: #{tpu_custom_call.1} parent=1 // pred_region
      %64 = dma.done [#allocation3], 4096
    $region65: #{tpu_custom_call.1} parent=1 // pred_fallthru
      _
    %v65 = vld [vmem:[%s0] sm:$0xff]
    %v66 = vld [vmem:[%s1] sm:$0x3f]
    %v67 = vld [vmem:[%s2] sm:$0x1]
    %v69 = vlaneseq
    %v70 = vshrl.u32 %v69, 7
    %v71 = vsub.s32 0, %v70
    %v72 = vrot.slane %v67, %v71
    %vm74 = vcmask 48128
    %v76 = vsel %vm74, %v65, 0
    %vm78 = vcmask 1045504
    %v80 = vsel %vm78, %v66, 0
    %82 = vmatprep.subr.mxu0 0.0
    %83 = vmatpush1.msra.mxu0 %v80
    %84 = vmatprep.subr.mxu0 0.0
    %85 = vmatpush1.msra.mxu0 0.0
    %86 = vmatprep.subr.mxu0 0.0
    %87 = vmatpush1.msra.mxu0 0.0
    %88 = vmatprep.subr.mxu0 0.0
    %89 = vmatpush1.msra.mxu0 0.0
    %90 = vmatprep.subr.mxu0 0.0
    %91 = vmatpush1.msra.mxu0 0.0
    %92 = vmatprep.subr.mxu0 0.0
    %93 = vmatpush1.msra.mxu0 0.0
    %94 = vmatprep.subr.mxu0 0.0
    %95 = vmatpush1.msra.mxu0 0.0
    %96 = vmatprep.subr.mxu0 0.0
    %97 = vmatpush1.msra.mxu0 0.0
    %98 = vmatprep.subr.mxu0 0.0
    %99 = vmatpush1.msra.mxu0 0.0
    %100 = vmatprep.subr.mxu0 0.0
    %101 = vmatpush1.msra.mxu0 0.0
    %102 = vmatprep.subr.mxu0 0.0
    %103 = vmatpush1.msra.mxu0 0.0
    %104 = vmatprep.subr.mxu0 0.0
    %105 = vmatpush1.msra.mxu0 0.0
    %106 = vmatprep.subr.mxu0 0.0
    %107 = vmatpush1.msra.mxu0 0.0
    %108 = vmatprep.subr.mxu0 0.0
    %109 = vmatpush1.msra.mxu0 0.0
    %110 = vmatprep.subr.mxu0 0.0
    %111 = vmatpush1.msra.mxu0 0.0
    %112 = vmatprep.subr.mxu0 0.0
    %113 = vmatpush1.msra.mxu0 0.0
    %114 = vmatprep.subr.mxu0 0.0
    %115 = vmatpush1.msra.mxu0 0.0
    %116 = vmatprep.subr.mxu0 0.0
    %117 = vmatpush1.msra.mxu0 0.0
    %118 = vmatprep.subr.mxu0 0.0
    %119 = vmatpush1.msra.mxu0 0.0
    %120 = vmatprep.subr.mxu0 0.0
    %121 = vmatpush1.msra.mxu0 0.0
    %122 = vmatprep.subr.mxu0 0.0
    %123 = vmatpush1.msra.mxu0 0.0
    %124 = vmatprep.subr.mxu0 0.0
    %125 = vmatpush1.msra.mxu0 0.0
    %126 = vmatprep.subr.mxu0 0.0
    %127 = vmatpush1.msra.mxu0 0.0
    %128 = vmatprep.subr.mxu0 0.0
    %129 = vmatpush1.msra.mxu0 0.0
    %130 = vmatprep.subr.mxu0 0.0
    %131 = vmatpush1.msra.mxu0 0.0
    %132 = vmatprep.subr.mxu0 0.0
    %133 = vmatpush1.msra.mxu0 0.0
    %134 = vmatprep.subr.mxu0 0.0
    %135 = vmatpush1.msra.mxu0 0.0
    %136 = vmatprep.subr.mxu0 0.0
    %137 = vmatpush1.msra.mxu0 0.0
    %138 = vmatprep.subr.mxu0 0.0
    %139 = vmatpush1.msra.mxu0 0.0
    %140 = vmatprep.subr.mxu0 0.0
    %141 = vmatpush1.msra.mxu0 0.0
    %142 = vmatprep.subr.mxu0 0.0
    %143 = vmatpush1.msra.mxu0 0.0
    %144 = vmatprep.subr.mxu0 0.0
    %145 = vmatpush1.msra.mxu0 0.0
    %146 = vmatprep.mubr.f32.mxu0 0.0
    %147 = vmatmul.mubr.f32.gmra.mrb[0].mxu0 %v76
    %v148 = vpop.f32.mrb[0].mxu0
    %v149 = vadd.f32 %v72, %v148
    %v150 = vpop.f32.mrb[0].mxu0
    %151 = vdwg.mxu0
    %v152 = vmul.f32 %v149, 0.01
    %v153 = vmax.f32 %v149, %v152
    %v154 = vld [vmem:[#allocation2] sm:$0xff]
    %v155 = vld [vmem:[#allocation2 + $0x8] sm:$0xff]
    %v156 = vld [vmem:[#allocation2 + $0x10] sm:$0xff]
    %v157 = vld [vmem:[#allocation2 + $0x18] sm:$0xff]
    %v158 = vld [vmem:[#allocation2 + $0x20] sm:$0xff]
    %v159 = vld [vmem:[#allocation2 + $0x28] sm:$0xff]
    %v160 = vld [vmem:[#allocation2 + $0x30] sm:$0xff]
    %v161 = vld [vmem:[#allocation2 + $0x38] sm:$0xff]
    %v162 = vld [vmem:[#allocation2 + $0x40] sm:$0xff]
    %v163 = vld [vmem:[#allocation2 + $0x48] sm:$0xff]
    %v164 = vld [vmem:[#allocation2 + $0x50] sm:$0xff]
    %v165 = vld [vmem:[#allocation2 + $0x58] sm:$0xff]
    %v166 = vld [vmem:[#allocation2 + $0x60] sm:$0xff]
    %v167 = vld [vmem:[#allocation2 + $0x68] sm:$0xff]
    %v168 = vld [vmem:[#allocation2 + $0x70] sm:$0xff]
    %v169 = vld [vmem:[#allocation2 + $0x78] sm:$0xff]
    %v170 = vld [vmem:[#allocation2 + $0x80] sm:$0xff]
    %v171 = vld [vmem:[#allocation2 + $0x88] sm:$0xff]
    %v172 = vld [vmem:[#allocation2 + $0x90] sm:$0xff]
    %v173 = vld [vmem:[#allocation2 + $0x98] sm:$0xff]
    %v174 = vld [vmem:[#allocation2 + $0xa0] sm:$0xff]
    %v175 = vld [vmem:[#allocation2 + $0xa8] sm:$0xff]
    %v176 = vld [vmem:[#allocation2 + $0xb0] sm:$0xff]
    %v177 = vld [vmem:[#allocation2 + $0xb8] sm:$0xff]
    %v178 = vld [vmem:[#allocation2 + $0xc0] sm:$0xff]
    %v179 = vld [vmem:[#allocation2 + $0xc8] sm:$0xff]
    %v180 = vld [vmem:[#allocation2 + $0xd0] sm:$0xff]
    %v181 = vld [vmem:[#allocation2 + $0xd8] sm:$0xff]
    %v182 = vld [vmem:[#allocation2 + $0xe0] sm:$0xff]
    %v183 = vld [vmem:[#allocation2 + $0xe8] sm:$0xff]
    %v184 = vld [vmem:[#allocation2 + $0xf0] sm:$0xff]
    %v185 = vld [vmem:[#allocation2 + $0xf8] sm:$0xff]
    %v186 = vld [vmem:[%s4] sm:$0x3]
    %v188 = vlaneseq
    %v189 = vshrl.u32 %v188, 7
    %v190 = vsub.s32 0, %v189
    %v191 = vrot.slane %v186, %v190
    %v192 = vlaneseq
    %v193 = vshrl.u32 %v192, 7
    %v194 = vsub.s32 1, %v193
    %v195 = vrot.slane %v186, %v194
    %198 = vmatprep.subr.mxu0 %v155
    %199 = vmatpush1.msra.mxu0 %v154
    %200 = vmatprep.subr.mxu0 %v157
    %201 = vmatpush1.msra.mxu0 %v156
    %202 = vmatprep.subr.mxu0 %v159
    %203 = vmatpush1.msra.mxu0 %v158
    %204 = vmatprep.subr.mxu0 %v161
    %205 = vmatpush1.msra.mxu0 %v160
    %206 = vmatprep.subr.mxu0 %v163
    %207 = vmatpush1.msra.mxu0 %v162
    %208 = vmatprep.subr.mxu0 %v165
    %209 = vmatpush1.msra.mxu0 %v164
    %210 = vmatprep.subr.mxu0 %v167
    %211 = vmatpush1.msra.mxu0 %v166
    %212 = vmatprep.subr.mxu0 %v169
    %213 = vmatpush1.msra.mxu0 %v168
    %214 = vmatprep.subr.mxu0 %v171
    %215 = vmatpush1.msra.mxu0 %v170
    %216 = vmatprep.subr.mxu0 %v173
    %217 = vmatpush1.msra.mxu0 %v172
    %218 = vmatprep.subr.mxu0 %v175
    %219 = vmatpush1.msra.mxu0 %v174
    %220 = vmatprep.subr.mxu0 %v177
    %221 = vmatpush1.msra.mxu0 %v176
    %222 = vmatprep.subr.mxu0 %v179
    %223 = vmatpush1.msra.mxu0 %v178
    %224 = vmatprep.subr.mxu0 %v181
    %225 = vmatpush1.msra.mxu0 %v180
    %226 = vmatprep.subr.mxu0 %v183
    %227 = vmatpush1.msra.mxu0 %v182
    %228 = vmatprep.subr.mxu0 %v185
    %229 = vmatpush1.msra.mxu0 %v184
    %230 = vmatprep.subr.mxu0 0.0
    %231 = vmatpush1.msra.mxu0 0.0
    %232 = vmatprep.subr.mxu0 0.0
    %233 = vmatpush1.msra.mxu0 0.0
    %234 = vmatprep.subr.mxu0 0.0
    %235 = vmatpush1.msra.mxu0 0.0
    %236 = vmatprep.subr.mxu0 0.0
    %237 = vmatpush1.msra.mxu0 0.0
    %238 = vmatprep.subr.mxu0 0.0
    %239 = vmatpush1.msra.mxu0 0.0
    %240 = vmatprep.subr.mxu0 0.0
    %241 = vmatpush1.msra.mxu0 0.0
    %242 = vmatprep.subr.mxu0 0.0
    %243 = vmatpush1.msra.mxu0 0.0
    %244 = vmatprep.subr.mxu0 0.0
    %245 = vmatpush1.msra.mxu0 0.0
    %246 = vmatprep.subr.mxu0 0.0
    %247 = vmatpush1.msra.mxu0 0.0
    %248 = vmatprep.subr.mxu0 0.0
    %249 = vmatpush1.msra.mxu0 0.0
    %250 = vmatprep.subr.mxu0 0.0
    %251 = vmatpush1.msra.mxu0 0.0
    %252 = vmatprep.subr.mxu0 0.0
    %253 = vmatpush1.msra.mxu0 0.0
    %254 = vmatprep.subr.mxu0 0.0
    %255 = vmatpush1.msra.mxu0 0.0
    %256 = vmatprep.subr.mxu0 0.0
    %257 = vmatpush1.msra.mxu0 0.0
    %258 = vmatprep.subr.mxu0 0.0
    %259 = vmatpush1.msra.mxu0 0.0
    %260 = vmatprep.subr.mxu0 0.0
    %261 = vmatpush1.msra.mxu0 0.0
    %262 = vmatprep.mubr.f32.mxu0 0.0
    %263 = vmatmul.mubr.f32.gmra.mrb[0].mxu0 %v153
    %v264 = vpop.f32.mrb[0].mxu0
    %v265 = vadd.f32 %v191, %v264
    %v266 = vpop.f32.mrb[0].mxu0
    %v267 = vadd.f32 %v195, %v266
    %268 = vdwg.mxu0
    %v269 = vmul.f32 %v265, 0.01
    %v270 = vmul.f32 %v267, 0.01
    %v271 = vmax.f32 %v265, %v269
    %v272 = vmax.f32 %v267, %v270
    %v273 = vld [vmem:[%s5] sm:$0xff]
    %v274 = vld [vmem:[%s5 + $0x8] sm:$0xff]
    %v275 = vld [vmem:[%s5 + $0x10] sm:$0xff]
    %v276 = vld [vmem:[%s5 + $0x18] sm:$0xff]
    %v277 = vld [vmem:[%s5 + $0x20] sm:$0xff]
    %v278 = vld [vmem:[%s5 + $0x28] sm:$0xff]
    %v279 = vld [vmem:[%s5 + $0x30] sm:$0xff]
    %v280 = vld [vmem:[%s5 + $0x38] sm:$0xff]
    %v281 = vld [vmem:[%s5 + $0x40] sm:$0xff]
    %v282 = vld [vmem:[%s5 + $0x48] sm:$0xff]
    %v283 = vld [vmem:[%s5 + $0x50] sm:$0xff]
    %v284 = vld [vmem:[%s5 + $0x58] sm:$0xff]
    %v285 = vld [vmem:[%s5 + $0x60] sm:$0xff]
    %v286 = vld [vmem:[%s5 + $0x68] sm:$0xff]
    %v287 = vld [vmem:[%s5 + $0x70] sm:$0xff]
    %v288 = vld [vmem:[%s5 + $0x78] sm:$0xff]
    %v289 = vld [vmem:[%s5 + $0x80] sm:$0xff]
    %v290 = vld [vmem:[%s5 + $0x88] sm:$0xff]
    %v291 = vld [vmem:[%s5 + $0x90] sm:$0xff]
    %v292 = vld [vmem:[%s5 + $0x98] sm:$0xff]
    %v293 = vld [vmem:[%s5 + $0xa0] sm:$0xff]
    %v294 = vld [vmem:[%s5 + $0xa8] sm:$0xff]
    %v295 = vld [vmem:[%s5 + $0xb0] sm:$0xff]
    %v296 = vld [vmem:[%s5 + $0xb8] sm:$0xff]
    %v297 = vld [vmem:[%s5 + $0xc0] sm:$0xff]
    %v298 = vld [vmem:[%s5 + $0xc8] sm:$0xff]
    %v299 = vld [vmem:[%s5 + $0xd0] sm:$0xff]
    %v300 = vld [vmem:[%s5 + $0xd8] sm:$0xff]
    %v301 = vld [vmem:[%s5 + $0xe0] sm:$0xff]
    %v302 = vld [vmem:[%s5 + $0xe8] sm:$0xff]
    %v303 = vld [vmem:[%s5 + $0xf0] sm:$0xff]
    %v304 = vld [vmem:[%s5 + $0xf8] sm:$0xff]
    %v305 = vld [vmem:[%s5 + $0x100] sm:$0xff]
    %v306 = vld [vmem:[%s5 + $0x108] sm:$0xff]
    %v307 = vld [vmem:[%s5 + $0x110] sm:$0xff]
    %v308 = vld [vmem:[%s5 + $0x118] sm:$0xff]
    %v309 = vld [vmem:[%s5 + $0x120] sm:$0xff]
    %v310 = vld [vmem:[%s5 + $0x128] sm:$0xff]
    %v311 = vld [vmem:[%s5 + $0x130] sm:$0xff]
    %v312 = vld [vmem:[%s5 + $0x138] sm:$0xff]
    %v313 = vld [vmem:[%s5 + $0x140] sm:$0xff]
    %v314 = vld [vmem:[%s5 + $0x148] sm:$0xff]
    %v315 = vld [vmem:[%s5 + $0x150] sm:$0xff]
    %v316 = vld [vmem:[%s5 + $0x158] sm:$0xff]
    %v317 = vld [vmem:[%s5 + $0x160] sm:$0xff]
    %v318 = vld [vmem:[%s5 + $0x168] sm:$0xff]
    %v319 = vld [vmem:[%s5 + $0x170] sm:$0xff]
    %v320 = vld [vmem:[%s5 + $0x178] sm:$0xff]
    %v321 = vld [vmem:[%s5 + $0x180] sm:$0xff]
    %v322 = vld [vmem:[%s5 + $0x188] sm:$0xff]
    %v323 = vld [vmem:[%s5 + $0x190] sm:$0xff]
    %v324 = vld [vmem:[%s5 + $0x198] sm:$0xff]
    %v325 = vld [vmem:[%s5 + $0x1a0] sm:$0xff]
    %v326 = vld [vmem:[%s5 + $0x1a8] sm:$0xff]
    %v327 = vld [vmem:[%s5 + $0x1b0] sm:$0xff]
    %v328 = vld [vmem:[%s5 + $0x1b8] sm:$0xff]
    %v329 = vld [vmem:[%s5 + $0x1c0] sm:$0xff]
    %v330 = vld [vmem:[%s5 + $0x1c8] sm:$0xff]
    %v331 = vld [vmem:[%s5 + $0x1d0] sm:$0xff]
    %v332 = vld [vmem:[%s5 + $0x1d8] sm:$0xff]
    %v333 = vld [vmem:[%s5 + $0x1e0] sm:$0xff]
    %v334 = vld [vmem:[%s5 + $0x1e8] sm:$0xff]
    %v335 = vld [vmem:[%s5 + $0x1f0] sm:$0xff]
    %v336 = vld [vmem:[%s5 + $0x1f8] sm:$0xff]
    %v337 = vld [vmem:[%s5 + $0x200] sm:$0xff]
    %v338 = vld [vmem:[%s5 + $0x208] sm:$0xff]
    %v339 = vld [vmem:[%s5 + $0x210] sm:$0xff]
    %v340 = vld [vmem:[%s5 + $0x218] sm:$0xff]
    %v341 = vld [vmem:[%s5 + $0x220] sm:$0xff]
    %v342 = vld [vmem:[%s5 + $0x228] sm:$0xff]
    %v343 = vld [vmem:[%s5 + $0x230] sm:$0xff]
    %v344 = vld [vmem:[%s5 + $0x238] sm:$0xff]
    %v345 = vld [vmem:[%s5 + $0x240] sm:$0xff]
    %v346 = vld [vmem:[%s5 + $0x248] sm:$0xff]
    %v347 = vld [vmem:[%s5 + $0x250] sm:$0xff]
    %v348 = vld [vmem:[%s5 + $0x258] sm:$0xff]
    %v349 = vld [vmem:[%s5 + $0x260] sm:$0xff]
    %v350 = vld [vmem:[%s5 + $0x268] sm:$0xff]
    %v351 = vld [vmem:[%s5 + $0x270] sm:$0xff]
    %v352 = vld [vmem:[%s5 + $0x278] sm:$0xff]
    %v353 = vld [vmem:[%s5 + $0x280] sm:$0xff]
    %v354 = vld [vmem:[%s5 + $0x288] sm:$0xff]
    %v355 = vld [vmem:[%s5 + $0x290] sm:$0xff]
    %v356 = vld [vmem:[%s5 + $0x298] sm:$0xff]
    %v357 = vld [vmem:[%s5 + $0x2a0] sm:$0xff]
    %v358 = vld [vmem:[%s5 + $0x2a8] sm:$0xff]
    %v359 = vld [vmem:[%s5 + $0x2b0] sm:$0xff]
    %v360 = vld [vmem:[%s5 + $0x2b8] sm:$0xff]
    %v361 = vld [vmem:[%s5 + $0x2c0] sm:$0xff]
    %v362 = vld [vmem:[%s5 + $0x2c8] sm:$0xff]
    %v363 = vld [vmem:[%s5 + $0x2d0] sm:$0xff]
    %v364 = vld [vmem:[%s5 + $0x2d8] sm:$0xff]
    %v365 = vld [vmem:[%s5 + $0x2e0] sm:$0xff]
    %v366 = vld [vmem:[%s5 + $0x2e8] sm:$0xff]
    %v367 = vld [vmem:[%s5 + $0x2f0] sm:$0xff]
    %v368 = vld [vmem:[%s5 + $0x2f8] sm:$0xff]
    %v369 = vld [vmem:[%s6] sm:$0x7]
    %v371 = vlaneseq
    %v372 = vshrl.u32 %v371, 7
    %v373 = vsub.s32 0, %v372
    %v374 = vrot.slane %v369, %v373
    %v375 = vlaneseq
    %v376 = vshrl.u32 %v375, 7
    %v377 = vsub.s32 1, %v376
    %v378 = vrot.slane %v369, %v377
    %v379 = vlaneseq
    %v380 = vshrl.u32 %v379, 7
    %v381 = vsub.s32 2, %v380
    %v382 = vrot.slane %v369, %v381
    %386 = vmatprep.subr.mxu0 %v274
    %387 = vmatpush1.msra.mxu0 %v273
    %388 = vmatprep.subr.mxu0 %v277
    %389 = vmatpush1.msra.mxu0 %v276
    %390 = vmatprep.subr.mxu0 %v280
    %391 = vmatpush1.msra.mxu0 %v279
    %392 = vmatprep.subr.mxu0 %v283
    %393 = vmatpush1.msra.mxu0 %v282
    %394 = vmatprep.subr.mxu0 %v286
    %395 = vmatpush1.msra.mxu0 %v285
    %396 = vmatprep.subr.mxu0 %v289
    %397 = vmatpush1.msra.mxu0 %v288
    %398 = vmatprep.subr.mxu0 %v292
    %399 = vmatpush1.msra.mxu0 %v291
    %400 = vmatprep.subr.mxu0 %v295
    %401 = vmatpush1.msra.mxu0 %v294
    %402 = vmatprep.subr.mxu0 %v298
    %403 = vmatpush1.msra.mxu0 %v297
    %404 = vmatprep.subr.mxu0 %v301
    %405 = vmatpush1.msra.mxu0 %v300
    %406 = vmatprep.subr.mxu0 %v304
    %407 = vmatpush1.msra.mxu0 %v303
    %408 = vmatprep.subr.mxu0 %v307
    %409 = vmatpush1.msra.mxu0 %v306
    %410 = vmatprep.subr.mxu0 %v310
    %411 = vmatpush1.msra.mxu0 %v309
    %412 = vmatprep.subr.mxu0 %v313
    %413 = vmatpush1.msra.mxu0 %v312
    %414 = vmatprep.subr.mxu0 %v316
    %415 = vmatpush1.msra.mxu0 %v315
    %416 = vmatprep.subr.mxu0 %v319
    %417 = vmatpush1.msra.mxu0 %v318
    %418 = vmatprep.subr.mxu0 %v322
    %419 = vmatpush1.msra.mxu0 %v321
    %420 = vmatprep.subr.mxu0 %v325
    %421 = vmatpush1.msra.mxu0 %v324
    %422 = vmatprep.subr.mxu0 %v328
    %423 = vmatpush1.msra.mxu0 %v327
    %424 = vmatprep.subr.mxu0 %v331
    %425 = vmatpush1.msra.mxu0 %v330
    %426 = vmatprep.subr.mxu0 %v334
    %427 = vmatpush1.msra.mxu0 %v333
    %428 = vmatprep.subr.mxu0 %v337
    %429 = vmatpush1.msra.mxu0 %v336
    %430 = vmatprep.subr.mxu0 %v340
    %431 = vmatpush1.msra.mxu0 %v339
    %432 = vmatprep.subr.mxu0 %v343
    %433 = vmatpush1.msra.mxu0 %v342
    %434 = vmatprep.subr.mxu0 %v346
    %435 = vmatpush1.msra.mxu0 %v345
    %436 = vmatprep.subr.mxu0 %v349
    %437 = vmatpush1.msra.mxu0 %v348
    %438 = vmatprep.subr.mxu0 %v352
    %439 = vmatpush1.msra.mxu0 %v351
    %440 = vmatprep.subr.mxu0 %v355
    %441 = vmatpush1.msra.mxu0 %v354
    %442 = vmatprep.subr.mxu0 %v358
    %443 = vmatpush1.msra.mxu0 %v357
    %444 = vmatprep.subr.mxu0 %v361
    %445 = vmatpush1.msra.mxu0 %v360
    %446 = vmatprep.subr.mxu0 %v364
    %447 = vmatpush1.msra.mxu0 %v363
    %448 = vmatprep.subr.mxu0 %v367
    %449 = vmatpush1.msra.mxu0 %v366
    %450 = vmatprep.mubr.f32.mxu0 %v272
    %451 = vmatmul.mubr.f32.gmra.mrb[0].mxu0 %v271
    %v452 = vpop.f32.mrb[0].mxu0
    %v453 = vadd.f32 %v374, %v452
    %v454 = vpop.f32.mrb[0].mxu0
    %v455 = vadd.f32 %v378, %v454
    %456 = vdwg.mxu0
    %457 = vmatprep.subr.mxu0 0.0
    %458 = vmatpush1.msra.mxu0 %v275
    %459 = vmatprep.subr.mxu0 0.0
    %460 = vmatpush1.msra.mxu0 %v278
    %461 = vmatprep.subr.mxu0 0.0
    %462 = vmatpush1.msra.mxu0 %v281
    %463 = vmatprep.subr.mxu0 0.0
    %464 = vmatpush1.msra.mxu0 %v284
    %465 = vmatprep.subr.mxu0 0.0
    %466 = vmatpush1.msra.mxu0 %v287
    %467 = vmatprep.subr.mxu0 0.0
    %468 = vmatpush1.msra.mxu0 %v290
    %469 = vmatprep.subr.mxu0 0.0
    %470 = vmatpush1.msra.mxu0 %v293
    %471 = vmatprep.subr.mxu0 0.0
    %472 = vmatpush1.msra.mxu0 %v296
    %473 = vmatprep.subr.mxu0 0.0
    %474 = vmatpush1.msra.mxu0 %v299
    %475 = vmatprep.subr.mxu0 0.0
    %476 = vmatpush1.msra.mxu0 %v302
    %477 = vmatprep.subr.mxu0 0.0
    %478 = vmatpush1.msra.mxu0 %v305
    %479 = vmatprep.subr.mxu0 0.0
    %480 = vmatpush1.msra.mxu0 %v308
    %481 = vmatprep.subr.mxu0 0.0
    %482 = vmatpush1.msra.mxu0 %v311
    %483 = vmatprep.subr.mxu0 0.0
    %484 = vmatpush1.msra.mxu0 %v314
    %485 = vmatprep.subr.mxu0 0.0
    %486 = vmatpush1.msra.mxu0 %v317
    %487 = vmatprep.subr.mxu0 0.0
    %488 = vmatpush1.msra.mxu0 %v320
    %489 = vmatprep.subr.mxu0 0.0
    %490 = vmatpush1.msra.mxu0 %v323
    %491 = vmatprep.subr.mxu0 0.0
    %492 = vmatpush1.msra.mxu0 %v326
    %493 = vmatprep.subr.mxu0 0.0
    %494 = vmatpush1.msra.mxu0 %v329
    %495 = vmatprep.subr.mxu0 0.0
    %496 = vmatpush1.msra.mxu0 %v332
    %497 = vmatprep.subr.mxu0 0.0
    %498 = vmatpush1.msra.mxu0 %v335
    %499 = vmatprep.subr.mxu0 0.0
    %500 = vmatpush1.msra.mxu0 %v338
    %501 = vmatprep.subr.mxu0 0.0
    %502 = vmatpush1.msra.mxu0 %v341
    %503 = vmatprep.subr.mxu0 0.0
    %504 = vmatpush1.msra.mxu0 %v344
    %505 = vmatprep.subr.mxu0 0.0
    %506 = vmatpush1.msra.mxu0 %v347
    %507 = vmatprep.subr.mxu0 0.0
    %508 = vmatpush1.msra.mxu0 %v350
    %509 = vmatprep.subr.mxu0 0.0
    %510 = vmatpush1.msra.mxu0 %v353
    %511 = vmatprep.subr.mxu0 0.0
    %512 = vmatpush1.msra.mxu0 %v356
    %513 = vmatprep.subr.mxu0 0.0
    %514 = vmatpush1.msra.mxu0 %v359
    %515 = vmatprep.subr.mxu0 0.0
    %516 = vmatpush1.msra.mxu0 %v362
    %517 = vmatprep.subr.mxu0 0.0
    %518 = vmatpush1.msra.mxu0 %v365
    %519 = vmatprep.subr.mxu0 0.0
    %520 = vmatpush1.msra.mxu0 %v368
    %521 = vmatprep.mubr.f32.mxu0 %v272
    %522 = vmatmul.mubr.f32.gmra.mrb[0].mxu0 %v271
    %v523 = vpop.f32.mrb[0].mxu0
    %v524 = vadd.f32 %v382, %v523
    %v525 = vpop.f32.mrb[0].mxu0
    %526 = vdwg.mxu0
    %v527 = vmul.f32 %v453, 0.01
    %v528 = vmul.f32 %v455, 0.01
    %v529 = vmul.f32 %v524, 0.01
    %v530 = vmax.f32 %v453, %v527
    %v531 = vmax.f32 %v455, %v528
    %v532 = vmax.f32 %v524, %v529
    %v533 = vld [vmem:[%s7] sm:$0xff]
    %v534 = vld [vmem:[%s7 + $0x8] sm:$0xff]
    %v535 = vld [vmem:[%s7 + $0x10] sm:$0xff]
    %v536 = vld [vmem:[%s7 + $0x18] sm:$0xff]
    %v537 = vld [vmem:[%s7 + $0x20] sm:$0xff]
    %v538 = vld [vmem:[%s7 + $0x28] sm:$0xff]
    %v539 = vld [vmem:[%s7 + $0x30] sm:$0xff]
    %v540 = vld [vmem:[%s7 + $0x38] sm:$0xff]
    %v541 = vld [vmem:[%s7 + $0x40] sm:$0xff]
    %v542 = vld [vmem:[%s7 + $0x48] sm:$0xff]
    %v543 = vld [vmem:[%s7 + $0x50] sm:$0xff]
    %v544 = vld [vmem:[%s7 + $0x58] sm:$0xff]
    %v545 = vld [vmem:[%s7 + $0x60] sm:$0xff]
    %v546 = vld [vmem:[%s7 + $0x68] sm:$0xff]
    %v547 = vld [vmem:[%s7 + $0x70] sm:$0xff]
    %v548 = vld [vmem:[%s7 + $0x78] sm:$0xff]
    %v549 = vld [vmem:[%s7 + $0x80] sm:$0xff]
    %v550 = vld [vmem:[%s7 + $0x88] sm:$0xff]
    %v551 = vld [vmem:[%s7 + $0x90] sm:$0xff]
    %v552 = vld [vmem:[%s7 + $0x98] sm:$0xff]
    %v553 = vld [vmem:[%s7 + $0xa0] sm:$0xff]
    %v554 = vld [vmem:[%s7 + $0xa8] sm:$0xff]
    %v555 = vld [vmem:[%s7 + $0xb0] sm:$0xff]
    %v556 = vld [vmem:[%s7 + $0xb8] sm:$0xff]
    %v557 = vld [vmem:[%s7 + $0xc0] sm:$0xff]
    %v558 = vld [vmem:[%s7 + $0xc8] sm:$0xff]
    %v559 = vld [vmem:[%s7 + $0xd0] sm:$0xff]
    %v560 = vld [vmem:[%s7 + $0xd8] sm:$0xff]
    %v561 = vld [vmem:[%s7 + $0xe0] sm:$0xff]
    %v562 = vld [vmem:[%s7 + $0xe8] sm:$0xff]
    %v563 = vld [vmem:[%s7 + $0xf0] sm:$0xff]
    %v564 = vld [vmem:[%s7 + $0xf8] sm:$0xff]
    %v565 = vld [vmem:[%s7 + $0x100] sm:$0xff]
    %v566 = vld [vmem:[%s7 + $0x108] sm:$0xff]
    %v567 = vld [vmem:[%s7 + $0x110] sm:$0xff]
    %v568 = vld [vmem:[%s7 + $0x118] sm:$0xff]
    %v569 = vld [vmem:[%s7 + $0x120] sm:$0xff]
    %v570 = vld [vmem:[%s7 + $0x128] sm:$0xff]
    %v571 = vld [vmem:[%s7 + $0x130] sm:$0xff]
    %v572 = vld [vmem:[%s7 + $0x138] sm:$0xff]
    %v573 = vld [vmem:[%s7 + $0x140] sm:$0xff]
    %v574 = vld [vmem:[%s7 + $0x148] sm:$0xff]
    %v575 = vld [vmem:[%s7 + $0x150] sm:$0xff]
    %v576 = vld [vmem:[%s7 + $0x158] sm:$0xff]
    %v577 = vld [vmem:[%s7 + $0x160] sm:$0xff]
    %v578 = vld [vmem:[%s7 + $0x168] sm:$0xff]
    %v579 = vld [vmem:[%s7 + $0x170] sm:$0xff]
    %v580 = vld [vmem:[%s7 + $0x178] sm:$0xff]
    %v581 = vld [vmem:[%s7 + $0x180] sm:$0xff]
    %v582 = vld [vmem:[%s7 + $0x188] sm:$0xff]
    %v583 = vld [vmem:[%s7 + $0x190] sm:$0xff]
    %v584 = vld [vmem:[%s7 + $0x198] sm:$0xff]
    %v585 = vld [vmem:[%s7 + $0x1a0] sm:$0xff]
    %v586 = vld [vmem:[%s7 + $0x1a8] sm:$0xff]
    %v587 = vld [vmem:[%s7 + $0x1b0] sm:$0xff]
    %v588 = vld [vmem:[%s7 + $0x1b8] sm:$0xff]
    %v589 = vld [vmem:[%s7 + $0x1c0] sm:$0xff]
    %v590 = vld [vmem:[%s7 + $0x1c8] sm:$0xff]
    %v591 = vld [vmem:[%s7 + $0x1d0] sm:$0xff]
    %v592 = vld [vmem:[%s7 + $0x1d8] sm:$0xff]
    %v593 = vld [vmem:[%s7 + $0x1e0] sm:$0xff]
    %v594 = vld [vmem:[%s7 + $0x1e8] sm:$0xff]
    %v595 = vld [vmem:[%s7 + $0x1f0] sm:$0xff]
    %v596 = vld [vmem:[%s7 + $0x1f8] sm:$0xff]
    %v597 = vld [vmem:[%s7 + $0x200] sm:$0xff]
    %v598 = vld [vmem:[%s7 + $0x208] sm:$0xff]
    %v599 = vld [vmem:[%s7 + $0x210] sm:$0xff]
    %v600 = vld [vmem:[%s7 + $0x218] sm:$0xff]
    %v601 = vld [vmem:[%s7 + $0x220] sm:$0xff]
    %v602 = vld [vmem:[%s7 + $0x228] sm:$0xff]
    %v603 = vld [vmem:[%s7 + $0x230] sm:$0xff]
    %v604 = vld [vmem:[%s7 + $0x238] sm:$0xff]
    %v605 = vld [vmem:[%s7 + $0x240] sm:$0xff]
    %v606 = vld [vmem:[%s7 + $0x248] sm:$0xff]
    %v607 = vld [vmem:[%s7 + $0x250] sm:$0xff]
    %v608 = vld [vmem:[%s7 + $0x258] sm:$0xff]
    %v609 = vld [vmem:[%s7 + $0x260] sm:$0xff]
    %v610 = vld [vmem:[%s7 + $0x268] sm:$0xff]
    %v611 = vld [vmem:[%s7 + $0x270] sm:$0xff]
    %v612 = vld [vmem:[%s7 + $0x278] sm:$0xff]
    %v613 = vld [vmem:[%s7 + $0x280] sm:$0xff]
    %v614 = vld [vmem:[%s7 + $0x288] sm:$0xff]
    %v615 = vld [vmem:[%s7 + $0x290] sm:$0xff]
    %v616 = vld [vmem:[%s7 + $0x298] sm:$0xff]
    %v617 = vld [vmem:[%s7 + $0x2a0] sm:$0xff]
    %v618 = vld [vmem:[%s7 + $0x2a8] sm:$0xff]
    %v619 = vld [vmem:[%s7 + $0x2b0] sm:$0xff]
    %v620 = vld [vmem:[%s7 + $0x2b8] sm:$0xff]
    %v621 = vld [vmem:[%s7 + $0x2c0] sm:$0xff]
    %v622 = vld [vmem:[%s7 + $0x2c8] sm:$0xff]
    %v623 = vld [vmem:[%s7 + $0x2d0] sm:$0xff]
    %v624 = vld [vmem:[%s7 + $0x2d8] sm:$0xff]
    %v625 = vld [vmem:[%s7 + $0x2e0] sm:$0xff]
    %v626 = vld [vmem:[%s7 + $0x2e8] sm:$0xff]
    %v627 = vld [vmem:[%s7 + $0x2f0] sm:$0xff]
    %v628 = vld [vmem:[%s7 + $0x2f8] sm:$0xff]
    %v629 = vld [vmem:[%s7 + $0x300] sm:$0xff]
    %v630 = vld [vmem:[%s7 + $0x308] sm:$0xff]
    %v631 = vld [vmem:[%s7 + $0x310] sm:$0xff]
    %v632 = vld [vmem:[%s7 + $0x318] sm:$0xff]
    %v633 = vld [vmem:[%s7 + $0x320] sm:$0xff]
    %v634 = vld [vmem:[%s7 + $0x328] sm:$0xff]
    %v635 = vld [vmem:[%s7 + $0x330] sm:$0xff]
    %v636 = vld [vmem:[%s7 + $0x338] sm:$0xff]
    %v637 = vld [vmem:[%s7 + $0x340] sm:$0xff]
    %v638 = vld [vmem:[%s7 + $0x348] sm:$0xff]
    %v639 = vld [vmem:[%s7 + $0x350] sm:$0xff]
    %v640 = vld [vmem:[%s7 + $0x358] sm:$0xff]
    %v641 = vld [vmem:[%s7 + $0x360] sm:$0xff]
    %v642 = vld [vmem:[%s7 + $0x368] sm:$0xff]
    %v643 = vld [vmem:[%s7 + $0x370] sm:$0xff]
    %v644 = vld [vmem:[%s7 + $0x378] sm:$0xff]
    %v645 = vld [vmem:[%s7 + $0x380] sm:$0xff]
    %v646 = vld [vmem:[%s7 + $0x388] sm:$0xff]
    %v647 = vld [vmem:[%s7 + $0x390] sm:$0xff]
    %v648 = vld [vmem:[%s7 + $0x398] sm:$0xff]
    %v649 = vld [vmem:[%s7 + $0x3a0] sm:$0xff]
    %v650 = vld [vmem:[%s7 + $0x3a8] sm:$0xff]
    %v651 = vld [vmem:[%s7 + $0x3b0] sm:$0xff]
    %v652 = vld [vmem:[%s7 + $0x3b8] sm:$0xff]
    %v653 = vld [vmem:[%s7 + $0x3c0] sm:$0xff]
    %v654 = vld [vmem:[%s7 + $0x3c8] sm:$0xff]
    %v655 = vld [vmem:[%s7 + $0x3d0] sm:$0xff]
    %v656 = vld [vmem:[%s7 + $0x3d8] sm:$0xff]
    %v657 = vld [vmem:[%s7 + $0x3e0] sm:$0xff]
    %v658 = vld [vmem:[%s7 + $0x3e8] sm:$0xff]
    %v659 = vld [vmem:[%s7 + $0x3f0] sm:$0xff]
    %v660 = vld [vmem:[%s7 + $0x3f8] sm:$0xff]
    %v661 = vld [vmem:[%s7 + $0x400] sm:$0xff]
    %v662 = vld [vmem:[%s7 + $0x408] sm:$0xff]
    %v663 = vld [vmem:[%s7 + $0x410] sm:$0xff]
    %v664 = vld [vmem:[%s7 + $0x418] sm:$0xff]
    %v665 = vld [vmem:[%s7 + $0x420] sm:$0xff]
    %v666 = vld [vmem:[%s7 + $0x428] sm:$0xff]
    %v667 = vld [vmem:[%s7 + $0x430] sm:$0xff]
    %v668 = vld [vmem:[%s7 + $0x438] sm:$0xff]
    %v669 = vld [vmem:[%s7 + $0x440] sm:$0xff]
    %v670 = vld [vmem:[%s7 + $0x448] sm:$0xff]
    %v671 = vld [vmem:[%s7 + $0x450] sm:$0xff]
    %v672 = vld [vmem:[%s7 + $0x458] sm:$0xff]
    %v673 = vld [vmem:[%s7 + $0x460] sm:$0xff]
    %v674 = vld [vmem:[%s7 + $0x468] sm:$0xff]
    %v675 = vld [vmem:[%s7 + $0x470] sm:$0xff]
    %v676 = vld [vmem:[%s7 + $0x478] sm:$0xff]
    %v677 = vld [vmem:[%s7 + $0x480] sm:$0xff]
    %v678 = vld [vmem:[%s7 + $0x488] sm:$0xff]
    %v679 = vld [vmem:[%s7 + $0x490] sm:$0xff]
    %v680 = vld [vmem:[%s7 + $0x498] sm:$0xff]
    %v681 = vld [vmem:[%s7 + $0x4a0] sm:$0xff]
    %v682 = vld [vmem:[%s7 + $0x4a8] sm:$0xff]
    %v683 = vld [vmem:[%s7 + $0x4b0] sm:$0xff]
    %v684 = vld [vmem:[%s7 + $0x4b8] sm:$0xff]
    %v685 = vld [vmem:[%s7 + $0x4c0] sm:$0xff]
    %v686 = vld [vmem:[%s7 + $0x4c8] sm:$0xff]
    %v687 = vld [vmem:[%s7 + $0x4d0] sm:$0xff]
    %v688 = vld [vmem:[%s7 + $0x4d8] sm:$0xff]
    %v689 = vld [vmem:[%s7 + $0x4e0] sm:$0xff]
    %v690 = vld [vmem:[%s7 + $0x4e8] sm:$0xff]
    %v691 = vld [vmem:[%s7 + $0x4f0] sm:$0xff]
    %v692 = vld [vmem:[%s7 + $0x4f8] sm:$0xff]
    %v693 = vld [vmem:[%s7 + $0x500] sm:$0xff]
    %v694 = vld [vmem:[%s7 + $0x508] sm:$0xff]
    %v695 = vld [vmem:[%s7 + $0x510] sm:$0xff]
    %v696 = vld [vmem:[%s7 + $0x518] sm:$0xff]
    %v697 = vld [vmem:[%s7 + $0x520] sm:$0xff]
    %v698 = vld [vmem:[%s7 + $0x528] sm:$0xff]
    %v699 = vld [vmem:[%s7 + $0x530] sm:$0xff]
    %v700 = vld [vmem:[%s7 + $0x538] sm:$0xff]
    %v701 = vld [vmem:[%s7 + $0x540] sm:$0xff]
    %v702 = vld [vmem:[%s7 + $0x548] sm:$0xff]
    %v703 = vld [vmem:[%s7 + $0x550] sm:$0xff]
    %v704 = vld [vmem:[%s7 + $0x558] sm:$0xff]
    %v705 = vld [vmem:[%s7 + $0x560] sm:$0xff]
    %v706 = vld [vmem:[%s7 + $0x568] sm:$0xff]
    %v707 = vld [vmem:[%s7 + $0x570] sm:$0xff]
    %v708 = vld [vmem:[%s7 + $0x578] sm:$0xff]
    %v709 = vld [vmem:[%s7 + $0x580] sm:$0xff]
    %v710 = vld [vmem:[%s7 + $0x588] sm:$0xff]
    %v711 = vld [vmem:[%s7 + $0x590] sm:$0xff]
    %v712 = vld [vmem:[%s7 + $0x598] sm:$0xff]
    %v713 = vld [vmem:[%s7 + $0x5a0] sm:$0xff]
    %v714 = vld [vmem:[%s7 + $0x5a8] sm:$0xff]
    %v715 = vld [vmem:[%s7 + $0x5b0] sm:$0xff]
    %v716 = vld [vmem:[%s7 + $0x5b8] sm:$0xff]
    %v717 = vld [vmem:[%s7 + $0x5c0] sm:$0xff]
    %v718 = vld [vmem:[%s7 + $0x5c8] sm:$0xff]
    %v719 = vld [vmem:[%s7 + $0x5d0] sm:$0xff]
    %v720 = vld [vmem:[%s7 + $0x5d8] sm:$0xff]
    %v721 = vld [vmem:[%s7 + $0x5e0] sm:$0xff]
    %v722 = vld [vmem:[%s7 + $0x5e8] sm:$0xff]
    %v723 = vld [vmem:[%s7 + $0x5f0] sm:$0xff]
    %v724 = vld [vmem:[%s7 + $0x5f8] sm:$0xff]
    %v725 = vld [vmem:[%s8] sm:$0xf]
    %v727 = vlaneseq
    %v728 = vshrl.u32 %v727, 7
    %v729 = vsub.s32 0, %v728
    %v730 = vrot.slane %v725, %v729
    %v731 = vlaneseq
    %v732 = vshrl.u32 %v731, 7
    %v733 = vsub.s32 1, %v732
    %v734 = vrot.slane %v725, %v733
    %v735 = vlaneseq
    %v736 = vshrl.u32 %v735, 7
    %v737 = vsub.s32 2, %v736
    %v738 = vrot.slane %v725, %v737
    %v739 = vlaneseq
    %v740 = vshrl.u32 %v739, 7
    %v741 = vsub.s32 3, %v740
    %v742 = vrot.slane %v725, %v741
    %747 = vmatprep.subr.mxu0 %v534
    %748 = vmatpush1.msra.mxu0 %v533
    %749 = vmatprep.subr.mxu0 %v538
    %750 = vmatpush1.msra.mxu0 %v537
    %751 = vmatprep.subr.mxu0 %v542
    %752 = vmatpush1.msra.mxu0 %v541
    %753 = vmatprep.subr.mxu0 %v546
    %754 = vmatpush1.msra.mxu0 %v545
    %755 = vmatprep.subr.mxu0 %v550
    %756 = vmatpush1.msra.mxu0 %v549
    %757 = vmatprep.subr.mxu0 %v554
    %758 = vmatpush1.msra.mxu0 %v553
    %759 = vmatprep.subr.mxu0 %v558
    %760 = vmatpush1.msra.mxu0 %v557
    %761 = vmatprep.subr.mxu0 %v562
    %762 = vmatpush1.msra.mxu0 %v561
    %763 = vmatprep.subr.mxu0 %v566
    %764 = vmatpush1.msra.mxu0 %v565
    %765 = vmatprep.subr.mxu0 %v570
    %766 = vmatpush1.msra.mxu0 %v569
    %767 = vmatprep.subr.mxu0 %v574
    %768 = vmatpush1.msra.mxu0 %v573
    %769 = vmatprep.subr.mxu0 %v578
    %770 = vmatpush1.msra.mxu0 %v577
    %771 = vmatprep.subr.mxu0 %v582
    %772 = vmatpush1.msra.mxu0 %v581
    %773 = vmatprep.subr.mxu0 %v586
    %774 = vmatpush1.msra.mxu0 %v585
    %775 = vmatprep.subr.mxu0 %v590
    %776 = vmatpush1.msra.mxu0 %v589
    %777 = vmatprep.subr.mxu0 %v594
    %778 = vmatpush1.msra.mxu0 %v593
    %779 = vmatprep.subr.mxu0 %v598
    %780 = vmatpush1.msra.mxu0 %v597
    %781 = vmatprep.subr.mxu0 %v602
    %782 = vmatpush1.msra.mxu0 %v601
    %783 = vmatprep.subr.mxu0 %v606
    %784 = vmatpush1.msra.mxu0 %v605
    %785 = vmatprep.subr.mxu0 %v610
    %786 = vmatpush1.msra.mxu0 %v609
    %787 = vmatprep.subr.mxu0 %v614
    %788 = vmatpush1.msra.mxu0 %v613
    %789 = vmatprep.subr.mxu0 %v618
    %790 = vmatpush1.msra.mxu0 %v617
    %791 = vmatprep.subr.mxu0 %v622
    %792 = vmatpush1.msra.mxu0 %v621
    %793 = vmatprep.subr.mxu0 %v626
    %794 = vmatpush1.msra.mxu0 %v625
    %795 = vmatprep.subr.mxu0 %v630
    %796 = vmatpush1.msra.mxu0 %v629
    %797 = vmatprep.subr.mxu0 %v634
    %798 = vmatpush1.msra.mxu0 %v633
    %799 = vmatprep.subr.mxu0 %v638
    %800 = vmatpush1.msra.mxu0 %v637
    %801 = vmatprep.subr.mxu0 %v642
    %802 = vmatpush1.msra.mxu0 %v641
    %803 = vmatprep.subr.mxu0 %v646
    %804 = vmatpush1.msra.mxu0 %v645
    %805 = vmatprep.subr.mxu0 %v650
    %806 = vmatpush1.msra.mxu0 %v649
    %807 = vmatprep.subr.mxu0 %v654
    %808 = vmatpush1.msra.mxu0 %v653
    %809 = vmatprep.subr.mxu0 %v658
    %810 = vmatpush1.msra.mxu0 %v657
    %811 = vmatprep.mubr.f32.mxu0 %v531
    %812 = vmatmul.mubr.f32.gmra.mrb[0].mxu0 %v530
    %v813 = vpop.f32.mrb[0].mxu0
    %v814 = vadd.f32 %v730, %v813
    %v815 = vpop.f32.mrb[0].mxu0
    %v816 = vadd.f32 %v734, %v815
    %817 = vdwg.mxu0
    %818 = vmatprep.subr.mxu0 %v662
    %819 = vmatpush1.msra.mxu0 %v661
    %820 = vmatprep.subr.mxu0 %v666
    %821 = vmatpush1.msra.mxu0 %v665
    %822 = vmatprep.subr.mxu0 %v670
    %823 = vmatpush1.msra.mxu0 %v669
    %824 = vmatprep.subr.mxu0 %v674
    %825 = vmatpush1.msra.mxu0 %v673
    %826 = vmatprep.subr.mxu0 %v678
    %827 = vmatpush1.msra.mxu0 %v677
    %828 = vmatprep.subr.mxu0 %v682
    %829 = vmatpush1.msra.mxu0 %v681
    %830 = vmatprep.subr.mxu0 %v686
    %831 = vmatpush1.msra.mxu0 %v685
    %832 = vmatprep.subr.mxu0 %v690
    %833 = vmatpush1.msra.mxu0 %v689
    %834 = vmatprep.subr.mxu0 %v694
    %835 = vmatpush1.msra.mxu0 %v693
    %836 = vmatprep.subr.mxu0 %v698
    %837 = vmatpush1.msra.mxu0 %v697
    %838 = vmatprep.subr.mxu0 %v702
    %839 = vmatpush1.msra.mxu0 %v701
    %840 = vmatprep.subr.mxu0 %v706
    %841 = vmatpush1.msra.mxu0 %v705
    %842 = vmatprep.subr.mxu0 %v710
    %843 = vmatpush1.msra.mxu0 %v709
    %844 = vmatprep.subr.mxu0 %v714
    %845 = vmatpush1.msra.mxu0 %v713
    %846 = vmatprep.subr.mxu0 %v718
    %847 = vmatpush1.msra.mxu0 %v717
    %848 = vmatprep.subr.mxu0 %v722
    %849 = vmatpush1.msra.mxu0 %v721
    %850 = vmatprep.subr.mxu0 0.0
    %851 = vmatpush1.msra.mxu0 0.0
    %852 = vmatprep.subr.mxu0 0.0
    %853 = vmatpush1.msra.mxu0 0.0
    %854 = vmatprep.subr.mxu0 0.0
    %855 = vmatpush1.msra.mxu0 0.0
    %856 = vmatprep.subr.mxu0 0.0
    %857 = vmatpush1.msra.mxu0 0.0
    %858 = vmatprep.subr.mxu0 0.0
    %859 = vmatpush1.msra.mxu0 0.0
    %860 = vmatprep.subr.mxu0 0.0
    %861 = vmatpush1.msra.mxu0 0.0
    %862 = vmatprep.subr.mxu0 0.0
    %863 = vmatpush1.msra.mxu0 0.0
    %864 = vmatprep.subr.mxu0 0.0
    %865 = vmatpush1.msra.mxu0 0.0
    %866 = vmatprep.subr.mxu0 0.0
    %867 = vmatpush1.msra.mxu0 0.0
    %868 = vmatprep.subr.mxu0 0.0
    %869 = vmatpush1.msra.mxu0 0.0
    %870 = vmatprep.subr.mxu0 0.0
    %871 = vmatpush1.msra.mxu0 0.0
    %872 = vmatprep.subr.mxu0 0.0
    %873 = vmatpush1.msra.mxu0 0.0
    %874 = vmatprep.subr.mxu0 0.0
    %875 = vmatpush1.msra.mxu0 0.0
    %876 = vmatprep.subr.mxu0 0.0
    %877 = vmatpush1.msra.mxu0 0.0
    %878 = vmatprep.subr.mxu0 0.0
    %879 = vmatpush1.msra.mxu0 0.0
    %880 = vmatprep.subr.mxu0 0.0
    %881 = vmatpush1.msra.mxu0 0.0
    %882 = vmatprep.mubr.f32.mxu0 0.0
    %883 = vmatmul.mubr.f32.gmra.mrb[0].mxu0 %v532
    %v884 = vpop.f32.mrb[0].mxu0
    %v885 = vadd.f32 %v814, %v884
    %v886 = vpop.f32.mrb[0].mxu0
    %v887 = vadd.f32 %v816, %v886
    %888 = vdwg.mxu0
    %889 = vmatprep.subr.mxu0 %v536
    %890 = vmatpush1.msra.mxu0 %v535
    %891 = vmatprep.subr.mxu0 %v540
    %892 = vmatpush1.msra.mxu0 %v539
    %893 = vmatprep.subr.mxu0 %v544
    %894 = vmatpush1.msra.mxu0 %v543
    %895 = vmatprep.subr.mxu0 %v548
    %896 = vmatpush1.msra.mxu0 %v547
    %897 = vmatprep.subr.mxu0 %v552
    %898 = vmatpush1.msra.mxu0 %v551
    %899 = vmatprep.subr.mxu0 %v556
    %900 = vmatpush1.msra.mxu0 %v555
    %901 = vmatprep.subr.mxu0 %v560
    %902 = vmatpush1.msra.mxu0 %v559
    %903 = vmatprep.subr.mxu0 %v564
    %904 = vmatpush1.msra.mxu0 %v563
    %905 = vmatprep.subr.mxu0 %v568
    %906 = vmatpush1.msra.mxu0 %v567
    %907 = vmatprep.subr.mxu0 %v572
    %908 = vmatpush1.msra.mxu0 %v571
    %909 = vmatprep.subr.mxu0 %v576
    %910 = vmatpush1.msra.mxu0 %v575
    %911 = vmatprep.subr.mxu0 %v580
    %912 = vmatpush1.msra.mxu0 %v579
    %913 = vmatprep.subr.mxu0 %v584
    %914 = vmatpush1.msra.mxu0 %v583
    %915 = vmatprep.subr.mxu0 %v588
    %916 = vmatpush1.msra.mxu0 %v587
    %917 = vmatprep.subr.mxu0 %v592
    %918 = vmatpush1.msra.mxu0 %v591
    %919 = vmatprep.subr.mxu0 %v596
    %920 = vmatpush1.msra.mxu0 %v595
    %921 = vmatprep.subr.mxu0 %v600
    %922 = vmatpush1.msra.mxu0 %v599
    %923 = vmatprep.subr.mxu0 %v604
    %924 = vmatpush1.msra.mxu0 %v603
    %925 = vmatprep.subr.mxu0 %v608
    %926 = vmatpush1.msra.mxu0 %v607
    %927 = vmatprep.subr.mxu0 %v612
    %928 = vmatpush1.msra.mxu0 %v611
    %929 = vmatprep.subr.mxu0 %v616
    %930 = vmatpush1.msra.mxu0 %v615
    %931 = vmatprep.subr.mxu0 %v620
    %932 = vmatpush1.msra.mxu0 %v619
    %933 = vmatprep.subr.mxu0 %v624
    %934 = vmatpush1.msra.mxu0 %v623
    %935 = vmatprep.subr.mxu0 %v628
    %936 = vmatpush1.msra.mxu0 %v627
    %937 = vmatprep.subr.mxu0 %v632
    %938 = vmatpush1.msra.mxu0 %v631
    %939 = vmatprep.subr.mxu0 %v636
    %940 = vmatpush1.msra.mxu0 %v635
    %941 = vmatprep.subr.mxu0 %v640
    %942 = vmatpush1.msra.mxu0 %v639
    %943 = vmatprep.subr.mxu0 %v644
    %944 = vmatpush1.msra.mxu0 %v643
    %945 = vmatprep.subr.mxu0 %v648
    %946 = vmatpush1.msra.mxu0 %v647
    %947 = vmatprep.subr.mxu0 %v652
    %948 = vmatpush1.msra.mxu0 %v651
    %949 = vmatprep.subr.mxu0 %v656
    %950 = vmatpush1.msra.mxu0 %v655
    %951 = vmatprep.subr.mxu0 %v660
    %952 = vmatpush1.msra.mxu0 %v659
    %953 = vmatprep.mubr.f32.mxu0 %v531
    %954 = vmatmul.mubr.f32.gmra.mrb[0].mxu0 %v530
    %v955 = vpop.f32.mrb[0].mxu0
    %v956 = vadd.f32 %v738, %v955
    %v957 = vpop.f32.mrb[0].mxu0
    %v958 = vadd.f32 %v742, %v957
    %959 = vdwg.mxu0
    %960 = vmatprep.subr.mxu0 %v664
    %961 = vmatpush1.msra.mxu0 %v663
    %962 = vmatprep.subr.mxu0 %v668
    %963 = vmatpush1.msra.mxu0 %v667
    %964 = vmatprep.subr.mxu0 %v672
    %965 = vmatpush1.msra.mxu0 %v671
    %966 = vmatprep.subr.mxu0 %v676
    %967 = vmatpush1.msra.mxu0 %v675
    %968 = vmatprep.subr.mxu0 %v680
    %969 = vmatpush1.msra.mxu0 %v679
    %970 = vmatprep.subr.mxu0 %v684
    %971 = vmatpush1.msra.mxu0 %v683
    %972 = vmatprep.subr.mxu0 %v688
    %973 = vmatpush1.msra.mxu0 %v687
    %974 = vmatprep.subr.mxu0 %v692
    %975 = vmatpush1.msra.mxu0 %v691
    %976 = vmatprep.subr.mxu0 %v696
    %977 = vmatpush1.msra.mxu0 %v695
    %978 = vmatprep.subr.mxu0 %v700
    %979 = vmatpush1.msra.mxu0 %v699
    %980 = vmatprep.subr.mxu0 %v704
    %981 = vmatpush1.msra.mxu0 %v703
    %982 = vmatprep.subr.mxu0 %v708
    %983 = vmatpush1.msra.mxu0 %v707
    %984 = vmatprep.subr.mxu0 %v712
    %985 = vmatpush1.msra.mxu0 %v711
    %986 = vmatprep.subr.mxu0 %v716
    %987 = vmatpush1.msra.mxu0 %v715
    %988 = vmatprep.subr.mxu0 %v720
    %989 = vmatpush1.msra.mxu0 %v719
    %990 = vmatprep.subr.mxu0 %v724
    %991 = vmatpush1.msra.mxu0 %v723
    %992 = vmatprep.subr.mxu0 0.0
    %993 = vmatpush1.msra.mxu0 0.0
    %994 = vmatprep.subr.mxu0 0.0
    %995 = vmatpush1.msra.mxu0 0.0
    %996 = vmatprep.subr.mxu0 0.0
    %997 = vmatpush1.msra.mxu0 0.0
    %998 = vmatprep.subr.mxu0 0.0
    %999 = vmatpush1.msra.mxu0 0.0
    %1000 = vmatprep.subr.mxu0 0.0
    %1001 = vmatpush1.msra.mxu0 0.0
    %1002 = vmatprep.subr.mxu0 0.0
    %1003 = vmatpush1.msra.mxu0 0.0
    %1004 = vmatprep.subr.mxu0 0.0
    %1005 = vmatpush1.msra.mxu0 0.0
    %1006 = vmatprep.subr.mxu0 0.0
    %1007 = vmatpush1.msra.mxu0 0.0
    %1008 = vmatprep.subr.mxu0 0.0
    %1009 = vmatpush1.msra.mxu0 0.0
    %1010 = vmatprep.subr.mxu0 0.0
    %1011 = vmatpush1.msra.mxu0 0.0
    %1012 = vmatprep.subr.mxu0 0.0
    %1013 = vmatpush1.msra.mxu0 0.0
    %1014 = vmatprep.subr.mxu0 0.0
    %1015 = vmatpush1.msra.mxu0 0.0
    %1016 = vmatprep.subr.mxu0 0.0
    %1017 = vmatpush1.msra.mxu0 0.0
    %1018 = vmatprep.subr.mxu0 0.0
    %1019 = vmatpush1.msra.mxu0 0.0
    %1020 = vmatprep.subr.mxu0 0.0
    %1021 = vmatpush1.msra.mxu0 0.0
    %1022 = vmatprep.subr.mxu0 0.0
    %1023 = vmatpush1.msra.mxu0 0.0
    %1024 = vmatprep.mubr.f32.mxu0 0.0
    %1025 = vmatmul.mubr.f32.gmra.mrb[0].mxu0 %v532
    %v1026 = vpop.f32.mrb[0].mxu0
    %v1027 = vadd.f32 %v956, %v1026
    %v1028 = vpop.f32.mrb[0].mxu0
    %v1029 = vadd.f32 %v958, %v1028
    %1030 = vdwg.mxu0
    %v1031 = vmul.f32 %v885, 0.01
    %v1032 = vmul.f32 %v887, 0.01
    %v1033 = vmul.f32 %v1027, 0.01
    %v1034 = vmul.f32 %v1029, 0.01
    %v1035 = vmax.f32 %v885, %v1031
    %v1036 = vmax.f32 %v887, %v1032
    %v1037 = vmax.f32 %v1027, %v1033
    %v1038 = vmax.f32 %v1029, %v1034
    %v1039 = vld [vmem:[%s9] sm:$0xff]
    %v1040 = vld [vmem:[%s9 + $0x8] sm:$0xff]
    %v1041 = vld [vmem:[%s9 + $0x10] sm:$0xff]
    %v1042 = vld [vmem:[%s9 + $0x18] sm:$0xff]
    %v1043 = vld [vmem:[%s9 + $0x20] sm:$0xff]
    %v1044 = vld [vmem:[%s9 + $0x28] sm:$0xff]
    %v1045 = vld [vmem:[%s9 + $0x30] sm:$0xff]
    %v1046 = vld [vmem:[%s9 + $0x38] sm:$0xff]
    %v1047 = vld [vmem:[%s9 + $0x40] sm:$0xff]
    %v1048 = vld [vmem:[%s9 + $0x48] sm:$0xff]
    %v1049 = vld [vmem:[%s9 + $0x50] sm:$0xff]
    %v1050 = vld [vmem:[%s9 + $0x58] sm:$0xff]
    %v1051 = vld [vmem:[%s9 + $0x60] sm:$0xff]
    %v1052 = vld [vmem:[%s9 + $0x68] sm:$0xff]
    %v1053 = vld [vmem:[%s9 + $0x70] sm:$0xff]
    %v1054 = vld [vmem:[%s9 + $0x78] sm:$0xff]
    %v1055 = vld [vmem:[%s9 + $0x80] sm:$0xff]
    %v1056 = vld [vmem:[%s9 + $0x88] sm:$0xff]
    %v1057 = vld [vmem:[%s9 + $0x90] sm:$0xff]
    %v1058 = vld [vmem:[%s9 + $0x98] sm:$0xff]
    %v1059 = vld [vmem:[%s9 + $0xa0] sm:$0xff]
    %v1060 = vld [vmem:[%s9 + $0xa8] sm:$0xff]
    %v1061 = vld [vmem:[%s9 + $0xb0] sm:$0xff]
    %v1062 = vld [vmem:[%s9 + $0xb8] sm:$0xff]
    %v1063 = vld [vmem:[%s9 + $0xc0] sm:$0xff]
    %v1064 = vld [vmem:[%s9 + $0xc8] sm:$0xff]
    %v1065 = vld [vmem:[%s9 + $0xd0] sm:$0xff]
    %v1066 = vld [vmem:[%s9 + $0xd8] sm:$0xff]
    %v1067 = vld [vmem:[%s9 + $0xe0] sm:$0xff]
    %v1068 = vld [vmem:[%s9 + $0xe8] sm:$0xff]
    %v1069 = vld [vmem:[%s9 + $0xf0] sm:$0xff]
    %v1070 = vld [vmem:[%s9 + $0xf8] sm:$0xff]
    %v1071 = vld [vmem:[%s9 + $0x100] sm:$0xff]
    %v1072 = vld [vmem:[%s9 + $0x108] sm:$0xff]
    %v1073 = vld [vmem:[%s9 + $0x110] sm:$0xff]
    %v1074 = vld [vmem:[%s9 + $0x118] sm:$0xff]
    %v1075 = vld [vmem:[%s9 + $0x120] sm:$0xff]
    %v1076 = vld [vmem:[%s9 + $0x128] sm:$0xff]
    %v1077 = vld [vmem:[%s9 + $0x130] sm:$0xff]
    %v1078 = vld [vmem:[%s9 + $0x138] sm:$0xff]
    %v1079 = vld [vmem:[%s9 + $0x140] sm:$0xff]
    %v1080 = vld [vmem:[%s9 + $0x148] sm:$0xff]
    %v1081 = vld [vmem:[%s9 + $0x150] sm:$0xff]
    %v1082 = vld [vmem:[%s9 + $0x158] sm:$0xff]
    %v1083 = vld [vmem:[%s9 + $0x160] sm:$0xff]
    %v1084 = vld [vmem:[%s9 + $0x168] sm:$0xff]
    %v1085 = vld [vmem:[%s9 + $0x170] sm:$0xff]
    %v1086 = vld [vmem:[%s9 + $0x178] sm:$0xff]
    %v1087 = vld [vmem:[%s9 + $0x180] sm:$0xff]
    %v1088 = vld [vmem:[%s9 + $0x188] sm:$0xff]
    %v1089 = vld [vmem:[%s9 + $0x190] sm:$0xff]
    %v1090 = vld [vmem:[%s9 + $0x198] sm:$0xff]
    %v1091 = vld [vmem:[%s9 + $0x1a0] sm:$0xff]
    %v1092 = vld [vmem:[%s9 + $0x1a8] sm:$0xff]
    %v1093 = vld [vmem:[%s9 + $0x1b0] sm:$0xff]
    %v1094 = vld [vmem:[%s9 + $0x1b8] sm:$0xff]
    %v1095 = vld [vmem:[%s9 + $0x1c0] sm:$0xff]
    %v1096 = vld [vmem:[%s9 + $0x1c8] sm:$0xff]
    %v1097 = vld [vmem:[%s9 + $0x1d0] sm:$0xff]
    %v1098 = vld [vmem:[%s9 + $0x1d8] sm:$0xff]
    %v1099 = vld [vmem:[%s9 + $0x1e0] sm:$0xff]
    %v1100 = vld [vmem:[%s9 + $0x1e8] sm:$0xff]
    %v1101 = vld [vmem:[%s9 + $0x1f0] sm:$0xff]
    %v1102 = vld [vmem:[%s9 + $0x1f8] sm:$0xff]
    %v1103 = vld [vmem:[%s9 + $0x200] sm:$0xff]
    %v1104 = vld [vmem:[%s9 + $0x208] sm:$0xff]
    %v1105 = vld [vmem:[%s9 + $0x210] sm:$0xff]
    %v1106 = vld [vmem:[%s9 + $0x218] sm:$0xff]
    %v1107 = vld [vmem:[%s9 + $0x220] sm:$0xff]
    %v1108 = vld [vmem:[%s9 + $0x228] sm:$0xff]
    %v1109 = vld [vmem:[%s9 + $0x230] sm:$0xff]
    %v1110 = vld [vmem:[%s9 + $0x238] sm:$0xff]
    %v1111 = vld [vmem:[%s9 + $0x240] sm:$0xff]
    %v1112 = vld [vmem:[%s9 + $0x248] sm:$0xff]
    %v1113 = vld [vmem:[%s9 + $0x250] sm:$0xff]
    %v1114 = vld [vmem:[%s9 + $0x258] sm:$0xff]
    %v1115 = vld [vmem:[%s9 + $0x260] sm:$0xff]
    %v1116 = vld [vmem:[%s9 + $0x268] sm:$0xff]
    %v1117 = vld [vmem:[%s9 + $0x270] sm:$0xff]
    %v1118 = vld [vmem:[%s9 + $0x278] sm:$0xff]
    %v1119 = vld [vmem:[%s9 + $0x280] sm:$0xff]
    %v1120 = vld [vmem:[%s9 + $0x288] sm:$0xff]
    %v1121 = vld [vmem:[%s9 + $0x290] sm:$0xff]
    %v1122 = vld [vmem:[%s9 + $0x298] sm:$0xff]
    %v1123 = vld [vmem:[%s9 + $0x2a0] sm:$0xff]
    %v1124 = vld [vmem:[%s9 + $0x2a8] sm:$0xff]
    %v1125 = vld [vmem:[%s9 + $0x2b0] sm:$0xff]
    %v1126 = vld [vmem:[%s9 + $0x2b8] sm:$0xff]
    %v1127 = vld [vmem:[%s9 + $0x2c0] sm:$0xff]
    %v1128 = vld [vmem:[%s9 + $0x2c8] sm:$0xff]
    %v1129 = vld [vmem:[%s9 + $0x2d0] sm:$0xff]
    %v1130 = vld [vmem:[%s9 + $0x2d8] sm:$0xff]
    %v1131 = vld [vmem:[%s9 + $0x2e0] sm:$0xff]
    %v1132 = vld [vmem:[%s9 + $0x2e8] sm:$0xff]
    %v1133 = vld [vmem:[%s9 + $0x2f0] sm:$0xff]
    %v1134 = vld [vmem:[%s9 + $0x2f8] sm:$0xff]
    %v1135 = vld [vmem:[%s9 + $0x300] sm:$0xff]
    %v1136 = vld [vmem:[%s9 + $0x308] sm:$0xff]
    %v1137 = vld [vmem:[%s9 + $0x310] sm:$0xff]
    %v1138 = vld [vmem:[%s9 + $0x318] sm:$0xff]
    %v1139 = vld [vmem:[%s9 + $0x320] sm:$0xff]
    %v1140 = vld [vmem:[%s9 + $0x328] sm:$0xff]
    %v1141 = vld [vmem:[%s9 + $0x330] sm:$0xff]
    %v1142 = vld [vmem:[%s9 + $0x338] sm:$0xff]
    %v1143 = vld [vmem:[%s9 + $0x340] sm:$0xff]
    %v1144 = vld [vmem:[%s9 + $0x348] sm:$0xff]
    %v1145 = vld [vmem:[%s9 + $0x350] sm:$0xff]
    %v1146 = vld [vmem:[%s9 + $0x358] sm:$0xff]
    %v1147 = vld [vmem:[%s9 + $0x360] sm:$0xff]
    %v1148 = vld [vmem:[%s9 + $0x368] sm:$0xff]
    %v1149 = vld [vmem:[%s9 + $0x370] sm:$0xff]
    %v1150 = vld [vmem:[%s9 + $0x378] sm:$0xff]
    %v1151 = vld [vmem:[%s9 + $0x380] sm:$0xff]
    %v1152 = vld [vmem:[%s9 + $0x388] sm:$0xff]
    %v1153 = vld [vmem:[%s9 + $0x390] sm:$0xff]
    %v1154 = vld [vmem:[%s9 + $0x398] sm:$0xff]
    %v1155 = vld [vmem:[%s9 + $0x3a0] sm:$0xff]
    %v1156 = vld [vmem:[%s9 + $0x3a8] sm:$0xff]
    %v1157 = vld [vmem:[%s9 + $0x3b0] sm:$0xff]
    %v1158 = vld [vmem:[%s9 + $0x3b8] sm:$0xff]
    %v1159 = vld [vmem:[%s9 + $0x3c0] sm:$0xff]
    %v1160 = vld [vmem:[%s9 + $0x3c8] sm:$0xff]
    %v1161 = vld [vmem:[%s9 + $0x3d0] sm:$0xff]
    %v1162 = vld [vmem:[%s9 + $0x3d8] sm:$0xff]
    %v1163 = vld [vmem:[%s9 + $0x3e0] sm:$0xff]
    %v1164 = vld [vmem:[%s9 + $0x3e8] sm:$0xff]
    %v1165 = vld [vmem:[%s9 + $0x3f0] sm:$0xff]
    %v1166 = vld [vmem:[%s9 + $0x3f8] sm:$0xff]
    %v1167 = vld [vmem:[%s9 + $0x400] sm:$0xff]
    %v1168 = vld [vmem:[%s9 + $0x408] sm:$0xff]
    %v1169 = vld [vmem:[%s9 + $0x410] sm:$0xff]
    %v1170 = vld [vmem:[%s9 + $0x418] sm:$0xff]
    %v1171 = vld [vmem:[%s9 + $0x420] sm:$0xff]
    %v1172 = vld [vmem:[%s9 + $0x428] sm:$0xff]
    %v1173 = vld [vmem:[%s9 + $0x430] sm:$0xff]
    %v1174 = vld [vmem:[%s9 + $0x438] sm:$0xff]
    %v1175 = vld [vmem:[%s9 + $0x440] sm:$0xff]
    %v1176 = vld [vmem:[%s9 + $0x448] sm:$0xff]
    %v1177 = vld [vmem:[%s9 + $0x450] sm:$0xff]
    %v1178 = vld [vmem:[%s9 + $0x458] sm:$0xff]
    %v1179 = vld [vmem:[%s9 + $0x460] sm:$0xff]
    %v1180 = vld [vmem:[%s9 + $0x468] sm:$0xff]
    %v1181 = vld [vmem:[%s9 + $0x470] sm:$0xff]
    %v1182 = vld [vmem:[%s9 + $0x478] sm:$0xff]
    %v1183 = vld [vmem:[%s9 + $0x480] sm:$0xff]
    %v1184 = vld [vmem:[%s9 + $0x488] sm:$0xff]
    %v1185 = vld [vmem:[%s9 + $0x490] sm:$0xff]
    %v1186 = vld [vmem:[%s9 + $0x498] sm:$0xff]
    %v1187 = vld [vmem:[%s9 + $0x4a0] sm:$0xff]
    %v1188 = vld [vmem:[%s9 + $0x4a8] sm:$0xff]
    %v1189 = vld [vmem:[%s9 + $0x4b0] sm:$0xff]
    %v1190 = vld [vmem:[%s9 + $0x4b8] sm:$0xff]
    %v1191 = vld [vmem:[%s9 + $0x4c0] sm:$0xff]
    %v1192 = vld [vmem:[%s9 + $0x4c8] sm:$0xff]
    %v1193 = vld [vmem:[%s9 + $0x4d0] sm:$0xff]
    %v1194 = vld [vmem:[%s9 + $0x4d8] sm:$0xff]
    %v1195 = vld [vmem:[%s9 + $0x4e0] sm:$0xff]
    %v1196 = vld [vmem:[%s9 + $0x4e8] sm:$0xff]
    %v1197 = vld [vmem:[%s9 + $0x4f0] sm:$0xff]
    %v1198 = vld [vmem:[%s9 + $0x4f8] sm:$0xff]
    %v1199 = vld [vmem:[%s9 + $0x500] sm:$0xff]
    %v1200 = vld [vmem:[%s9 + $0x508] sm:$0xff]
    %v1201 = vld [vmem:[%s9 + $0x510] sm:$0xff]
    %v1202 = vld [vmem:[%s9 + $0x518] sm:$0xff]
    %v1203 = vld [vmem:[%s9 + $0x520] sm:$0xff]
    %v1204 = vld [vmem:[%s9 + $0x528] sm:$0xff]
    %v1205 = vld [vmem:[%s9 + $0x530] sm:$0xff]
    %v1206 = vld [vmem:[%s9 + $0x538] sm:$0xff]
    %v1207 = vld [vmem:[%s9 + $0x540] sm:$0xff]
    %v1208 = vld [vmem:[%s9 + $0x548] sm:$0xff]
    %v1209 = vld [vmem:[%s9 + $0x550] sm:$0xff]
    %v1210 = vld [vmem:[%s9 + $0x558] sm:$0xff]
    %v1211 = vld [vmem:[%s9 + $0x560] sm:$0xff]
    %v1212 = vld [vmem:[%s9 + $0x568] sm:$0xff]
    %v1213 = vld [vmem:[%s9 + $0x570] sm:$0xff]
    %v1214 = vld [vmem:[%s9 + $0x578] sm:$0xff]
    %v1215 = vld [vmem:[%s9 + $0x580] sm:$0xff]
    %v1216 = vld [vmem:[%s9 + $0x588] sm:$0xff]
    %v1217 = vld [vmem:[%s9 + $0x590] sm:$0xff]
    %v1218 = vld [vmem:[%s9 + $0x598] sm:$0xff]
    %v1219 = vld [vmem:[%s9 + $0x5a0] sm:$0xff]
    %v1220 = vld [vmem:[%s9 + $0x5a8] sm:$0xff]
    %v1221 = vld [vmem:[%s9 + $0x5b0] sm:$0xff]
    %v1222 = vld [vmem:[%s9 + $0x5b8] sm:$0xff]
    %v1223 = vld [vmem:[%s9 + $0x5c0] sm:$0xff]
    %v1224 = vld [vmem:[%s9 + $0x5c8] sm:$0xff]
    %v1225 = vld [vmem:[%s9 + $0x5d0] sm:$0xff]
    %v1226 = vld [vmem:[%s9 + $0x5d8] sm:$0xff]
    %v1227 = vld [vmem:[%s9 + $0x5e0] sm:$0xff]
    %v1228 = vld [vmem:[%s9 + $0x5e8] sm:$0xff]
    %v1229 = vld [vmem:[%s9 + $0x5f0] sm:$0xff]
    %v1230 = vld [vmem:[%s9 + $0x5f8] sm:$0xff]
    %v1231 = vld [vmem:[%s9 + $0x600] sm:$0xff]
    %v1232 = vld [vmem:[%s9 + $0x608] sm:$0xff]
    %v1233 = vld [vmem:[%s9 + $0x610] sm:$0xff]
    %v1234 = vld [vmem:[%s9 + $0x618] sm:$0xff]
    %v1235 = vld [vmem:[%s9 + $0x620] sm:$0xff]
    %v1236 = vld [vmem:[%s9 + $0x628] sm:$0xff]
    %v1237 = vld [vmem:[%s9 + $0x630] sm:$0xff]
    %v1238 = vld [vmem:[%s9 + $0x638] sm:$0xff]
    %v1239 = vld [vmem:[%s9 + $0x640] sm:$0xff]
    %v1240 = vld [vmem:[%s9 + $0x648] sm:$0xff]
    %v1241 = vld [vmem:[%s9 + $0x650] sm:$0xff]
    %v1242 = vld [vmem:[%s9 + $0x658] sm:$0xff]
    %v1243 = vld [vmem:[%s9 + $0x660] sm:$0xff]
    %v1244 = vld [vmem:[%s9 + $0x668] sm:$0xff]
    %v1245 = vld [vmem:[%s9 + $0x670] sm:$0xff]
    %v1246 = vld [vmem:[%s9 + $0x678] sm:$0xff]
    %v1247 = vld [vmem:[%s9 + $0x680] sm:$0xff]
    %v1248 = vld [vmem:[%s9 + $0x688] sm:$0xff]
    %v1249 = vld [vmem:[%s9 + $0x690] sm:$0xff]
    %v1250 = vld [vmem:[%s9 + $0x698] sm:$0xff]
    %v1251 = vld [vmem:[%s9 + $0x6a0] sm:$0xff]
    %v1252 = vld [vmem:[%s9 + $0x6a8] sm:$0xff]
    %v1253 = vld [vmem:[%s9 + $0x6b0] sm:$0xff]
    %v1254 = vld [vmem:[%s9 + $0x6b8] sm:$0xff]
    %v1255 = vld [vmem:[%s9 + $0x6c0] sm:$0xff]
    %v1256 = vld [vmem:[%s9 + $0x6c8] sm:$0xff]
    %v1257 = vld [vmem:[%s9 + $0x6d0] sm:$0xff]
    %v1258 = vld [vmem:[%s9 + $0x6d8] sm:$0xff]
    %v1259 = vld [vmem:[%s9 + $0x6e0] sm:$0xff]
    %v1260 = vld [vmem:[%s9 + $0x6e8] sm:$0xff]
    %v1261 = vld [vmem:[%s9 + $0x6f0] sm:$0xff]
    %v1262 = vld [vmem:[%s9 + $0x6f8] sm:$0xff]
    %v1263 = vld [vmem:[%s9 + $0x700] sm:$0xff]
    %v1264 = vld [vmem:[%s9 + $0x708] sm:$0xff]
    %v1265 = vld [vmem:[%s9 + $0x710] sm:$0xff]
    %v1266 = vld [vmem:[%s9 + $0x718] sm:$0xff]
    %v1267 = vld [vmem:[%s9 + $0x720] sm:$0xff]
    %v1268 = vld [vmem:[%s9 + $0x728] sm:$0xff]
    %v1269 = vld [vmem:[%s9 + $0x730] sm:$0xff]
    %v1270 = vld [vmem:[%s9 + $0x738] sm:$0xff]
    %v1271 = vld [vmem:[%s9 + $0x740] sm:$0xff]
    %v1272 = vld [vmem:[%s9 + $0x748] sm:$0xff]
    %v1273 = vld [vmem:[%s9 + $0x750] sm:$0xff]
    %v1274 = vld [vmem:[%s9 + $0x758] sm:$0xff]
    %v1275 = vld [vmem:[%s9 + $0x760] sm:$0xff]
    %v1276 = vld [vmem:[%s9 + $0x768] sm:$0xff]
    %v1277 = vld [vmem:[%s9 + $0x770] sm:$0xff]
    %v1278 = vld [vmem:[%s9 + $0x778] sm:$0xff]
    %v1279 = vld [vmem:[%s9 + $0x780] sm:$0xff]
    %v1280 = vld [vmem:[%s9 + $0x788] sm:$0xff]
    %v1281 = vld [vmem:[%s9 + $0x790] sm:$0xff]
    %v1282 = vld [vmem:[%s9 + $0x798] sm:$0xff]
    %v1283 = vld [vmem:[%s9 + $0x7a0] sm:$0xff]
    %v1284 = vld [vmem:[%s9 + $0x7a8] sm:$0xff]
    %v1285 = vld [vmem:[%s9 + $0x7b0] sm:$0xff]
    %v1286 = vld [vmem:[%s9 + $0x7b8] sm:$0xff]
    %v1287 = vld [vmem:[%s9 + $0x7c0] sm:$0xff]
    %v1288 = vld [vmem:[%s9 + $0x7c8] sm:$0xff]
    %v1289 = vld [vmem:[%s9 + $0x7d0] sm:$0xff]
    %v1290 = vld [vmem:[%s9 + $0x7d8] sm:$0xff]
    %v1291 = vld [vmem:[%s9 + $0x7e0] sm:$0xff]
    %v1292 = vld [vmem:[%s9 + $0x7e8] sm:$0xff]
    %v1293 = vld [vmem:[%s9 + $0x7f0] sm:$0xff]
    %v1294 = vld [vmem:[%s9 + $0x7f8] sm:$0xff]
    %v1295 = vld [vmem:[%s10] sm:$0xf]
    %v1297 = vlaneseq
    %v1298 = vshrl.u32 %v1297, 7
    %v1299 = vsub.s32 0, %v1298
    %v1300 = vrot.slane %v1295, %v1299
    %v1301 = vlaneseq
    %v1302 = vshrl.u32 %v1301, 7
    %v1303 = vsub.s32 1, %v1302
    %v1304 = vrot.slane %v1295, %v1303
    %v1305 = vlaneseq
    %v1306 = vshrl.u32 %v1305, 7
    %v1307 = vsub.s32 2, %v1306
    %v1308 = vrot.slane %v1295, %v1307
    %v1309 = vlaneseq
    %v1310 = vshrl.u32 %v1309, 7
    %v1311 = vsub.s32 3, %v1310
    %v1312 = vrot.slane %v1295, %v1311
    %1317 = vmatprep.subr.mxu0 %v1040
    %1318 = vmatpush1.msra.mxu0 %v1039
    %1319 = vmatprep.subr.mxu0 %v1044
    %1320 = vmatpush1.msra.mxu0 %v1043
    %1321 = vmatprep.subr.mxu0 %v1048
    %1322 = vmatpush1.msra.mxu0 %v1047
    %1323 = vmatprep.subr.mxu0 %v1052
    %1324 = vmatpush1.msra.mxu0 %v1051
    %1325 = vmatprep.subr.mxu0 %v1056
    %1326 = vmatpush1.msra.mxu0 %v1055
    %1327 = vmatprep.subr.mxu0 %v1060
    %1328 = vmatpush1.msra.mxu0 %v1059
    %1329 = vmatprep.subr.mxu0 %v1064
    %1330 = vmatpush1.msra.mxu0 %v1063
    %1331 = vmatprep.subr.mxu0 %v1068
    %1332 = vmatpush1.msra.mxu0 %v1067
    %1333 = vmatprep.subr.mxu0 %v1072
    %1334 = vmatpush1.msra.mxu0 %v1071
    %1335 = vmatprep.subr.mxu0 %v1076
    %1336 = vmatpush1.msra.mxu0 %v1075
    %1337 = vmatprep.subr.mxu0 %v1080
    %1338 = vmatpush1.msra.mxu0 %v1079
    %1339 = vmatprep.subr.mxu0 %v1084
    %1340 = vmatpush1.msra.mxu0 %v1083
    %1341 = vmatprep.subr.mxu0 %v1088
    %1342 = vmatpush1.msra.mxu0 %v1087
    %1343 = vmatprep.subr.mxu0 %v1092
    %1344 = vmatpush1.msra.mxu0 %v1091
    %1345 = vmatprep.subr.mxu0 %v1096
    %1346 = vmatpush1.msra.mxu0 %v1095
    %1347 = vmatprep.subr.mxu0 %v1100
    %1348 = vmatpush1.msra.mxu0 %v1099
    %1349 = vmatprep.subr.mxu0 %v1104
    %1350 = vmatpush1.msra.mxu0 %v1103
    %1351 = vmatprep.subr.mxu0 %v1108
    %1352 = vmatpush1.msra.mxu0 %v1107
    %1353 = vmatprep.subr.mxu0 %v1112
    %1354 = vmatpush1.msra.mxu0 %v1111
    %1355 = vmatprep.subr.mxu0 %v1116
    %1356 = vmatpush1.msra.mxu0 %v1115
    %1357 = vmatprep.subr.mxu0 %v1120
    %1358 = vmatpush1.msra.mxu0 %v1119
    %1359 = vmatprep.subr.mxu0 %v1124
    %1360 = vmatpush1.msra.mxu0 %v1123
    %1361 = vmatprep.subr.mxu0 %v1128
    %1362 = vmatpush1.msra.mxu0 %v1127
    %1363 = vmatprep.subr.mxu0 %v1132
    %1364 = vmatpush1.msra.mxu0 %v1131
    %1365 = vmatprep.subr.mxu0 %v1136
    %1366 = vmatpush1.msra.mxu0 %v1135
    %1367 = vmatprep.subr.mxu0 %v1140
    %1368 = vmatpush1.msra.mxu0 %v1139
    %1369 = vmatprep.subr.mxu0 %v1144
    %1370 = vmatpush1.msra.mxu0 %v1143
    %1371 = vmatprep.subr.mxu0 %v1148
    %1372 = vmatpush1.msra.mxu0 %v1147
    %1373 = vmatprep.subr.mxu0 %v1152
    %1374 = vmatpush1.msra.mxu0 %v1151
    %1375 = vmatprep.subr.mxu0 %v1156
    %1376 = vmatpush1.msra.mxu0 %v1155
    %1377 = vmatprep.subr.mxu0 %v1160
    %1378 = vmatpush1.msra.mxu0 %v1159
    %1379 = vmatprep.subr.mxu0 %v1164
    %1380 = vmatpush1.msra.mxu0 %v1163
    %1381 = vmatprep.mubr.f32.mxu0 %v1036
    %1382 = vmatmul.mubr.f32.gmra.mrb[0].mxu0 %v1035
    %v1383 = vpop.f32.mrb[0].mxu0
    %v1384 = vadd.f32 %v1300, %v1383
    %v1385 = vpop.f32.mrb[0].mxu0
    %v1386 = vadd.f32 %v1304, %v1385
    %1387 = vdwg.mxu0
    %1388 = vmatprep.subr.mxu0 %v1168
    %1389 = vmatpush1.msra.mxu0 %v1167
    %1390 = vmatprep.subr.mxu0 %v1172
    %1391 = vmatpush1.msra.mxu0 %v1171
    %1392 = vmatprep.subr.mxu0 %v1176
    %1393 = vmatpush1.msra.mxu0 %v1175
    %1394 = vmatprep.subr.mxu0 %v1180
    %1395 = vmatpush1.msra.mxu0 %v1179
    %1396 = vmatprep.subr.mxu0 %v1184
    %1397 = vmatpush1.msra.mxu0 %v1183
    %1398 = vmatprep.subr.mxu0 %v1188
    %1399 = vmatpush1.msra.mxu0 %v1187
    %1400 = vmatprep.subr.mxu0 %v1192
    %1401 = vmatpush1.msra.mxu0 %v1191
    %1402 = vmatprep.subr.mxu0 %v1196
    %1403 = vmatpush1.msra.mxu0 %v1195
    %1404 = vmatprep.subr.mxu0 %v1200
    %1405 = vmatpush1.msra.mxu0 %v1199
    %1406 = vmatprep.subr.mxu0 %v1204
    %1407 = vmatpush1.msra.mxu0 %v1203
    %1408 = vmatprep.subr.mxu0 %v1208
    %1409 = vmatpush1.msra.mxu0 %v1207
    %1410 = vmatprep.subr.mxu0 %v1212
    %1411 = vmatpush1.msra.mxu0 %v1211
    %1412 = vmatprep.subr.mxu0 %v1216
    %1413 = vmatpush1.msra.mxu0 %v1215
    %1414 = vmatprep.subr.mxu0 %v1220
    %1415 = vmatpush1.msra.mxu0 %v1219
    %1416 = vmatprep.subr.mxu0 %v1224
    %1417 = vmatpush1.msra.mxu0 %v1223
    %1418 = vmatprep.subr.mxu0 %v1228
    %1419 = vmatpush1.msra.mxu0 %v1227
    %1420 = vmatprep.subr.mxu0 %v1232
    %1421 = vmatpush1.msra.mxu0 %v1231
    %1422 = vmatprep.subr.mxu0 %v1236
    %1423 = vmatpush1.msra.mxu0 %v1235
    %1424 = vmatprep.subr.mxu0 %v1240
    %1425 = vmatpush1.msra.mxu0 %v1239
    %1426 = vmatprep.subr.mxu0 %v1244
    %1427 = vmatpush1.msra.mxu0 %v1243
    %1428 = vmatprep.subr.mxu0 %v1248
    %1429 = vmatpush1.msra.mxu0 %v1247
    %1430 = vmatprep.subr.mxu0 %v1252
    %1431 = vmatpush1.msra.mxu0 %v1251
    %1432 = vmatprep.subr.mxu0 %v1256
    %1433 = vmatpush1.msra.mxu0 %v1255
    %1434 = vmatprep.subr.mxu0 %v1260
    %1435 = vmatpush1.msra.mxu0 %v1259
    %1436 = vmatprep.subr.mxu0 %v1264
    %1437 = vmatpush1.msra.mxu0 %v1263
    %1438 = vmatprep.subr.mxu0 %v1268
    %1439 = vmatpush1.msra.mxu0 %v1267
    %1440 = vmatprep.subr.mxu0 %v1272
    %1441 = vmatpush1.msra.mxu0 %v1271
    %1442 = vmatprep.subr.mxu0 %v1276
    %1443 = vmatpush1.msra.mxu0 %v1275
    %1444 = vmatprep.subr.mxu0 %v1280
    %1445 = vmatpush1.msra.mxu0 %v1279
    %1446 = vmatprep.subr.mxu0 %v1284
    %1447 = vmatpush1.msra.mxu0 %v1283
    %1448 = vmatprep.subr.mxu0 %v1288
    %1449 = vmatpush1.msra.mxu0 %v1287
    %1450 = vmatprep.subr.mxu0 %v1292
    %1451 = vmatpush1.msra.mxu0 %v1291
    %1452 = vmatprep.mubr.f32.mxu0 %v1038
    %1453 = vmatmul.mubr.f32.gmra.mrb[0].mxu0 %v1037
    %v1454 = vpop.f32.mrb[0].mxu0
    %v1455 = vadd.f32 %v1384, %v1454
    %v1456 = vpop.f32.mrb[0].mxu0
    %v1457 = vadd.f32 %v1386, %v1456
    %1458 = vdwg.mxu0
    %1459 = vmatprep.subr.mxu0 %v1042
    %1460 = vmatpush1.msra.mxu0 %v1041
    %1461 = vmatprep.subr.mxu0 %v1046
    %1462 = vmatpush1.msra.mxu0 %v1045
    %1463 = vmatprep.subr.mxu0 %v1050
    %1464 = vmatpush1.msra.mxu0 %v1049
    %1465 = vmatprep.subr.mxu0 %v1054
    %1466 = vmatpush1.msra.mxu0 %v1053
    %1467 = vmatprep.subr.mxu0 %v1058
    %1468 = vmatpush1.msra.mxu0 %v1057
    %1469 = vmatprep.subr.mxu0 %v1062
    %1470 = vmatpush1.msra.mxu0 %v1061
    %1471 = vmatprep.subr.mxu0 %v1066
    %1472 = vmatpush1.msra.mxu0 %v1065
    %1473 = vmatprep.subr.mxu0 %v1070
    %1474 = vmatpush1.msra.mxu0 %v1069
    %1475 = vmatprep.subr.mxu0 %v1074
    %1476 = vmatpush1.msra.mxu0 %v1073
    %1477 = vmatprep.subr.mxu0 %v1078
    %1478 = vmatpush1.msra.mxu0 %v1077
    %1479 = vmatprep.subr.mxu0 %v1082
    %1480 = vmatpush1.msra.mxu0 %v1081
    %1481 = vmatprep.subr.mxu0 %v1086
    %1482 = vmatpush1.msra.mxu0 %v1085
    %1483 = vmatprep.subr.mxu0 %v1090
    %1484 = vmatpush1.msra.mxu0 %v1089
    %1485 = vmatprep.subr.mxu0 %v1094
    %1486 = vmatpush1.msra.mxu0 %v1093
    %1487 = vmatprep.subr.mxu0 %v1098
    %1488 = vmatpush1.msra.mxu0 %v1097
    %1489 = vmatprep.subr.mxu0 %v1102
    %1490 = vmatpush1.msra.mxu0 %v1101
    %1491 = vmatprep.subr.mxu0 %v1106
    %1492 = vmatpush1.msra.mxu0 %v1105
    %1493 = vmatprep.subr.mxu0 %v1110
    %1494 = vmatpush1.msra.mxu0 %v1109
    %1495 = vmatprep.subr.mxu0 %v1114
    %1496 = vmatpush1.msra.mxu0 %v1113
    %1497 = vmatprep.subr.mxu0 %v1118
    %1498 = vmatpush1.msra.mxu0 %v1117
    %1499 = vmatprep.subr.mxu0 %v1122
    %1500 = vmatpush1.msra.mxu0 %v1121
    %1501 = vmatprep.subr.mxu0 %v1126
    %1502 = vmatpush1.msra.mxu0 %v1125
    %1503 = vmatprep.subr.mxu0 %v1130
    %1504 = vmatpush1.msra.mxu0 %v1129
    %1505 = vmatprep.subr.mxu0 %v1134
    %1506 = vmatpush1.msra.mxu0 %v1133
    %1507 = vmatprep.subr.mxu0 %v1138
    %1508 = vmatpush1.msra.mxu0 %v1137
    %1509 = vmatprep.subr.mxu0 %v1142
    %1510 = vmatpush1.msra.mxu0 %v1141
    %1511 = vmatprep.subr.mxu0 %v1146
    %1512 = vmatpush1.msra.mxu0 %v1145
    %1513 = vmatprep.subr.mxu0 %v1150
    %1514 = vmatpush1.msra.mxu0 %v1149
    %1515 = vmatprep.subr.mxu0 %v1154
    %1516 = vmatpush1.msra.mxu0 %v1153
    %1517 = vmatprep.subr.mxu0 %v1158
    %1518 = vmatpush1.msra.mxu0 %v1157
    %1519 = vmatprep.subr.mxu0 %v1162
    %1520 = vmatpush1.msra.mxu0 %v1161
    %1521 = vmatprep.subr.mxu0 %v1166
    %1522 = vmatpush1.msra.mxu0 %v1165
    %1523 = vmatprep.mubr.f32.mxu0 %v1036
    %1524 = vmatmul.mubr.f32.gmra.mrb[0].mxu0 %v1035
    %v1525 = vpop.f32.mrb[0].mxu0
    %v1526 = vadd.f32 %v1308, %v1525
    %v1527 = vpop.f32.mrb[0].mxu0
    %v1528 = vadd.f32 %v1312, %v1527
    %1529 = vdwg.mxu0
    %1530 = vmatprep.subr.mxu0 %v1170
    %1531 = vmatpush1.msra.mxu0 %v1169
    %1532 = vmatprep.subr.mxu0 %v1174
    %1533 = vmatpush1.msra.mxu0 %v1173
    %1534 = vmatprep.subr.mxu0 %v1178
    %1535 = vmatpush1.msra.mxu0 %v1177
    %1536 = vmatprep.subr.mxu0 %v1182
    %1537 = vmatpush1.msra.mxu0 %v1181
    %1538 = vmatprep.subr.mxu0 %v1186
    %1539 = vmatpush1.msra.mxu0 %v1185
    %1540 = vmatprep.subr.mxu0 %v1190
    %1541 = vmatpush1.msra.mxu0 %v1189
    %1542 = vmatprep.subr.mxu0 %v1194
    %1543 = vmatpush1.msra.mxu0 %v1193
    %1544 = vmatprep.subr.mxu0 %v1198
    %1545 = vmatpush1.msra.mxu0 %v1197
    %1546 = vmatprep.subr.mxu0 %v1202
    %1547 = vmatpush1.msra.mxu0 %v1201
    %1548 = vmatprep.subr.mxu0 %v1206
    %1549 = vmatpush1.msra.mxu0 %v1205
    %1550 = vmatprep.subr.mxu0 %v1210
    %1551 = vmatpush1.msra.mxu0 %v1209
    %1552 = vmatprep.subr.mxu0 %v1214
    %1553 = vmatpush1.msra.mxu0 %v1213
    %1554 = vmatprep.subr.mxu0 %v1218
    %1555 = vmatpush1.msra.mxu0 %v1217
    %1556 = vmatprep.subr.mxu0 %v1222
    %1557 = vmatpush1.msra.mxu0 %v1221
    %1558 = vmatprep.subr.mxu0 %v1226
    %1559 = vmatpush1.msra.mxu0 %v1225
    %1560 = vmatprep.subr.mxu0 %v1230
    %1561 = vmatpush1.msra.mxu0 %v1229
    %1562 = vmatprep.subr.mxu0 %v1234
    %1563 = vmatpush1.msra.mxu0 %v1233
    %1564 = vmatprep.subr.mxu0 %v1238
    %1565 = vmatpush1.msra.mxu0 %v1237
    %1566 = vmatprep.subr.mxu0 %v1242
    %1567 = vmatpush1.msra.mxu0 %v1241
    %1568 = vmatprep.subr.mxu0 %v1246
    %1569 = vmatpush1.msra.mxu0 %v1245
    %1570 = vmatprep.subr.mxu0 %v1250
    %1571 = vmatpush1.msra.mxu0 %v1249
    %1572 = vmatprep.subr.mxu0 %v1254
    %1573 = vmatpush1.msra.mxu0 %v1253
    %1574 = vmatprep.subr.mxu0 %v1258
    %1575 = vmatpush1.msra.mxu0 %v1257
    %1576 = vmatprep.subr.mxu0 %v1262
    %1577 = vmatpush1.msra.mxu0 %v1261
    %1578 = vmatprep.subr.mxu0 %v1266
    %1579 = vmatpush1.msra.mxu0 %v1265
    %1580 = vmatprep.subr.mxu0 %v1270
    %1581 = vmatpush1.msra.mxu0 %v1269
    %1582 = vmatprep.subr.mxu0 %v1274
    %1583 = vmatpush1.msra.mxu0 %v1273
    %1584 = vmatprep.subr.mxu0 %v1278
    %1585 = vmatpush1.msra.mxu0 %v1277
    %1586 = vmatprep.subr.mxu0 %v1282
    %1587 = vmatpush1.msra.mxu0 %v1281
    %1588 = vmatprep.subr.mxu0 %v1286
    %1589 = vmatpush1.msra.mxu0 %v1285
    %1590 = vmatprep.subr.mxu0 %v1290
    %1591 = vmatpush1.msra.mxu0 %v1289
    %1592 = vmatprep.subr.mxu0 %v1294
    %1593 = vmatpush1.msra.mxu0 %v1293
    %1594 = vmatprep.mubr.f32.mxu0 %v1038
    %1595 = vmatmul.mubr.f32.gmra.mrb[0].mxu0 %v1037
    %v1596 = vpop.f32.mrb[0].mxu0
    %v1597 = vadd.f32 %v1526, %v1596
    %v1598 = vpop.f32.mrb[0].mxu0
    %v1599 = vadd.f32 %v1528, %v1598
    %1600 = vdwg.mxu0
    %v1601 = vmul.f32 %v1455, 0.01
    %v1602 = vmul.f32 %v1457, 0.01
    %v1603 = vmul.f32 %v1597, 0.01
    %v1604 = vmul.f32 %v1599, 0.01
    %v1605 = vmax.f32 %v1455, %v1601
    %v1606 = vmax.f32 %v1457, %v1602
    %v1607 = vmax.f32 %v1597, %v1603
    %v1608 = vmax.f32 %v1599, %v1604
    %v1609 = vld [vmem:[%s11] sm:$0xff]
    %v1610 = vld [vmem:[%s11 + $0x8] sm:$0xff]
    %v1611 = vld [vmem:[%s11 + $0x10] sm:$0xff]
    %v1612 = vld [vmem:[%s11 + $0x18] sm:$0xff]
    %v1613 = vld [vmem:[%s11 + $0x20] sm:$0xff]
    %v1614 = vld [vmem:[%s11 + $0x28] sm:$0xff]
    %v1615 = vld [vmem:[%s11 + $0x30] sm:$0xff]
    %v1616 = vld [vmem:[%s11 + $0x38] sm:$0xff]
    %v1617 = vld [vmem:[%s11 + $0x40] sm:$0xff]
    %v1618 = vld [vmem:[%s11 + $0x48] sm:$0xff]
    %v1619 = vld [vmem:[%s11 + $0x50] sm:$0xff]
    %v1620 = vld [vmem:[%s11 + $0x58] sm:$0xff]
    %v1621 = vld [vmem:[%s11 + $0x60] sm:$0xff]
    %v1622 = vld [vmem:[%s11 + $0x68] sm:$0xff]
    %v1623 = vld [vmem:[%s11 + $0x70] sm:$0xff]
    %v1624 = vld [vmem:[%s11 + $0x78] sm:$0xff]
    %v1625 = vld [vmem:[%s11 + $0x80] sm:$0xff]
    %v1626 = vld [vmem:[%s11 + $0x88] sm:$0xff]
    %v1627 = vld [vmem:[%s11 + $0x90] sm:$0xff]
    %v1628 = vld [vmem:[%s11 + $0x98] sm:$0xff]
    %v1629 = vld [vmem:[%s11 + $0xa0] sm:$0xff]
    %v1630 = vld [vmem:[%s11 + $0xa8] sm:$0xff]
    %v1631 = vld [vmem:[%s11 + $0xb0] sm:$0xff]
    %v1632 = vld [vmem:[%s11 + $0xb8] sm:$0xff]
    %v1633 = vld [vmem:[%s11 + $0xc0] sm:$0xff]
    %v1634 = vld [vmem:[%s11 + $0xc8] sm:$0xff]
    %v1635 = vld [vmem:[%s11 + $0xd0] sm:$0xff]
    %v1636 = vld [vmem:[%s11 + $0xd8] sm:$0xff]
    %v1637 = vld [vmem:[%s11 + $0xe0] sm:$0xff]
    %v1638 = vld [vmem:[%s11 + $0xe8] sm:$0xff]
    %v1639 = vld [vmem:[%s11 + $0xf0] sm:$0xff]
    %v1640 = vld [vmem:[%s11 + $0xf8] sm:$0xff]
    %v1641 = vld [vmem:[%s11 + $0x100] sm:$0xff]
    %v1642 = vld [vmem:[%s11 + $0x108] sm:$0xff]
    %v1643 = vld [vmem:[%s11 + $0x110] sm:$0xff]
    %v1644 = vld [vmem:[%s11 + $0x118] sm:$0xff]
    %v1645 = vld [vmem:[%s11 + $0x120] sm:$0xff]
    %v1646 = vld [vmem:[%s11 + $0x128] sm:$0xff]
    %v1647 = vld [vmem:[%s11 + $0x130] sm:$0xff]
    %v1648 = vld [vmem:[%s11 + $0x138] sm:$0xff]
    %v1649 = vld [vmem:[%s11 + $0x140] sm:$0xff]
    %v1650 = vld [vmem:[%s11 + $0x148] sm:$0xff]
    %v1651 = vld [vmem:[%s11 + $0x150] sm:$0xff]
    %v1652 = vld [vmem:[%s11 + $0x158] sm:$0xff]
    %v1653 = vld [vmem:[%s11 + $0x160] sm:$0xff]
    %v1654 = vld [vmem:[%s11 + $0x168] sm:$0xff]
    %v1655 = vld [vmem:[%s11 + $0x170] sm:$0xff]
    %v1656 = vld [vmem:[%s11 + $0x178] sm:$0xff]
    %v1657 = vld [vmem:[%s11 + $0x180] sm:$0xff]
    %v1658 = vld [vmem:[%s11 + $0x188] sm:$0xff]
    %v1659 = vld [vmem:[%s11 + $0x190] sm:$0xff]
    %v1660 = vld [vmem:[%s11 + $0x198] sm:$0xff]
    %v1661 = vld [vmem:[%s11 + $0x1a0] sm:$0xff]
    %v1662 = vld [vmem:[%s11 + $0x1a8] sm:$0xff]
    %v1663 = vld [vmem:[%s11 + $0x1b0] sm:$0xff]
    %v1664 = vld [vmem:[%s11 + $0x1b8] sm:$0xff]
    %v1665 = vld [vmem:[%s11 + $0x1c0] sm:$0xff]
    %v1666 = vld [vmem:[%s11 + $0x1c8] sm:$0xff]
    %v1667 = vld [vmem:[%s11 + $0x1d0] sm:$0xff]
    %v1668 = vld [vmem:[%s11 + $0x1d8] sm:$0xff]
    %v1669 = vld [vmem:[%s11 + $0x1e0] sm:$0xff]
    %v1670 = vld [vmem:[%s11 + $0x1e8] sm:$0xff]
    %v1671 = vld [vmem:[%s11 + $0x1f0] sm:$0xff]
    %v1672 = vld [vmem:[%s11 + $0x1f8] sm:$0xff]
    %v1673 = vld [vmem:[%s11 + $0x200] sm:$0xff]
    %v1674 = vld [vmem:[%s11 + $0x208] sm:$0xff]
    %v1675 = vld [vmem:[%s11 + $0x210] sm:$0xff]
    %v1676 = vld [vmem:[%s11 + $0x218] sm:$0xff]
    %v1677 = vld [vmem:[%s11 + $0x220] sm:$0xff]
    %v1678 = vld [vmem:[%s11 + $0x228] sm:$0xff]
    %v1679 = vld [vmem:[%s11 + $0x230] sm:$0xff]
    %v1680 = vld [vmem:[%s11 + $0x238] sm:$0xff]
    %v1681 = vld [vmem:[%s11 + $0x240] sm:$0xff]
    %v1682 = vld [vmem:[%s11 + $0x248] sm:$0xff]
    %v1683 = vld [vmem:[%s11 + $0x250] sm:$0xff]
    %v1684 = vld [vmem:[%s11 + $0x258] sm:$0xff]
    %v1685 = vld [vmem:[%s11 + $0x260] sm:$0xff]
    %v1686 = vld [vmem:[%s11 + $0x268] sm:$0xff]
    %v1687 = vld [vmem:[%s11 + $0x270] sm:$0xff]
    %v1688 = vld [vmem:[%s11 + $0x278] sm:$0xff]
    %v1689 = vld [vmem:[%s11 + $0x280] sm:$0xff]
    %v1690 = vld [vmem:[%s11 + $0x288] sm:$0xff]
    %v1691 = vld [vmem:[%s11 + $0x290] sm:$0xff]
    %v1692 = vld [vmem:[%s11 + $0x298] sm:$0xff]
    %v1693 = vld [vmem:[%s11 + $0x2a0] sm:$0xff]
    %v1694 = vld [vmem:[%s11 + $0x2a8] sm:$0xff]
    %v1695 = vld [vmem:[%s11 + $0x2b0] sm:$0xff]
    %v1696 = vld [vmem:[%s11 + $0x2b8] sm:$0xff]
    %v1697 = vld [vmem:[%s11 + $0x2c0] sm:$0xff]
    %v1698 = vld [vmem:[%s11 + $0x2c8] sm:$0xff]
    %v1699 = vld [vmem:[%s11 + $0x2d0] sm:$0xff]
    %v1700 = vld [vmem:[%s11 + $0x2d8] sm:$0xff]
    %v1701 = vld [vmem:[%s11 + $0x2e0] sm:$0xff]
    %v1702 = vld [vmem:[%s11 + $0x2e8] sm:$0xff]
    %v1703 = vld [vmem:[%s11 + $0x2f0] sm:$0xff]
    %v1704 = vld [vmem:[%s11 + $0x2f8] sm:$0xff]
    %v1705 = vld [vmem:[%s11 + $0x300] sm:$0xff]
    %v1706 = vld [vmem:[%s11 + $0x308] sm:$0xff]
    %v1707 = vld [vmem:[%s11 + $0x310] sm:$0xff]
    %v1708 = vld [vmem:[%s11 + $0x318] sm:$0xff]
    %v1709 = vld [vmem:[%s11 + $0x320] sm:$0xff]
    %v1710 = vld [vmem:[%s11 + $0x328] sm:$0xff]
    %v1711 = vld [vmem:[%s11 + $0x330] sm:$0xff]
    %v1712 = vld [vmem:[%s11 + $0x338] sm:$0xff]
    %v1713 = vld [vmem:[%s11 + $0x340] sm:$0xff]
    %v1714 = vld [vmem:[%s11 + $0x348] sm:$0xff]
    %v1715 = vld [vmem:[%s11 + $0x350] sm:$0xff]
    %v1716 = vld [vmem:[%s11 + $0x358] sm:$0xff]
    %v1717 = vld [vmem:[%s11 + $0x360] sm:$0xff]
    %v1718 = vld [vmem:[%s11 + $0x368] sm:$0xff]
    %v1719 = vld [vmem:[%s11 + $0x370] sm:$0xff]
    %v1720 = vld [vmem:[%s11 + $0x378] sm:$0xff]
    %v1721 = vld [vmem:[%s11 + $0x380] sm:$0xff]
    %v1722 = vld [vmem:[%s11 + $0x388] sm:$0xff]
    %v1723 = vld [vmem:[%s11 + $0x390] sm:$0xff]
    %v1724 = vld [vmem:[%s11 + $0x398] sm:$0xff]
    %v1725 = vld [vmem:[%s11 + $0x3a0] sm:$0xff]
    %v1726 = vld [vmem:[%s11 + $0x3a8] sm:$0xff]
    %v1727 = vld [vmem:[%s11 + $0x3b0] sm:$0xff]
    %v1728 = vld [vmem:[%s11 + $0x3b8] sm:$0xff]
    %v1729 = vld [vmem:[%s11 + $0x3c0] sm:$0xff]
    %v1730 = vld [vmem:[%s11 + $0x3c8] sm:$0xff]
    %v1731 = vld [vmem:[%s11 + $0x3d0] sm:$0xff]
    %v1732 = vld [vmem:[%s11 + $0x3d8] sm:$0xff]
    %v1733 = vld [vmem:[%s11 + $0x3e0] sm:$0xff]
    %v1734 = vld [vmem:[%s11 + $0x3e8] sm:$0xff]
    %v1735 = vld [vmem:[%s11 + $0x3f0] sm:$0xff]
    %v1736 = vld [vmem:[%s11 + $0x3f8] sm:$0xff]
    %v1737 = vld [vmem:[%s11 + $0x400] sm:$0xff]
    %v1738 = vld [vmem:[%s11 + $0x408] sm:$0xff]
    %v1739 = vld [vmem:[%s11 + $0x410] sm:$0xff]
    %v1740 = vld [vmem:[%s11 + $0x418] sm:$0xff]
    %v1741 = vld [vmem:[%s11 + $0x420] sm:$0xff]
    %v1742 = vld [vmem:[%s11 + $0x428] sm:$0xff]
    %v1743 = vld [vmem:[%s11 + $0x430] sm:$0xff]
    %v1744 = vld [vmem:[%s11 + $0x438] sm:$0xff]
    %v1745 = vld [vmem:[%s11 + $0x440] sm:$0xff]
    %v1746 = vld [vmem:[%s11 + $0x448] sm:$0xff]
    %v1747 = vld [vmem:[%s11 + $0x450] sm:$0xff]
    %v1748 = vld [vmem:[%s11 + $0x458] sm:$0xff]
    %v1749 = vld [vmem:[%s11 + $0x460] sm:$0xff]
    %v1750 = vld [vmem:[%s11 + $0x468] sm:$0xff]
    %v1751 = vld [vmem:[%s11 + $0x470] sm:$0xff]
    %v1752 = vld [vmem:[%s11 + $0x478] sm:$0xff]
    %v1753 = vld [vmem:[%s11 + $0x480] sm:$0xff]
    %v1754 = vld [vmem:[%s11 + $0x488] sm:$0xff]
    %v1755 = vld [vmem:[%s11 + $0x490] sm:$0xff]
    %v1756 = vld [vmem:[%s11 + $0x498] sm:$0xff]
    %v1757 = vld [vmem:[%s11 + $0x4a0] sm:$0xff]
    %v1758 = vld [vmem:[%s11 + $0x4a8] sm:$0xff]
    %v1759 = vld [vmem:[%s11 + $0x4b0] sm:$0xff]
    %v1760 = vld [vmem:[%s11 + $0x4b8] sm:$0xff]
    %v1761 = vld [vmem:[%s11 + $0x4c0] sm:$0xff]
    %v1762 = vld [vmem:[%s11 + $0x4c8] sm:$0xff]
    %v1763 = vld [vmem:[%s11 + $0x4d0] sm:$0xff]
    %v1764 = vld [vmem:[%s11 + $0x4d8] sm:$0xff]
    %v1765 = vld [vmem:[%s11 + $0x4e0] sm:$0xff]
    %v1766 = vld [vmem:[%s11 + $0x4e8] sm:$0xff]
    %v1767 = vld [vmem:[%s11 + $0x4f0] sm:$0xff]
    %v1768 = vld [vmem:[%s11 + $0x4f8] sm:$0xff]
    %v1769 = vld [vmem:[%s11 + $0x500] sm:$0xff]
    %v1770 = vld [vmem:[%s11 + $0x508] sm:$0xff]
    %v1771 = vld [vmem:[%s11 + $0x510] sm:$0xff]
    %v1772 = vld [vmem:[%s11 + $0x518] sm:$0xff]
    %v1773 = vld [vmem:[%s11 + $0x520] sm:$0xff]
    %v1774 = vld [vmem:[%s11 + $0x528] sm:$0xff]
    %v1775 = vld [vmem:[%s11 + $0x530] sm:$0xff]
    %v1776 = vld [vmem:[%s11 + $0x538] sm:$0xff]
    %v1777 = vld [vmem:[%s11 + $0x540] sm:$0xff]
    %v1778 = vld [vmem:[%s11 + $0x548] sm:$0xff]
    %v1779 = vld [vmem:[%s11 + $0x550] sm:$0xff]
    %v1780 = vld [vmem:[%s11 + $0x558] sm:$0xff]
    %v1781 = vld [vmem:[%s11 + $0x560] sm:$0xff]
    %v1782 = vld [vmem:[%s11 + $0x568] sm:$0xff]
    %v1783 = vld [vmem:[%s11 + $0x570] sm:$0xff]
    %v1784 = vld [vmem:[%s11 + $0x578] sm:$0xff]
    %v1785 = vld [vmem:[%s11 + $0x580] sm:$0xff]
    %v1786 = vld [vmem:[%s11 + $0x588] sm:$0xff]
    %v1787 = vld [vmem:[%s11 + $0x590] sm:$0xff]
    %v1788 = vld [vmem:[%s11 + $0x598] sm:$0xff]
    %v1789 = vld [vmem:[%s11 + $0x5a0] sm:$0xff]
    %v1790 = vld [vmem:[%s11 + $0x5a8] sm:$0xff]
    %v1791 = vld [vmem:[%s11 + $0x5b0] sm:$0xff]
    %v1792 = vld [vmem:[%s11 + $0x5b8] sm:$0xff]
    %v1793 = vld [vmem:[%s11 + $0x5c0] sm:$0xff]
    %v1794 = vld [vmem:[%s11 + $0x5c8] sm:$0xff]
    %v1795 = vld [vmem:[%s11 + $0x5d0] sm:$0xff]
    %v1796 = vld [vmem:[%s11 + $0x5d8] sm:$0xff]
    %v1797 = vld [vmem:[%s11 + $0x5e0] sm:$0xff]
    %v1798 = vld [vmem:[%s11 + $0x5e8] sm:$0xff]
    %v1799 = vld [vmem:[%s11 + $0x5f0] sm:$0xff]
    %v1800 = vld [vmem:[%s11 + $0x5f8] sm:$0xff]
    %v1801 = vld [vmem:[%s11 + $0x600] sm:$0xff]
    %v1802 = vld [vmem:[%s11 + $0x608] sm:$0xff]
    %v1803 = vld [vmem:[%s11 + $0x610] sm:$0xff]
    %v1804 = vld [vmem:[%s11 + $0x618] sm:$0xff]
    %v1805 = vld [vmem:[%s11 + $0x620] sm:$0xff]
    %v1806 = vld [vmem:[%s11 + $0x628] sm:$0xff]
    %v1807 = vld [vmem:[%s11 + $0x630] sm:$0xff]
    %v1808 = vld [vmem:[%s11 + $0x638] sm:$0xff]
    %v1809 = vld [vmem:[%s11 + $0x640] sm:$0xff]
    %v1810 = vld [vmem:[%s11 + $0x648] sm:$0xff]
    %v1811 = vld [vmem:[%s11 + $0x650] sm:$0xff]
    %v1812 = vld [vmem:[%s11 + $0x658] sm:$0xff]
    %v1813 = vld [vmem:[%s11 + $0x660] sm:$0xff]
    %v1814 = vld [vmem:[%s11 + $0x668] sm:$0xff]
    %v1815 = vld [vmem:[%s11 + $0x670] sm:$0xff]
    %v1816 = vld [vmem:[%s11 + $0x678] sm:$0xff]
    %v1817 = vld [vmem:[%s11 + $0x680] sm:$0xff]
    %v1818 = vld [vmem:[%s11 + $0x688] sm:$0xff]
    %v1819 = vld [vmem:[%s11 + $0x690] sm:$0xff]
    %v1820 = vld [vmem:[%s11 + $0x698] sm:$0xff]
    %v1821 = vld [vmem:[%s11 + $0x6a0] sm:$0xff]
    %v1822 = vld [vmem:[%s11 + $0x6a8] sm:$0xff]
    %v1823 = vld [vmem:[%s11 + $0x6b0] sm:$0xff]
    %v1824 = vld [vmem:[%s11 + $0x6b8] sm:$0xff]
    %v1825 = vld [vmem:[%s11 + $0x6c0] sm:$0xff]
    %v1826 = vld [vmem:[%s11 + $0x6c8] sm:$0xff]
    %v1827 = vld [vmem:[%s11 + $0x6d0] sm:$0xff]
    %v1828 = vld [vmem:[%s11 + $0x6d8] sm:$0xff]
    %v1829 = vld [vmem:[%s11 + $0x6e0] sm:$0xff]
    %v1830 = vld [vmem:[%s11 + $0x6e8] sm:$0xff]
    %v1831 = vld [vmem:[%s11 + $0x6f0] sm:$0xff]
    %v1832 = vld [vmem:[%s11 + $0x6f8] sm:$0xff]
    %v1833 = vld [vmem:[%s11 + $0x700] sm:$0xff]
    %v1834 = vld [vmem:[%s11 + $0x708] sm:$0xff]
    %v1835 = vld [vmem:[%s11 + $0x710] sm:$0xff]
    %v1836 = vld [vmem:[%s11 + $0x718] sm:$0xff]
    %v1837 = vld [vmem:[%s11 + $0x720] sm:$0xff]
    %v1838 = vld [vmem:[%s11 + $0x728] sm:$0xff]
    %v1839 = vld [vmem:[%s11 + $0x730] sm:$0xff]
    %v1840 = vld [vmem:[%s11 + $0x738] sm:$0xff]
    %v1841 = vld [vmem:[%s11 + $0x740] sm:$0xff]
    %v1842 = vld [vmem:[%s11 + $0x748] sm:$0xff]
    %v1843 = vld [vmem:[%s11 + $0x750] sm:$0xff]
    %v1844 = vld [vmem:[%s11 + $0x758] sm:$0xff]
    %v1845 = vld [vmem:[%s11 + $0x760] sm:$0xff]
    %v1846 = vld [vmem:[%s11 + $0x768] sm:$0xff]
    %v1847 = vld [vmem:[%s11 + $0x770] sm:$0xff]
    %v1848 = vld [vmem:[%s11 + $0x778] sm:$0xff]
    %v1849 = vld [vmem:[%s11 + $0x780] sm:$0xff]
    %v1850 = vld [vmem:[%s11 + $0x788] sm:$0xff]
    %v1851 = vld [vmem:[%s11 + $0x790] sm:$0xff]
    %v1852 = vld [vmem:[%s11 + $0x798] sm:$0xff]
    %v1853 = vld [vmem:[%s11 + $0x7a0] sm:$0xff]
    %v1854 = vld [vmem:[%s11 + $0x7a8] sm:$0xff]
    %v1855 = vld [vmem:[%s11 + $0x7b0] sm:$0xff]
    %v1856 = vld [vmem:[%s11 + $0x7b8] sm:$0xff]
    %v1857 = vld [vmem:[%s11 + $0x7c0] sm:$0xff]
    %v1858 = vld [vmem:[%s11 + $0x7c8] sm:$0xff]
    %v1859 = vld [vmem:[%s11 + $0x7d0] sm:$0xff]
    %v1860 = vld [vmem:[%s11 + $0x7d8] sm:$0xff]
    %v1861 = vld [vmem:[%s11 + $0x7e0] sm:$0xff]
    %v1862 = vld [vmem:[%s11 + $0x7e8] sm:$0xff]
    %v1863 = vld [vmem:[%s11 + $0x7f0] sm:$0xff]
    %v1864 = vld [vmem:[%s11 + $0x7f8] sm:$0xff]
    %v1865 = vld [vmem:[%s11 + $0x800] sm:$0xff]
    %v1866 = vld [vmem:[%s11 + $0x808] sm:$0xff]
    %v1867 = vld [vmem:[%s11 + $0x810] sm:$0xff]
    %v1868 = vld [vmem:[%s11 + $0x818] sm:$0xff]
    %v1869 = vld [vmem:[%s11 + $0x820] sm:$0xff]
    %v1870 = vld [vmem:[%s11 + $0x828] sm:$0xff]
    %v1871 = vld [vmem:[%s11 + $0x830] sm:$0xff]
    %v1872 = vld [vmem:[%s11 + $0x838] sm:$0xff]
    %v1873 = vld [vmem:[%s11 + $0x840] sm:$0xff]
    %v1874 = vld [vmem:[%s11 + $0x848] sm:$0xff]
    %v1875 = vld [vmem:[%s11 + $0x850] sm:$0xff]
    %v1876 = vld [vmem:[%s11 + $0x858] sm:$0xff]
    %v1877 = vld [vmem:[%s11 + $0x860] sm:$0xff]
    %v1878 = vld [vmem:[%s11 + $0x868] sm:$0xff]
    %v1879 = vld [vmem:[%s11 + $0x870] sm:$0xff]
    %v1880 = vld [vmem:[%s11 + $0x878] sm:$0xff]
    %v1881 = vld [vmem:[%s11 + $0x880] sm:$0xff]
    %v1882 = vld [vmem:[%s11 + $0x888] sm:$0xff]
    %v1883 = vld [vmem:[%s11 + $0x890] sm:$0xff]
    %v1884 = vld [vmem:[%s11 + $0x898] sm:$0xff]
    %v1885 = vld [vmem:[%s11 + $0x8a0] sm:$0xff]
    %v1886 = vld [vmem:[%s11 + $0x8a8] sm:$0xff]
    %v1887 = vld [vmem:[%s11 + $0x8b0] sm:$0xff]
    %v1888 = vld [vmem:[%s11 + $0x8b8] sm:$0xff]
    %v1889 = vld [vmem:[%s11 + $0x8c0] sm:$0xff]
    %v1890 = vld [vmem:[%s11 + $0x8c8] sm:$0xff]
    %v1891 = vld [vmem:[%s11 + $0x8d0] sm:$0xff]
    %v1892 = vld [vmem:[%s11 + $0x8d8] sm:$0xff]
    %v1893 = vld [vmem:[%s11 + $0x8e0] sm:$0xff]
    %v1894 = vld [vmem:[%s11 + $0x8e8] sm:$0xff]
    %v1895 = vld [vmem:[%s11 + $0x8f0] sm:$0xff]
    %v1896 = vld [vmem:[%s11 + $0x8f8] sm:$0xff]
    %v1897 = vld [vmem:[%s11 + $0x900] sm:$0xff]
    %v1898 = vld [vmem:[%s11 + $0x908] sm:$0xff]
    %v1899 = vld [vmem:[%s11 + $0x910] sm:$0xff]
    %v1900 = vld [vmem:[%s11 + $0x918] sm:$0xff]
    %v1901 = vld [vmem:[%s11 + $0x920] sm:$0xff]
    %v1902 = vld [vmem:[%s11 + $0x928] sm:$0xff]
    %v1903 = vld [vmem:[%s11 + $0x930] sm:$0xff]
    %v1904 = vld [vmem:[%s11 + $0x938] sm:$0xff]
    %v1905 = vld [vmem:[%s11 + $0x940] sm:$0xff]
    %v1906 = vld [vmem:[%s11 + $0x948] sm:$0xff]
    %v1907 = vld [vmem:[%s11 + $0x950] sm:$0xff]
    %v1908 = vld [vmem:[%s11 + $0x958] sm:$0xff]
    %v1909 = vld [vmem:[%s11 + $0x960] sm:$0xff]
    %v1910 = vld [vmem:[%s11 + $0x968] sm:$0xff]
    %v1911 = vld [vmem:[%s11 + $0x970] sm:$0xff]
    %v1912 = vld [vmem:[%s11 + $0x978] sm:$0xff]
    %v1913 = vld [vmem:[%s11 + $0x980] sm:$0xff]
    %v1914 = vld [vmem:[%s11 + $0x988] sm:$0xff]
    %v1915 = vld [vmem:[%s11 + $0x990] sm:$0xff]
    %v1916 = vld [vmem:[%s11 + $0x998] sm:$0xff]
    %v1917 = vld [vmem:[%s11 + $0x9a0] sm:$0xff]
    %v1918 = vld [vmem:[%s11 + $0x9a8] sm:$0xff]
    %v1919 = vld [vmem:[%s11 + $0x9b0] sm:$0xff]
    %v1920 = vld [vmem:[%s11 + $0x9b8] sm:$0xff]
    %v1921 = vld [vmem:[%s11 + $0x9c0] sm:$0xff]
    %v1922 = vld [vmem:[%s11 + $0x9c8] sm:$0xff]
    %v1923 = vld [vmem:[%s11 + $0x9d0] sm:$0xff]
    %v1924 = vld [vmem:[%s11 + $0x9d8] sm:$0xff]
    %v1925 = vld [vmem:[%s11 + $0x9e0] sm:$0xff]
    %v1926 = vld [vmem:[%s11 + $0x9e8] sm:$0xff]
    %v1927 = vld [vmem:[%s11 + $0x9f0] sm:$0xff]
    %v1928 = vld [vmem:[%s11 + $0x9f8] sm:$0xff]
    %v1929 = vld [vmem:[%s12] sm:$0x1f]
    %v1931 = vlaneseq
    %v1932 = vshrl.u32 %v1931, 7
    %v1933 = vsub.s32 0, %v1932
    %v1934 = vrot.slane %v1929, %v1933
    %v1935 = vlaneseq
    %v1936 = vshrl.u32 %v1935, 7
    %v1937 = vsub.s32 1, %v1936
    %v1938 = vrot.slane %v1929, %v1937
    %v1939 = vlaneseq
    %v1940 = vshrl.u32 %v1939, 7
    %v1941 = vsub.s32 2, %v1940
    %v1942 = vrot.slane %v1929, %v1941
    %v1943 = vlaneseq
    %v1944 = vshrl.u32 %v1943, 7
    %v1945 = vsub.s32 3, %v1944
    %v1946 = vrot.slane %v1929, %v1945
    %v1947 = vlaneseq
    %v1948 = vshrl.u32 %v1947, 7
    %v1949 = vsub.s32 4, %v1948
    %v1950 = vrot.slane %v1929, %v1949
    %1956 = vmatprep.subr.mxu0 %v1610
    %1957 = vmatpush1.msra.mxu0 %v1609
    %1958 = vmatprep.subr.mxu0 %v1615
    %1959 = vmatpush1.msra.mxu0 %v1614
    %1960 = vmatprep.subr.mxu0 %v1620
    %1961 = vmatpush1.msra.mxu0 %v1619
    %1962 = vmatprep.subr.mxu0 %v1625
    %1963 = vmatpush1.msra.mxu0 %v1624
    %1964 = vmatprep.subr.mxu0 %v1630
    %1965 = vmatpush1.msra.mxu0 %v1629
    %1966 = vmatprep.subr.mxu0 %v1635
    %1967 = vmatpush1.msra.mxu0 %v1634
    %1968 = vmatprep.subr.mxu0 %v1640
    %1969 = vmatpush1.msra.mxu0 %v1639
    %1970 = vmatprep.subr.mxu0 %v1645
    %1971 = vmatpush1.msra.mxu0 %v1644
    %1972 = vmatprep.subr.mxu0 %v1650
    %1973 = vmatpush1.msra.mxu0 %v1649
    %1974 = vmatprep.subr.mxu0 %v1655
    %1975 = vmatpush1.msra.mxu0 %v1654
    %1976 = vmatprep.subr.mxu0 %v1660
    %1977 = vmatpush1.msra.mxu0 %v1659
    %1978 = vmatprep.subr.mxu0 %v1665
    %1979 = vmatpush1.msra.mxu0 %v1664
    %1980 = vmatprep.subr.mxu0 %v1670
    %1981 = vmatpush1.msra.mxu0 %v1669
    %1982 = vmatprep.subr.mxu0 %v1675
    %1983 = vmatpush1.msra.mxu0 %v1674
    %1984 = vmatprep.subr.mxu0 %v1680
    %1985 = vmatpush1.msra.mxu0 %v1679
    %1986 = vmatprep.subr.mxu0 %v1685
    %1987 = vmatpush1.msra.mxu0 %v1684
    %1988 = vmatprep.subr.mxu0 %v1690
    %1989 = vmatpush1.msra.mxu0 %v1689
    %1990 = vmatprep.subr.mxu0 %v1695
    %1991 = vmatpush1.msra.mxu0 %v1694
    %1992 = vmatprep.subr.mxu0 %v1700
    %1993 = vmatpush1.msra.mxu0 %v1699
    %1994 = vmatprep.subr.mxu0 %v1705
    %1995 = vmatpush1.msra.mxu0 %v1704
    %1996 = vmatprep.subr.mxu0 %v1710
    %1997 = vmatpush1.msra.mxu0 %v1709
    %1998 = vmatprep.subr.mxu0 %v1715
    %1999 = vmatpush1.msra.mxu0 %v1714
    %2000 = vmatprep.subr.mxu0 %v1720
    %2001 = vmatpush1.msra.mxu0 %v1719
    %2002 = vmatprep.subr.mxu0 %v1725
    %2003 = vmatpush1.msra.mxu0 %v1724
    %2004 = vmatprep.subr.mxu0 %v1730
    %2005 = vmatpush1.msra.mxu0 %v1729
    %2006 = vmatprep.subr.mxu0 %v1735
    %2007 = vmatpush1.msra.mxu0 %v1734
    %2008 = vmatprep.subr.mxu0 %v1740
    %2009 = vmatpush1.msra.mxu0 %v1739
    %2010 = vmatprep.subr.mxu0 %v1745
    %2011 = vmatpush1.msra.mxu0 %v1744
    %2012 = vmatprep.subr.mxu0 %v1750
    %2013 = vmatpush1.msra.mxu0 %v1749
    %2014 = vmatprep.subr.mxu0 %v1755
    %2015 = vmatpush1.msra.mxu0 %v1754
    %2016 = vmatprep.subr.mxu0 %v1760
    %2017 = vmatpush1.msra.mxu0 %v1759
    %2018 = vmatprep.subr.mxu0 %v1765
    %2019 = vmatpush1.msra.mxu0 %v1764
    %2020 = vmatprep.mubr.f32.mxu0 %v1606
    %2021 = vmatmul.mubr.f32.gmra.mrb[0].mxu0 %v1605
    %v2022 = vpop.f32.mrb[0].mxu0
    %v2023 = vadd.f32 %v1934, %v2022
    %v2024 = vpop.f32.mrb[0].mxu0
    %v2025 = vadd.f32 %v1938, %v2024
    %2026 = vdwg.mxu0
    %2027 = vmatprep.subr.mxu0 %v1770
    %2028 = vmatpush1.msra.mxu0 %v1769
    %2029 = vmatprep.subr.mxu0 %v1775
    %2030 = vmatpush1.msra.mxu0 %v1774
    %2031 = vmatprep.subr.mxu0 %v1780
    %2032 = vmatpush1.msra.mxu0 %v1779
    %2033 = vmatprep.subr.mxu0 %v1785
    %2034 = vmatpush1.msra.mxu0 %v1784
    %2035 = vmatprep.subr.mxu0 %v1790
    %2036 = vmatpush1.msra.mxu0 %v1789
    %2037 = vmatprep.subr.mxu0 %v1795
    %2038 = vmatpush1.msra.mxu0 %v1794
    %2039 = vmatprep.subr.mxu0 %v1800
    %2040 = vmatpush1.msra.mxu0 %v1799
    %2041 = vmatprep.subr.mxu0 %v1805
    %2042 = vmatpush1.msra.mxu0 %v1804
    %2043 = vmatprep.subr.mxu0 %v1810
    %2044 = vmatpush1.msra.mxu0 %v1809
    %2045 = vmatprep.subr.mxu0 %v1815
    %2046 = vmatpush1.msra.mxu0 %v1814
    %2047 = vmatprep.subr.mxu0 %v1820
    %2048 = vmatpush1.msra.mxu0 %v1819
    %2049 = vmatprep.subr.mxu0 %v1825
    %2050 = vmatpush1.msra.mxu0 %v1824
    %2051 = vmatprep.subr.mxu0 %v1830
    %2052 = vmatpush1.msra.mxu0 %v1829
    %2053 = vmatprep.subr.mxu0 %v1835
    %2054 = vmatpush1.msra.mxu0 %v1834
    %2055 = vmatprep.subr.mxu0 %v1840
    %2056 = vmatpush1.msra.mxu0 %v1839
    %2057 = vmatprep.subr.mxu0 %v1845
    %2058 = vmatpush1.msra.mxu0 %v1844
    %2059 = vmatprep.subr.mxu0 %v1850
    %2060 = vmatpush1.msra.mxu0 %v1849
    %2061 = vmatprep.subr.mxu0 %v1855
    %2062 = vmatpush1.msra.mxu0 %v1854
    %2063 = vmatprep.subr.mxu0 %v1860
    %2064 = vmatpush1.msra.mxu0 %v1859
    %2065 = vmatprep.subr.mxu0 %v1865
    %2066 = vmatpush1.msra.mxu0 %v1864
    %2067 = vmatprep.subr.mxu0 %v1870
    %2068 = vmatpush1.msra.mxu0 %v1869
    %2069 = vmatprep.subr.mxu0 %v1875
    %2070 = vmatpush1.msra.mxu0 %v1874
    %2071 = vmatprep.subr.mxu0 %v1880
    %2072 = vmatpush1.msra.mxu0 %v1879
    %2073 = vmatprep.subr.mxu0 %v1885
    %2074 = vmatpush1.msra.mxu0 %v1884
    %2075 = vmatprep.subr.mxu0 %v1890
    %2076 = vmatpush1.msra.mxu0 %v1889
    %2077 = vmatprep.subr.mxu0 %v1895
    %2078 = vmatpush1.msra.mxu0 %v1894
    %2079 = vmatprep.subr.mxu0 %v1900
    %2080 = vmatpush1.msra.mxu0 %v1899
    %2081 = vmatprep.subr.mxu0 %v1905
    %2082 = vmatpush1.msra.mxu0 %v1904
    %2083 = vmatprep.subr.mxu0 %v1910
    %2084 = vmatpush1.msra.mxu0 %v1909
    %2085 = vmatprep.subr.mxu0 %v1915
    %2086 = vmatpush1.msra.mxu0 %v1914
    %2087 = vmatprep.subr.mxu0 %v1920
    %2088 = vmatpush1.msra.mxu0 %v1919
    %2089 = vmatprep.subr.mxu0 %v1925
    %2090 = vmatpush1.msra.mxu0 %v1924
    %2091 = vmatprep.mubr.f32.mxu0 %v1608
    %2092 = vmatmul.mubr.f32.gmra.mrb[0].mxu0 %v1607
    %v2093 = vpop.f32.mrb[0].mxu0
    %v2094 = vadd.f32 %v2023, %v2093
    %v2095 = vpop.f32.mrb[0].mxu0
    %v2096 = vadd.f32 %v2025, %v2095
    %2097 = vdwg.mxu0
    %2098 = vmatprep.subr.mxu0 %v1612
    %2099 = vmatpush1.msra.mxu0 %v1611
    %2100 = vmatprep.subr.mxu0 %v1617
    %2101 = vmatpush1.msra.mxu0 %v1616
    %2102 = vmatprep.subr.mxu0 %v1622
    %2103 = vmatpush1.msra.mxu0 %v1621
    %2104 = vmatprep.subr.mxu0 %v1627
    %2105 = vmatpush1.msra.mxu0 %v1626
    %2106 = vmatprep.subr.mxu0 %v1632
    %2107 = vmatpush1.msra.mxu0 %v1631
    %2108 = vmatprep.subr.mxu0 %v1637
    %2109 = vmatpush1.msra.mxu0 %v1636
    %2110 = vmatprep.subr.mxu0 %v1642
    %2111 = vmatpush1.msra.mxu0 %v1641
    %2112 = vmatprep.subr.mxu0 %v1647
    %2113 = vmatpush1.msra.mxu0 %v1646
    %2114 = vmatprep.subr.mxu0 %v1652
    %2115 = vmatpush1.msra.mxu0 %v1651
    %2116 = vmatprep.subr.mxu0 %v1657
    %2117 = vmatpush1.msra.mxu0 %v1656
    %2118 = vmatprep.subr.mxu0 %v1662
    %2119 = vmatpush1.msra.mxu0 %v1661
    %2120 = vmatprep.subr.mxu0 %v1667
    %2121 = vmatpush1.msra.mxu0 %v1666
    %2122 = vmatprep.subr.mxu0 %v1672
    %2123 = vmatpush1.msra.mxu0 %v1671
    %2124 = vmatprep.subr.mxu0 %v1677
    %2125 = vmatpush1.msra.mxu0 %v1676
    %2126 = vmatprep.subr.mxu0 %v1682
    %2127 = vmatpush1.msra.mxu0 %v1681
    %2128 = vmatprep.subr.mxu0 %v1687
    %2129 = vmatpush1.msra.mxu0 %v1686
    %2130 = vmatprep.subr.mxu0 %v1692
    %2131 = vmatpush1.msra.mxu0 %v1691
    %2132 = vmatprep.subr.mxu0 %v1697
    %2133 = vmatpush1.msra.mxu0 %v1696
    %2134 = vmatprep.subr.mxu0 %v1702
    %2135 = vmatpush1.msra.mxu0 %v1701
    %2136 = vmatprep.subr.mxu0 %v1707
    %2137 = vmatpush1.msra.mxu0 %v1706
    %2138 = vmatprep.subr.mxu0 %v1712
    %2139 = vmatpush1.msra.mxu0 %v1711
    %2140 = vmatprep.subr.mxu0 %v1717
    %2141 = vmatpush1.msra.mxu0 %v1716
    %2142 = vmatprep.subr.mxu0 %v1722
    %2143 = vmatpush1.msra.mxu0 %v1721
    %2144 = vmatprep.subr.mxu0 %v1727
    %2145 = vmatpush1.msra.mxu0 %v1726
    %2146 = vmatprep.subr.mxu0 %v1732
    %2147 = vmatpush1.msra.mxu0 %v1731
    %2148 = vmatprep.subr.mxu0 %v1737
    %2149 = vmatpush1.msra.mxu0 %v1736
    %2150 = vmatprep.subr.mxu0 %v1742
    %2151 = vmatpush1.msra.mxu0 %v1741
    %2152 = vmatprep.subr.mxu0 %v1747
    %2153 = vmatpush1.msra.mxu0 %v1746
    %2154 = vmatprep.subr.mxu0 %v1752
    %2155 = vmatpush1.msra.mxu0 %v1751
    %2156 = vmatprep.subr.mxu0 %v1757
    %2157 = vmatpush1.msra.mxu0 %v1756
    %2158 = vmatprep.subr.mxu0 %v1762
    %2159 = vmatpush1.msra.mxu0 %v1761
    %2160 = vmatprep.subr.mxu0 %v1767
    %2161 = vmatpush1.msra.mxu0 %v1766
    %2162 = vmatprep.mubr.f32.mxu0 %v1606
    %2163 = vmatmul.mubr.f32.gmra.mrb[0].mxu0 %v1605
    %v2164 = vpop.f32.mrb[0].mxu0
    %v2165 = vadd.f32 %v1942, %v2164
    %v2166 = vpop.f32.mrb[0].mxu0
    %v2167 = vadd.f32 %v1946, %v2166
    %2168 = vdwg.mxu0
    %2169 = vmatprep.subr.mxu0 %v1772
    %2170 = vmatpush1.msra.mxu0 %v1771
    %2171 = vmatprep.subr.mxu0 %v1777
    %2172 = vmatpush1.msra.mxu0 %v1776
    %2173 = vmatprep.subr.mxu0 %v1782
    %2174 = vmatpush1.msra.mxu0 %v1781
    %2175 = vmatprep.subr.mxu0 %v1787
    %2176 = vmatpush1.msra.mxu0 %v1786
    %2177 = vmatprep.subr.mxu0 %v1792
    %2178 = vmatpush1.msra.mxu0 %v1791
    %2179 = vmatprep.subr.mxu0 %v1797
    %2180 = vmatpush1.msra.mxu0 %v1796
    %2181 = vmatprep.subr.mxu0 %v1802
    %2182 = vmatpush1.msra.mxu0 %v1801
    %2183 = vmatprep.subr.mxu0 %v1807
    %2184 = vmatpush1.msra.mxu0 %v1806
    %2185 = vmatprep.subr.mxu0 %v1812
    %2186 = vmatpush1.msra.mxu0 %v1811
    %2187 = vmatprep.subr.mxu0 %v1817
    %2188 = vmatpush1.msra.mxu0 %v1816
    %2189 = vmatprep.subr.mxu0 %v1822
    %2190 = vmatpush1.msra.mxu0 %v1821
    %2191 = vmatprep.subr.mxu0 %v1827
    %2192 = vmatpush1.msra.mxu0 %v1826
    %2193 = vmatprep.subr.mxu0 %v1832
    %2194 = vmatpush1.msra.mxu0 %v1831
    %2195 = vmatprep.subr.mxu0 %v1837
    %2196 = vmatpush1.msra.mxu0 %v1836
    %2197 = vmatprep.subr.mxu0 %v1842
    %2198 = vmatpush1.msra.mxu0 %v1841
    %2199 = vmatprep.subr.mxu0 %v1847
    %2200 = vmatpush1.msra.mxu0 %v1846
    %2201 = vmatprep.subr.mxu0 %v1852
    %2202 = vmatpush1.msra.mxu0 %v1851
    %2203 = vmatprep.subr.mxu0 %v1857
    %2204 = vmatpush1.msra.mxu0 %v1856
    %2205 = vmatprep.subr.mxu0 %v1862
    %2206 = vmatpush1.msra.mxu0 %v1861
    %2207 = vmatprep.subr.mxu0 %v1867
    %2208 = vmatpush1.msra.mxu0 %v1866
    %2209 = vmatprep.subr.mxu0 %v1872
    %2210 = vmatpush1.msra.mxu0 %v1871
    %2211 = vmatprep.subr.mxu0 %v1877
    %2212 = vmatpush1.msra.mxu0 %v1876
    %2213 = vmatprep.subr.mxu0 %v1882
    %2214 = vmatpush1.msra.mxu0 %v1881
    %2215 = vmatprep.subr.mxu0 %v1887
    %2216 = vmatpush1.msra.mxu0 %v1886
    %2217 = vmatprep.subr.mxu0 %v1892
    %2218 = vmatpush1.msra.mxu0 %v1891
    %2219 = vmatprep.subr.mxu0 %v1897
    %2220 = vmatpush1.msra.mxu0 %v1896
    %2221 = vmatprep.subr.mxu0 %v1902
    %2222 = vmatpush1.msra.mxu0 %v1901
    %2223 = vmatprep.subr.mxu0 %v1907
    %2224 = vmatpush1.msra.mxu0 %v1906
    %2225 = vmatprep.subr.mxu0 %v1912
    %2226 = vmatpush1.msra.mxu0 %v1911
    %2227 = vmatprep.subr.mxu0 %v1917
    %2228 = vmatpush1.msra.mxu0 %v1916
    %2229 = vmatprep.subr.mxu0 %v1922
    %2230 = vmatpush1.msra.mxu0 %v1921
    %2231 = vmatprep.subr.mxu0 %v1927
    %2232 = vmatpush1.msra.mxu0 %v1926
    %2233 = vmatprep.mubr.f32.mxu0 %v1608
    %2234 = vmatmul.mubr.f32.gmra.mrb[0].mxu0 %v1607
    %v2235 = vpop.f32.mrb[0].mxu0
    %v2236 = vadd.f32 %v2165, %v2235
    %v2237 = vpop.f32.mrb[0].mxu0
    %v2238 = vadd.f32 %v2167, %v2237
    %2239 = vdwg.mxu0
    %2240 = vmatprep.subr.mxu0 0.0
    %2241 = vmatpush1.msra.mxu0 %v1613
    %2242 = vmatprep.subr.mxu0 0.0
    %2243 = vmatpush1.msra.mxu0 %v1618
    %2244 = vmatprep.subr.mxu0 0.0
    %2245 = vmatpush1.msra.mxu0 %v1623
    %2246 = vmatprep.subr.mxu0 0.0
    %2247 = vmatpush1.msra.mxu0 %v1628
    %2248 = vmatprep.subr.mxu0 0.0
    %2249 = vmatpush1.msra.mxu0 %v1633
    %2250 = vmatprep.subr.mxu0 0.0
    %2251 = vmatpush1.msra.mxu0 %v1638
    %2252 = vmatprep.subr.mxu0 0.0
    %2253 = vmatpush1.msra.mxu0 %v1643
    %2254 = vmatprep.subr.mxu0 0.0
    %2255 = vmatpush1.msra.mxu0 %v1648
    %2256 = vmatprep.subr.mxu0 0.0
    %2257 = vmatpush1.msra.mxu0 %v1653
    %2258 = vmatprep.subr.mxu0 0.0
    %2259 = vmatpush1.msra.mxu0 %v1658
    %2260 = vmatprep.subr.mxu0 0.0
    %2261 = vmatpush1.msra.mxu0 %v1663
    %2262 = vmatprep.subr.mxu0 0.0
    %2263 = vmatpush1.msra.mxu0 %v1668
    %2264 = vmatprep.subr.mxu0 0.0
    %2265 = vmatpush1.msra.mxu0 %v1673
    %2266 = vmatprep.subr.mxu0 0.0
    %2267 = vmatpush1.msra.mxu0 %v1678
    %2268 = vmatprep.subr.mxu0 0.0
    %2269 = vmatpush1.msra.mxu0 %v1683
    %2270 = vmatprep.subr.mxu0 0.0
    %2271 = vmatpush1.msra.mxu0 %v1688
    %2272 = vmatprep.subr.mxu0 0.0
    %2273 = vmatpush1.msra.mxu0 %v1693
    %2274 = vmatprep.subr.mxu0 0.0
    %2275 = vmatpush1.msra.mxu0 %v1698
    %2276 = vmatprep.subr.mxu0 0.0
    %2277 = vmatpush1.msra.mxu0 %v1703
    %2278 = vmatprep.subr.mxu0 0.0
    %2279 = vmatpush1.msra.mxu0 %v1708
    %2280 = vmatprep.subr.mxu0 0.0
    %2281 = vmatpush1.msra.mxu0 %v1713
    %2282 = vmatprep.subr.mxu0 0.0
    %2283 = vmatpush1.msra.mxu0 %v1718
    %2284 = vmatprep.subr.mxu0 0.0
    %2285 = vmatpush1.msra.mxu0 %v1723
    %2286 = vmatprep.subr.mxu0 0.0
    %2287 = vmatpush1.msra.mxu0 %v1728
    %2288 = vmatprep.subr.mxu0 0.0
    %2289 = vmatpush1.msra.mxu0 %v1733
    %2290 = vmatprep.subr.mxu0 0.0
    %2291 = vmatpush1.msra.mxu0 %v1738
    %2292 = vmatprep.subr.mxu0 0.0
    %2293 = vmatpush1.msra.mxu0 %v1743
    %2294 = vmatprep.subr.mxu0 0.0
    %2295 = vmatpush1.msra.mxu0 %v1748
    %2296 = vmatprep.subr.mxu0 0.0
    %2297 = vmatpush1.msra.mxu0 %v1753
    %2298 = vmatprep.subr.mxu0 0.0
    %2299 = vmatpush1.msra.mxu0 %v1758
    %2300 = vmatprep.subr.mxu0 0.0
    %2301 = vmatpush1.msra.mxu0 %v1763
    %2302 = vmatprep.subr.mxu0 0.0
    %2303 = vmatpush1.msra.mxu0 %v1768
    %2304 = vmatprep.mubr.f32.mxu0 %v1606
    %2305 = vmatmul.mubr.f32.gmra.mrb[0].mxu0 %v1605
    %v2306 = vpop.f32.mrb[0].mxu0
    %v2307 = vadd.f32 %v1950, %v2306
    %v2308 = vpop.f32.mrb[0].mxu0
    %2309 = vdwg.mxu0
    %2310 = vmatprep.subr.mxu0 0.0
    %2311 = vmatpush1.msra.mxu0 %v1773
    %2312 = vmatprep.subr.mxu0 0.0
    %2313 = vmatpush1.msra.mxu0 %v1778
    %2314 = vmatprep.subr.mxu0 0.0
    %2315 = vmatpush1.msra.mxu0 %v1783
    %2316 = vmatprep.subr.mxu0 0.0
    %2317 = vmatpush1.msra.mxu0 %v1788
    %2318 = vmatprep.subr.mxu0 0.0
    %2319 = vmatpush1.msra.mxu0 %v1793
    %2320 = vmatprep.subr.mxu0 0.0
    %2321 = vmatpush1.msra.mxu0 %v1798
    %2322 = vmatprep.subr.mxu0 0.0
    %2323 = vmatpush1.msra.mxu0 %v1803
    %2324 = vmatprep.subr.mxu0 0.0
    %2325 = vmatpush1.msra.mxu0 %v1808
    %2326 = vmatprep.subr.mxu0 0.0
    %2327 = vmatpush1.msra.mxu0 %v1813
    %2328 = vmatprep.subr.mxu0 0.0
    %2329 = vmatpush1.msra.mxu0 %v1818
    %2330 = vmatprep.subr.mxu0 0.0
    %2331 = vmatpush1.msra.mxu0 %v1823
    %2332 = vmatprep.subr.mxu0 0.0
    %2333 = vmatpush1.msra.mxu0 %v1828
    %2334 = vmatprep.subr.mxu0 0.0
    %2335 = vmatpush1.msra.mxu0 %v1833
    %2336 = vmatprep.subr.mxu0 0.0
    %2337 = vmatpush1.msra.mxu0 %v1838
    %2338 = vmatprep.subr.mxu0 0.0
    %2339 = vmatpush1.msra.mxu0 %v1843
    %2340 = vmatprep.subr.mxu0 0.0
    %2341 = vmatpush1.msra.mxu0 %v1848
    %2342 = vmatprep.subr.mxu0 0.0
    %2343 = vmatpush1.msra.mxu0 %v1853
    %2344 = vmatprep.subr.mxu0 0.0
    %2345 = vmatpush1.msra.mxu0 %v1858
    %2346 = vmatprep.subr.mxu0 0.0
    %2347 = vmatpush1.msra.mxu0 %v1863
    %2348 = vmatprep.subr.mxu0 0.0
    %2349 = vmatpush1.msra.mxu0 %v1868
    %2350 = vmatprep.subr.mxu0 0.0
    %2351 = vmatpush1.msra.mxu0 %v1873
    %2352 = vmatprep.subr.mxu0 0.0
    %2353 = vmatpush1.msra.mxu0 %v1878
    %2354 = vmatprep.subr.mxu0 0.0
    %2355 = vmatpush1.msra.mxu0 %v1883
    %2356 = vmatprep.subr.mxu0 0.0
    %2357 = vmatpush1.msra.mxu0 %v1888
    %2358 = vmatprep.subr.mxu0 0.0
    %2359 = vmatpush1.msra.mxu0 %v1893
    %2360 = vmatprep.subr.mxu0 0.0
    %2361 = vmatpush1.msra.mxu0 %v1898
    %2362 = vmatprep.subr.mxu0 0.0
    %2363 = vmatpush1.msra.mxu0 %v1903
    %2364 = vmatprep.subr.mxu0 0.0
    %2365 = vmatpush1.msra.mxu0 %v1908
    %2366 = vmatprep.subr.mxu0 0.0
    %2367 = vmatpush1.msra.mxu0 %v1913
    %2368 = vmatprep.subr.mxu0 0.0
    %2369 = vmatpush1.msra.mxu0 %v1918
    %2370 = vmatprep.subr.mxu0 0.0
    %2371 = vmatpush1.msra.mxu0 %v1923
    %2372 = vmatprep.subr.mxu0 0.0
    %2373 = vmatpush1.msra.mxu0 %v1928
    %2374 = vmatprep.mubr.f32.mxu0 %v1608
    %2375 = vmatmul.mubr.f32.gmra.mrb[0].mxu0 %v1607
    %v2376 = vpop.f32.mrb[0].mxu0
    %v2377 = vadd.f32 %v2307, %v2376
    %v2378 = vpop.f32.mrb[0].mxu0
    %2379 = vdwg.mxu0
    %v2380 = vmul.f32 %v2094, 0.01
    %v2381 = vmul.f32 %v2096, 0.01
    %v2382 = vmul.f32 %v2236, 0.01
    %v2383 = vmul.f32 %v2238, 0.01
    %v2384 = vmul.f32 %v2377, 0.01
    %v2385 = vmax.f32 %v2094, %v2380
    %v2386 = vmax.f32 %v2096, %v2381
    %v2387 = vmax.f32 %v2236, %v2382
    %v2388 = vmax.f32 %v2238, %v2383
    %v2389 = vmax.f32 %v2377, %v2384
    %v2390 = vld [vmem:[%s13] sm:$0xff]
    %v2391 = vld [vmem:[%s13 + $0x8] sm:$0xff]
    %v2392 = vld [vmem:[%s13 + $0x10] sm:$0xff]
    %v2393 = vld [vmem:[%s13 + $0x18] sm:$0xff]
    %v2394 = vld [vmem:[%s13 + $0x20] sm:$0xff]
    %v2395 = vld [vmem:[%s13 + $0x28] sm:$0xff]
    %v2396 = vld [vmem:[%s13 + $0x30] sm:$0xff]
    %v2397 = vld [vmem:[%s13 + $0x38] sm:$0xff]
    %v2398 = vld [vmem:[%s13 + $0x40] sm:$0xff]
    %v2399 = vld [vmem:[%s13 + $0x48] sm:$0xff]
    %v2400 = vld [vmem:[%s13 + $0x50] sm:$0xff]
    %v2401 = vld [vmem:[%s13 + $0x58] sm:$0xff]
    %v2402 = vld [vmem:[%s13 + $0x60] sm:$0xff]
    %v2403 = vld [vmem:[%s13 + $0x68] sm:$0xff]
    %v2404 = vld [vmem:[%s13 + $0x70] sm:$0xff]
    %v2405 = vld [vmem:[%s13 + $0x78] sm:$0xff]
    %v2406 = vld [vmem:[%s13 + $0x80] sm:$0xff]
    %v2407 = vld [vmem:[%s13 + $0x88] sm:$0xff]
    %v2408 = vld [vmem:[%s13 + $0x90] sm:$0xff]
    %v2409 = vld [vmem:[%s13 + $0x98] sm:$0xff]
    %v2410 = vld [vmem:[%s13 + $0xa0] sm:$0xff]
    %v2411 = vld [vmem:[%s13 + $0xa8] sm:$0xff]
    %v2412 = vld [vmem:[%s13 + $0xb0] sm:$0xff]
    %v2413 = vld [vmem:[%s13 + $0xb8] sm:$0xff]
    %v2414 = vld [vmem:[%s13 + $0xc0] sm:$0xff]
    %v2415 = vld [vmem:[%s13 + $0xc8] sm:$0xff]
    %v2416 = vld [vmem:[%s13 + $0xd0] sm:$0xff]
    %v2417 = vld [vmem:[%s13 + $0xd8] sm:$0xff]
    %v2418 = vld [vmem:[%s13 + $0xe0] sm:$0xff]
    %v2419 = vld [vmem:[%s13 + $0xe8] sm:$0xff]
    %v2420 = vld [vmem:[%s13 + $0xf0] sm:$0xff]
    %v2421 = vld [vmem:[%s13 + $0xf8] sm:$0xff]
    %v2422 = vld [vmem:[%s13 + $0x100] sm:$0xff]
    %v2423 = vld [vmem:[%s13 + $0x108] sm:$0xff]
    %v2424 = vld [vmem:[%s13 + $0x110] sm:$0xff]
    %v2425 = vld [vmem:[%s13 + $0x118] sm:$0xff]
    %v2426 = vld [vmem:[%s13 + $0x120] sm:$0xff]
    %v2427 = vld [vmem:[%s13 + $0x128] sm:$0xff]
    %v2428 = vld [vmem:[%s13 + $0x130] sm:$0xff]
    %v2429 = vld [vmem:[%s13 + $0x138] sm:$0xff]
    %v2430 = vld [vmem:[%s13 + $0x140] sm:$0xff]
    %v2431 = vld [vmem:[%s13 + $0x148] sm:$0xff]
    %v2432 = vld [vmem:[%s13 + $0x150] sm:$0xff]
    %v2433 = vld [vmem:[%s13 + $0x158] sm:$0xff]
    %v2434 = vld [vmem:[%s13 + $0x160] sm:$0xff]
    %v2435 = vld [vmem:[%s13 + $0x168] sm:$0xff]
    %v2436 = vld [vmem:[%s13 + $0x170] sm:$0xff]
    %v2437 = vld [vmem:[%s13 + $0x178] sm:$0xff]
    %v2438 = vld [vmem:[%s13 + $0x180] sm:$0xff]
    %v2439 = vld [vmem:[%s13 + $0x188] sm:$0xff]
    %v2440 = vld [vmem:[%s13 + $0x190] sm:$0xff]
    %v2441 = vld [vmem:[%s13 + $0x198] sm:$0xff]
    %v2442 = vld [vmem:[%s13 + $0x1a0] sm:$0xff]
    %v2443 = vld [vmem:[%s13 + $0x1a8] sm:$0xff]
    %v2444 = vld [vmem:[%s13 + $0x1b0] sm:$0xff]
    %v2445 = vld [vmem:[%s13 + $0x1b8] sm:$0xff]
    %v2446 = vld [vmem:[%s13 + $0x1c0] sm:$0xff]
    %v2447 = vld [vmem:[%s13 + $0x1c8] sm:$0xff]
    %v2448 = vld [vmem:[%s13 + $0x1d0] sm:$0xff]
    %v2449 = vld [vmem:[%s13 + $0x1d8] sm:$0xff]
    %v2450 = vld [vmem:[%s13 + $0x1e0] sm:$0xff]
    %v2451 = vld [vmem:[%s13 + $0x1e8] sm:$0xff]
    %v2452 = vld [vmem:[%s13 + $0x1f0] sm:$0xff]
    %v2453 = vld [vmem:[%s13 + $0x1f8] sm:$0xff]
    %v2454 = vld [vmem:[%s13 + $0x200] sm:$0xff]
    %v2455 = vld [vmem:[%s13 + $0x208] sm:$0xff]
    %v2456 = vld [vmem:[%s13 + $0x210] sm:$0xff]
    %v2457 = vld [vmem:[%s13 + $0x218] sm:$0xff]
    %v2458 = vld [vmem:[%s13 + $0x220] sm:$0xff]
    %v2459 = vld [vmem:[%s13 + $0x228] sm:$0xff]
    %v2460 = vld [vmem:[%s13 + $0x230] sm:$0xff]
    %v2461 = vld [vmem:[%s13 + $0x238] sm:$0xff]
    %v2462 = vld [vmem:[%s13 + $0x240] sm:$0xff]
    %v2463 = vld [vmem:[%s13 + $0x248] sm:$0xff]
    %v2464 = vld [vmem:[%s13 + $0x250] sm:$0xff]
    %v2465 = vld [vmem:[%s13 + $0x258] sm:$0xff]
    %v2466 = vld [vmem:[%s13 + $0x260] sm:$0xff]
    %v2467 = vld [vmem:[%s13 + $0x268] sm:$0xff]
    %v2468 = vld [vmem:[%s13 + $0x270] sm:$0xff]
    %v2469 = vld [vmem:[%s13 + $0x278] sm:$0xff]
    %v2470 = vld [vmem:[%s13 + $0x280] sm:$0xff]
    %v2471 = vld [vmem:[%s13 + $0x288] sm:$0xff]
    %v2472 = vld [vmem:[%s13 + $0x290] sm:$0xff]
    %v2473 = vld [vmem:[%s13 + $0x298] sm:$0xff]
    %v2474 = vld [vmem:[%s13 + $0x2a0] sm:$0xff]
    %v2475 = vld [vmem:[%s13 + $0x2a8] sm:$0xff]
    %v2476 = vld [vmem:[%s13 + $0x2b0] sm:$0xff]
    %v2477 = vld [vmem:[%s13 + $0x2b8] sm:$0xff]
    %v2478 = vld [vmem:[%s13 + $0x2c0] sm:$0xff]
    %v2479 = vld [vmem:[%s13 + $0x2c8] sm:$0xff]
    %v2480 = vld [vmem:[%s13 + $0x2d0] sm:$0xff]
    %v2481 = vld [vmem:[%s13 + $0x2d8] sm:$0xff]
    %v2482 = vld [vmem:[%s13 + $0x2e0] sm:$0xff]
    %v2483 = vld [vmem:[%s13 + $0x2e8] sm:$0xff]
    %v2484 = vld [vmem:[%s13 + $0x2f0] sm:$0xff]
    %v2485 = vld [vmem:[%s13 + $0x2f8] sm:$0xff]
    %v2486 = vld [vmem:[%s13 + $0x300] sm:$0xff]
    %v2487 = vld [vmem:[%s13 + $0x308] sm:$0xff]
    %v2488 = vld [vmem:[%s13 + $0x310] sm:$0xff]
    %v2489 = vld [vmem:[%s13 + $0x318] sm:$0xff]
    %v2490 = vld [vmem:[%s13 + $0x320] sm:$0xff]
    %v2491 = vld [vmem:[%s13 + $0x328] sm:$0xff]
    %v2492 = vld [vmem:[%s13 + $0x330] sm:$0xff]
    %v2493 = vld [vmem:[%s13 + $0x338] sm:$0xff]
    %v2494 = vld [vmem:[%s13 + $0x340] sm:$0xff]
    %v2495 = vld [vmem:[%s13 + $0x348] sm:$0xff]
    %v2496 = vld [vmem:[%s13 + $0x350] sm:$0xff]
    %v2497 = vld [vmem:[%s13 + $0x358] sm:$0xff]
    %v2498 = vld [vmem:[%s13 + $0x360] sm:$0xff]
    %v2499 = vld [vmem:[%s13 + $0x368] sm:$0xff]
    %v2500 = vld [vmem:[%s13 + $0x370] sm:$0xff]
    %v2501 = vld [vmem:[%s13 + $0x378] sm:$0xff]
    %v2502 = vld [vmem:[%s13 + $0x380] sm:$0xff]
    %v2503 = vld [vmem:[%s13 + $0x388] sm:$0xff]
    %v2504 = vld [vmem:[%s13 + $0x390] sm:$0xff]
    %v2505 = vld [vmem:[%s13 + $0x398] sm:$0xff]
    %v2506 = vld [vmem:[%s13 + $0x3a0] sm:$0xff]
    %v2507 = vld [vmem:[%s13 + $0x3a8] sm:$0xff]
    %v2508 = vld [vmem:[%s13 + $0x3b0] sm:$0xff]
    %v2509 = vld [vmem:[%s13 + $0x3b8] sm:$0xff]
    %v2510 = vld [vmem:[%s13 + $0x3c0] sm:$0xff]
    %v2511 = vld [vmem:[%s13 + $0x3c8] sm:$0xff]
    %v2512 = vld [vmem:[%s13 + $0x3d0] sm:$0xff]
    %v2513 = vld [vmem:[%s13 + $0x3d8] sm:$0xff]
    %v2514 = vld [vmem:[%s13 + $0x3e0] sm:$0xff]
    %v2515 = vld [vmem:[%s13 + $0x3e8] sm:$0xff]
    %v2516 = vld [vmem:[%s13 + $0x3f0] sm:$0xff]
    %v2517 = vld [vmem:[%s13 + $0x3f8] sm:$0xff]
    %v2518 = vld [vmem:[%s13 + $0x400] sm:$0xff]
    %v2519 = vld [vmem:[%s13 + $0x408] sm:$0xff]
    %v2520 = vld [vmem:[%s13 + $0x410] sm:$0xff]
    %v2521 = vld [vmem:[%s13 + $0x418] sm:$0xff]
    %v2522 = vld [vmem:[%s13 + $0x420] sm:$0xff]
    %v2523 = vld [vmem:[%s13 + $0x428] sm:$0xff]
    %v2524 = vld [vmem:[%s13 + $0x430] sm:$0xff]
    %v2525 = vld [vmem:[%s13 + $0x438] sm:$0xff]
    %v2526 = vld [vmem:[%s13 + $0x440] sm:$0xff]
    %v2527 = vld [vmem:[%s13 + $0x448] sm:$0xff]
    %v2528 = vld [vmem:[%s13 + $0x450] sm:$0xff]
    %v2529 = vld [vmem:[%s13 + $0x458] sm:$0xff]
    %v2530 = vld [vmem:[%s13 + $0x460] sm:$0xff]
    %v2531 = vld [vmem:[%s13 + $0x468] sm:$0xff]
    %v2532 = vld [vmem:[%s13 + $0x470] sm:$0xff]
    %v2533 = vld [vmem:[%s13 + $0x478] sm:$0xff]
    %v2534 = vld [vmem:[%s13 + $0x480] sm:$0xff]
    %v2535 = vld [vmem:[%s13 + $0x488] sm:$0xff]
    %v2536 = vld [vmem:[%s13 + $0x490] sm:$0xff]
    %v2537 = vld [vmem:[%s13 + $0x498] sm:$0xff]
    %v2538 = vld [vmem:[%s13 + $0x4a0] sm:$0xff]
    %v2539 = vld [vmem:[%s13 + $0x4a8] sm:$0xff]
    %v2540 = vld [vmem:[%s13 + $0x4b0] sm:$0xff]
    %v2541 = vld [vmem:[%s13 + $0x4b8] sm:$0xff]
    %v2542 = vld [vmem:[%s13 + $0x4c0] sm:$0xff]
    %v2543 = vld [vmem:[%s13 + $0x4c8] sm:$0xff]
    %v2544 = vld [vmem:[%s13 + $0x4d0] sm:$0xff]
    %v2545 = vld [vmem:[%s13 + $0x4d8] sm:$0xff]
    %v2546 = vld [vmem:[%s13 + $0x4e0] sm:$0xff]
    %v2547 = vld [vmem:[%s13 + $0x4e8] sm:$0xff]
    %v2548 = vld [vmem:[%s13 + $0x4f0] sm:$0xff]
    %v2549 = vld [vmem:[%s13 + $0x4f8] sm:$0xff]
    %v2550 = vld [vmem:[%s13 + $0x500] sm:$0xff]
    %v2551 = vld [vmem:[%s13 + $0x508] sm:$0xff]
    %v2552 = vld [vmem:[%s13 + $0x510] sm:$0xff]
    %v2553 = vld [vmem:[%s13 + $0x518] sm:$0xff]
    %v2554 = vld [vmem:[%s13 + $0x520] sm:$0xff]
    %v2555 = vld [vmem:[%s13 + $0x528] sm:$0xff]
    %v2556 = vld [vmem:[%s13 + $0x530] sm:$0xff]
    %v2557 = vld [vmem:[%s13 + $0x538] sm:$0xff]
    %v2558 = vld [vmem:[%s13 + $0x540] sm:$0xff]
    %v2559 = vld [vmem:[%s13 + $0x548] sm:$0xff]
    %v2560 = vld [vmem:[%s13 + $0x550] sm:$0xff]
    %v2561 = vld [vmem:[%s13 + $0x558] sm:$0xff]
    %v2562 = vld [vmem:[%s13 + $0x560] sm:$0xff]
    %v2563 = vld [vmem:[%s13 + $0x568] sm:$0xff]
    %v2564 = vld [vmem:[%s13 + $0x570] sm:$0xff]
    %v2565 = vld [vmem:[%s13 + $0x578] sm:$0xff]
    %v2566 = vld [vmem:[%s13 + $0x580] sm:$0xff]
    %v2567 = vld [vmem:[%s13 + $0x588] sm:$0xff]
    %v2568 = vld [vmem:[%s13 + $0x590] sm:$0xff]
    %v2569 = vld [vmem:[%s13 + $0x598] sm:$0xff]
    %v2570 = vld [vmem:[%s13 + $0x5a0] sm:$0xff]
    %v2571 = vld [vmem:[%s13 + $0x5a8] sm:$0xff]
    %v2572 = vld [vmem:[%s13 + $0x5b0] sm:$0xff]
    %v2573 = vld [vmem:[%s13 + $0x5b8] sm:$0xff]
    %v2574 = vld [vmem:[%s13 + $0x5c0] sm:$0xff]
    %v2575 = vld [vmem:[%s13 + $0x5c8] sm:$0xff]
    %v2576 = vld [vmem:[%s13 + $0x5d0] sm:$0xff]
    %v2577 = vld [vmem:[%s13 + $0x5d8] sm:$0xff]
    %v2578 = vld [vmem:[%s13 + $0x5e0] sm:$0xff]
    %v2579 = vld [vmem:[%s13 + $0x5e8] sm:$0xff]
    %v2580 = vld [vmem:[%s13 + $0x5f0] sm:$0xff]
    %v2581 = vld [vmem:[%s13 + $0x5f8] sm:$0xff]
    %v2582 = vld [vmem:[%s13 + $0x600] sm:$0xff]
    %v2583 = vld [vmem:[%s13 + $0x608] sm:$0xff]
    %v2584 = vld [vmem:[%s13 + $0x610] sm:$0xff]
    %v2585 = vld [vmem:[%s13 + $0x618] sm:$0xff]
    %v2586 = vld [vmem:[%s13 + $0x620] sm:$0xff]
    %v2587 = vld [vmem:[%s13 + $0x628] sm:$0xff]
    %v2588 = vld [vmem:[%s13 + $0x630] sm:$0xff]
    %v2589 = vld [vmem:[%s13 + $0x638] sm:$0xff]
    %v2590 = vld [vmem:[%s13 + $0x640] sm:$0xff]
    %v2591 = vld [vmem:[%s13 + $0x648] sm:$0xff]
    %v2592 = vld [vmem:[%s13 + $0x650] sm:$0xff]
    %v2593 = vld [vmem:[%s13 + $0x658] sm:$0xff]
    %v2594 = vld [vmem:[%s13 + $0x660] sm:$0xff]
    %v2595 = vld [vmem:[%s13 + $0x668] sm:$0xff]
    %v2596 = vld [vmem:[%s13 + $0x670] sm:$0xff]
    %v2597 = vld [vmem:[%s13 + $0x678] sm:$0xff]
    %v2598 = vld [vmem:[%s13 + $0x680] sm:$0xff]
    %v2599 = vld [vmem:[%s13 + $0x688] sm:$0xff]
    %v2600 = vld [vmem:[%s13 + $0x690] sm:$0xff]
    %v2601 = vld [vmem:[%s13 + $0x698] sm:$0xff]
    %v2602 = vld [vmem:[%s13 + $0x6a0] sm:$0xff]
    %v2603 = vld [vmem:[%s13 + $0x6a8] sm:$0xff]
    %v2604 = vld [vmem:[%s13 + $0x6b0] sm:$0xff]
    %v2605 = vld [vmem:[%s13 + $0x6b8] sm:$0xff]
    %v2606 = vld [vmem:[%s13 + $0x6c0] sm:$0xff]
    %v2607 = vld [vmem:[%s13 + $0x6c8] sm:$0xff]
    %v2608 = vld [vmem:[%s13 + $0x6d0] sm:$0xff]
    %v2609 = vld [vmem:[%s13 + $0x6d8] sm:$0xff]
    %v2610 = vld [vmem:[%s13 + $0x6e0] sm:$0xff]
    %v2611 = vld [vmem:[%s13 + $0x6e8] sm:$0xff]
    %v2612 = vld [vmem:[%s13 + $0x6f0] sm:$0xff]
    %v2613 = vld [vmem:[%s13 + $0x6f8] sm:$0xff]
    %v2614 = vld [vmem:[%s13 + $0x700] sm:$0xff]
    %v2615 = vld [vmem:[%s13 + $0x708] sm:$0xff]
    %v2616 = vld [vmem:[%s13 + $0x710] sm:$0xff]
    %v2617 = vld [vmem:[%s13 + $0x718] sm:$0xff]
    %v2618 = vld [vmem:[%s13 + $0x720] sm:$0xff]
    %v2619 = vld [vmem:[%s13 + $0x728] sm:$0xff]
    %v2620 = vld [vmem:[%s13 + $0x730] sm:$0xff]
    %v2621 = vld [vmem:[%s13 + $0x738] sm:$0xff]
    %v2622 = vld [vmem:[%s13 + $0x740] sm:$0xff]
    %v2623 = vld [vmem:[%s13 + $0x748] sm:$0xff]
    %v2624 = vld [vmem:[%s13 + $0x750] sm:$0xff]
    %v2625 = vld [vmem:[%s13 + $0x758] sm:$0xff]
    %v2626 = vld [vmem:[%s13 + $0x760] sm:$0xff]
    %v2627 = vld [vmem:[%s13 + $0x768] sm:$0xff]
    %v2628 = vld [vmem:[%s13 + $0x770] sm:$0xff]
    %v2629 = vld [vmem:[%s13 + $0x778] sm:$0xff]
    %v2630 = vld [vmem:[%s13 + $0x780] sm:$0xff]
    %v2631 = vld [vmem:[%s13 + $0x788] sm:$0xff]
    %v2632 = vld [vmem:[%s13 + $0x790] sm:$0xff]
    %v2633 = vld [vmem:[%s13 + $0x798] sm:$0xff]
    %v2634 = vld [vmem:[%s13 + $0x7a0] sm:$0xff]
    %v2635 = vld [vmem:[%s13 + $0x7a8] sm:$0xff]
    %v2636 = vld [vmem:[%s13 + $0x7b0] sm:$0xff]
    %v2637 = vld [vmem:[%s13 + $0x7b8] sm:$0xff]
    %v2638 = vld [vmem:[%s13 + $0x7c0] sm:$0xff]
    %v2639 = vld [vmem:[%s13 + $0x7c8] sm:$0xff]
    %v2640 = vld [vmem:[%s13 + $0x7d0] sm:$0xff]
    %v2641 = vld [vmem:[%s13 + $0x7d8] sm:$0xff]
    %v2642 = vld [vmem:[%s13 + $0x7e0] sm:$0xff]
    %v2643 = vld [vmem:[%s13 + $0x7e8] sm:$0xff]
    %v2644 = vld [vmem:[%s13 + $0x7f0] sm:$0xff]
    %v2645 = vld [vmem:[%s13 + $0x7f8] sm:$0xff]
    %v2646 = vld [vmem:[%s13 + $0x800] sm:$0xff]
    %v2647 = vld [vmem:[%s13 + $0x808] sm:$0xff]
    %v2648 = vld [vmem:[%s13 + $0x810] sm:$0xff]
    %v2649 = vld [vmem:[%s13 + $0x818] sm:$0xff]
    %v2650 = vld [vmem:[%s13 + $0x820] sm:$0xff]
    %v2651 = vld [vmem:[%s13 + $0x828] sm:$0xff]
    %v2652 = vld [vmem:[%s13 + $0x830] sm:$0xff]
    %v2653 = vld [vmem:[%s13 + $0x838] sm:$0xff]
    %v2654 = vld [vmem:[%s13 + $0x840] sm:$0xff]
    %v2655 = vld [vmem:[%s13 + $0x848] sm:$0xff]
    %v2656 = vld [vmem:[%s13 + $0x850] sm:$0xff]
    %v2657 = vld [vmem:[%s13 + $0x858] sm:$0xff]
    %v2658 = vld [vmem:[%s13 + $0x860] sm:$0xff]
    %v2659 = vld [vmem:[%s13 + $0x868] sm:$0xff]
    %v2660 = vld [vmem:[%s13 + $0x870] sm:$0xff]
    %v2661 = vld [vmem:[%s13 + $0x878] sm:$0xff]
    %v2662 = vld [vmem:[%s13 + $0x880] sm:$0xff]
    %v2663 = vld [vmem:[%s13 + $0x888] sm:$0xff]
    %v2664 = vld [vmem:[%s13 + $0x890] sm:$0xff]
    %v2665 = vld [vmem:[%s13 + $0x898] sm:$0xff]
    %v2666 = vld [vmem:[%s13 + $0x8a0] sm:$0xff]
    %v2667 = vld [vmem:[%s13 + $0x8a8] sm:$0xff]
    %v2668 = vld [vmem:[%s13 + $0x8b0] sm:$0xff]
    %v2669 = vld [vmem:[%s13 + $0x8b8] sm:$0xff]
    %v2670 = vld [vmem:[%s13 + $0x8c0] sm:$0xff]
    %v2671 = vld [vmem:[%s13 + $0x8c8] sm:$0xff]
    %v2672 = vld [vmem:[%s13 + $0x8d0] sm:$0xff]
    %v2673 = vld [vmem:[%s13 + $0x8d8] sm:$0xff]
    %v2674 = vld [vmem:[%s13 + $0x8e0] sm:$0xff]
    %v2675 = vld [vmem:[%s13 + $0x8e8] sm:$0xff]
    %v2676 = vld [vmem:[%s13 + $0x8f0] sm:$0xff]
    %v2677 = vld [vmem:[%s13 + $0x8f8] sm:$0xff]
    %v2678 = vld [vmem:[%s13 + $0x900] sm:$0xff]
    %v2679 = vld [vmem:[%s13 + $0x908] sm:$0xff]
    %v2680 = vld [vmem:[%s13 + $0x910] sm:$0xff]
    %v2681 = vld [vmem:[%s13 + $0x918] sm:$0xff]
    %v2682 = vld [vmem:[%s13 + $0x920] sm:$0xff]
    %v2683 = vld [vmem:[%s13 + $0x928] sm:$0xff]
    %v2684 = vld [vmem:[%s13 + $0x930] sm:$0xff]
    %v2685 = vld [vmem:[%s13 + $0x938] sm:$0xff]
    %v2686 = vld [vmem:[%s13 + $0x940] sm:$0xff]
    %v2687 = vld [vmem:[%s13 + $0x948] sm:$0xff]
    %v2688 = vld [vmem:[%s13 + $0x950] sm:$0xff]
    %v2689 = vld [vmem:[%s13 + $0x958] sm:$0xff]
    %v2690 = vld [vmem:[%s13 + $0x960] sm:$0xff]
    %v2691 = vld [vmem:[%s13 + $0x968] sm:$0xff]
    %v2692 = vld [vmem:[%s13 + $0x970] sm:$0xff]
    %v2693 = vld [vmem:[%s13 + $0x978] sm:$0xff]
    %v2694 = vld [vmem:[%s13 + $0x980] sm:$0xff]
    %v2695 = vld [vmem:[%s13 + $0x988] sm:$0xff]
    %v2696 = vld [vmem:[%s13 + $0x990] sm:$0xff]
    %v2697 = vld [vmem:[%s13 + $0x998] sm:$0xff]
    %v2698 = vld [vmem:[%s13 + $0x9a0] sm:$0xff]
    %v2699 = vld [vmem:[%s13 + $0x9a8] sm:$0xff]
    %v2700 = vld [vmem:[%s13 + $0x9b0] sm:$0xff]
    %v2701 = vld [vmem:[%s13 + $0x9b8] sm:$0xff]
    %v2702 = vld [vmem:[%s13 + $0x9c0] sm:$0xff]
    %v2703 = vld [vmem:[%s13 + $0x9c8] sm:$0xff]
    %v2704 = vld [vmem:[%s13 + $0x9d0] sm:$0xff]
    %v2705 = vld [vmem:[%s13 + $0x9d8] sm:$0xff]
    %v2706 = vld [vmem:[%s13 + $0x9e0] sm:$0xff]
    %v2707 = vld [vmem:[%s13 + $0x9e8] sm:$0xff]
    %v2708 = vld [vmem:[%s13 + $0x9f0] sm:$0xff]
    %v2709 = vld [vmem:[%s13 + $0x9f8] sm:$0xff]
    %v2710 = vld [vmem:[%s13 + $0xa00] sm:$0xff]
    %v2711 = vld [vmem:[%s13 + $0xa08] sm:$0xff]
    %v2712 = vld [vmem:[%s13 + $0xa10] sm:$0xff]
    %v2713 = vld [vmem:[%s13 + $0xa18] sm:$0xff]
    %v2714 = vld [vmem:[%s13 + $0xa20] sm:$0xff]
    %v2715 = vld [vmem:[%s13 + $0xa28] sm:$0xff]
    %v2716 = vld [vmem:[%s13 + $0xa30] sm:$0xff]
    %v2717 = vld [vmem:[%s13 + $0xa38] sm:$0xff]
    %v2718 = vld [vmem:[%s13 + $0xa40] sm:$0xff]
    %v2719 = vld [vmem:[%s13 + $0xa48] sm:$0xff]
    %v2720 = vld [vmem:[%s13 + $0xa50] sm:$0xff]
    %v2721 = vld [vmem:[%s13 + $0xa58] sm:$0xff]
    %v2722 = vld [vmem:[%s13 + $0xa60] sm:$0xff]
    %v2723 = vld [vmem:[%s13 + $0xa68] sm:$0xff]
    %v2724 = vld [vmem:[%s13 + $0xa70] sm:$0xff]
    %v2725 = vld [vmem:[%s13 + $0xa78] sm:$0xff]
    %v2726 = vld [vmem:[%s13 + $0xa80] sm:$0xff]
    %v2727 = vld [vmem:[%s13 + $0xa88] sm:$0xff]
    %v2728 = vld [vmem:[%s13 + $0xa90] sm:$0xff]
    %v2729 = vld [vmem:[%s13 + $0xa98] sm:$0xff]
    %v2730 = vld [vmem:[%s13 + $0xaa0] sm:$0xff]
    %v2731 = vld [vmem:[%s13 + $0xaa8] sm:$0xff]
    %v2732 = vld [vmem:[%s13 + $0xab0] sm:$0xff]
    %v2733 = vld [vmem:[%s13 + $0xab8] sm:$0xff]
    %v2734 = vld [vmem:[%s13 + $0xac0] sm:$0xff]
    %v2735 = vld [vmem:[%s13 + $0xac8] sm:$0xff]
    %v2736 = vld [vmem:[%s13 + $0xad0] sm:$0xff]
    %v2737 = vld [vmem:[%s13 + $0xad8] sm:$0xff]
    %v2738 = vld [vmem:[%s13 + $0xae0] sm:$0xff]
    %v2739 = vld [vmem:[%s13 + $0xae8] sm:$0xff]
    %v2740 = vld [vmem:[%s13 + $0xaf0] sm:$0xff]
    %v2741 = vld [vmem:[%s13 + $0xaf8] sm:$0xff]
    %v2742 = vld [vmem:[%s13 + $0xb00] sm:$0xff]
    %v2743 = vld [vmem:[%s13 + $0xb08] sm:$0xff]
    %v2744 = vld [vmem:[%s13 + $0xb10] sm:$0xff]
    %v2745 = vld [vmem:[%s13 + $0xb18] sm:$0xff]
    %v2746 = vld [vmem:[%s13 + $0xb20] sm:$0xff]
    %v2747 = vld [vmem:[%s13 + $0xb28] sm:$0xff]
    %v2748 = vld [vmem:[%s13 + $0xb30] sm:$0xff]
    %v2749 = vld [vmem:[%s13 + $0xb38] sm:$0xff]
    %v2750 = vld [vmem:[%s13 + $0xb40] sm:$0xff]
    %v2751 = vld [vmem:[%s13 + $0xb48] sm:$0xff]
    %v2752 = vld [vmem:[%s13 + $0xb50] sm:$0xff]
    %v2753 = vld [vmem:[%s13 + $0xb58] sm:$0xff]
    %v2754 = vld [vmem:[%s13 + $0xb60] sm:$0xff]
    %v2755 = vld [vmem:[%s13 + $0xb68] sm:$0xff]
    %v2756 = vld [vmem:[%s13 + $0xb70] sm:$0xff]
    %v2757 = vld [vmem:[%s13 + $0xb78] sm:$0xff]
    %v2758 = vld [vmem:[%s13 + $0xb80] sm:$0xff]
    %v2759 = vld [vmem:[%s13 + $0xb88] sm:$0xff]
    %v2760 = vld [vmem:[%s13 + $0xb90] sm:$0xff]
    %v2761 = vld [vmem:[%s13 + $0xb98] sm:$0xff]
    %v2762 = vld [vmem:[%s13 + $0xba0] sm:$0xff]
    %v2763 = vld [vmem:[%s13 + $0xba8] sm:$0xff]
    %v2764 = vld [vmem:[%s13 + $0xbb0] sm:$0xff]
    %v2765 = vld [vmem:[%s13 + $0xbb8] sm:$0xff]
    %v2766 = vld [vmem:[%s13 + $0xbc0] sm:$0xff]
    %v2767 = vld [vmem:[%s13 + $0xbc8] sm:$0xff]
    %v2768 = vld [vmem:[%s13 + $0xbd0] sm:$0xff]
    %v2769 = vld [vmem:[%s13 + $0xbd8] sm:$0xff]
    %v2770 = vld [vmem:[%s13 + $0xbe0] sm:$0xff]
    %v2771 = vld [vmem:[%s13 + $0xbe8] sm:$0xff]
    %v2772 = vld [vmem:[%s13 + $0xbf0] sm:$0xff]
    %v2773 = vld [vmem:[%s13 + $0xbf8] sm:$0xff]
    %v2774 = vld [vmem:[%s13 + $0xc00] sm:$0xff]
    %v2775 = vld [vmem:[%s13 + $0xc08] sm:$0xff]
    %v2776 = vld [vmem:[%s13 + $0xc10] sm:$0xff]
    %v2777 = vld [vmem:[%s13 + $0xc18] sm:$0xff]
    %v2778 = vld [vmem:[%s13 + $0xc20] sm:$0xff]
    %v2779 = vld [vmem:[%s13 + $0xc28] sm:$0xff]
    %v2780 = vld [vmem:[%s13 + $0xc30] sm:$0xff]
    %v2781 = vld [vmem:[%s13 + $0xc38] sm:$0xff]
    %v2782 = vld [vmem:[%s13 + $0xc40] sm:$0xff]
    %v2783 = vld [vmem:[%s13 + $0xc48] sm:$0xff]
    %v2784 = vld [vmem:[%s13 + $0xc50] sm:$0xff]
    %v2785 = vld [vmem:[%s13 + $0xc58] sm:$0xff]
    %v2786 = vld [vmem:[%s13 + $0xc60] sm:$0xff]
    %v2787 = vld [vmem:[%s13 + $0xc68] sm:$0xff]
    %v2788 = vld [vmem:[%s13 + $0xc70] sm:$0xff]
    %v2789 = vld [vmem:[%s13 + $0xc78] sm:$0xff]
    %v2790 = vld [vmem:[%s13 + $0xc80] sm:$0xff]
    %v2791 = vld [vmem:[%s13 + $0xc88] sm:$0xff]
    %v2792 = vld [vmem:[%s13 + $0xc90] sm:$0xff]
    %v2793 = vld [vmem:[%s13 + $0xc98] sm:$0xff]
    %v2794 = vld [vmem:[%s13 + $0xca0] sm:$0xff]
    %v2795 = vld [vmem:[%s13 + $0xca8] sm:$0xff]
    %v2796 = vld [vmem:[%s13 + $0xcb0] sm:$0xff]
    %v2797 = vld [vmem:[%s13 + $0xcb8] sm:$0xff]
    %v2798 = vld [vmem:[%s13 + $0xcc0] sm:$0xff]
    %v2799 = vld [vmem:[%s13 + $0xcc8] sm:$0xff]
    %v2800 = vld [vmem:[%s13 + $0xcd0] sm:$0xff]
    %v2801 = vld [vmem:[%s13 + $0xcd8] sm:$0xff]
    %v2802 = vld [vmem:[%s13 + $0xce0] sm:$0xff]
    %v2803 = vld [vmem:[%s13 + $0xce8] sm:$0xff]
    %v2804 = vld [vmem:[%s13 + $0xcf0] sm:$0xff]
    %v2805 = vld [vmem:[%s13 + $0xcf8] sm:$0xff]
    %v2806 = vld [vmem:[%s13 + $0xd00] sm:$0xff]
    %v2807 = vld [vmem:[%s13 + $0xd08] sm:$0xff]
    %v2808 = vld [vmem:[%s13 + $0xd10] sm:$0xff]
    %v2809 = vld [vmem:[%s13 + $0xd18] sm:$0xff]
    %v2810 = vld [vmem:[%s13 + $0xd20] sm:$0xff]
    %v2811 = vld [vmem:[%s13 + $0xd28] sm:$0xff]
    %v2812 = vld [vmem:[%s13 + $0xd30] sm:$0xff]
    %v2813 = vld [vmem:[%s13 + $0xd38] sm:$0xff]
    %v2814 = vld [vmem:[%s13 + $0xd40] sm:$0xff]
    %v2815 = vld [vmem:[%s13 + $0xd48] sm:$0xff]
    %v2816 = vld [vmem:[%s13 + $0xd50] sm:$0xff]
    %v2817 = vld [vmem:[%s13 + $0xd58] sm:$0xff]
    %v2818 = vld [vmem:[%s13 + $0xd60] sm:$0xff]
    %v2819 = vld [vmem:[%s13 + $0xd68] sm:$0xff]
    %v2820 = vld [vmem:[%s13 + $0xd70] sm:$0xff]
    %v2821 = vld [vmem:[%s13 + $0xd78] sm:$0xff]
    %v2822 = vld [vmem:[%s13 + $0xd80] sm:$0xff]
    %v2823 = vld [vmem:[%s13 + $0xd88] sm:$0xff]
    %v2824 = vld [vmem:[%s13 + $0xd90] sm:$0xff]
    %v2825 = vld [vmem:[%s13 + $0xd98] sm:$0xff]
    %v2826 = vld [vmem:[%s13 + $0xda0] sm:$0xff]
    %v2827 = vld [vmem:[%s13 + $0xda8] sm:$0xff]
    %v2828 = vld [vmem:[%s13 + $0xdb0] sm:$0xff]
    %v2829 = vld [vmem:[%s13 + $0xdb8] sm:$0xff]
    %v2830 = vld [vmem:[%s13 + $0xdc0] sm:$0xff]
    %v2831 = vld [vmem:[%s13 + $0xdc8] sm:$0xff]
    %v2832 = vld [vmem:[%s13 + $0xdd0] sm:$0xff]
    %v2833 = vld [vmem:[%s13 + $0xdd8] sm:$0xff]
    %v2834 = vld [vmem:[%s13 + $0xde0] sm:$0xff]
    %v2835 = vld [vmem:[%s13 + $0xde8] sm:$0xff]
    %v2836 = vld [vmem:[%s13 + $0xdf0] sm:$0xff]
    %v2837 = vld [vmem:[%s13 + $0xdf8] sm:$0xff]
    %v2838 = vld [vmem:[%s13 + $0xe00] sm:$0xff]
    %v2839 = vld [vmem:[%s13 + $0xe08] sm:$0xff]
    %v2840 = vld [vmem:[%s13 + $0xe10] sm:$0xff]
    %v2841 = vld [vmem:[%s13 + $0xe18] sm:$0xff]
    %v2842 = vld [vmem:[%s13 + $0xe20] sm:$0xff]
    %v2843 = vld [vmem:[%s13 + $0xe28] sm:$0xff]
    %v2844 = vld [vmem:[%s13 + $0xe30] sm:$0xff]
    %v2845 = vld [vmem:[%s13 + $0xe38] sm:$0xff]
    %v2846 = vld [vmem:[%s13 + $0xe40] sm:$0xff]
    %v2847 = vld [vmem:[%s13 + $0xe48] sm:$0xff]
    %v2848 = vld [vmem:[%s13 + $0xe50] sm:$0xff]
    %v2849 = vld [vmem:[%s13 + $0xe58] sm:$0xff]
    %v2850 = vld [vmem:[%s13 + $0xe60] sm:$0xff]
    %v2851 = vld [vmem:[%s13 + $0xe68] sm:$0xff]
    %v2852 = vld [vmem:[%s13 + $0xe70] sm:$0xff]
    %v2853 = vld [vmem:[%s13 + $0xe78] sm:$0xff]
    %v2854 = vld [vmem:[%s13 + $0xe80] sm:$0xff]
    %v2855 = vld [vmem:[%s13 + $0xe88] sm:$0xff]
    %v2856 = vld [vmem:[%s13 + $0xe90] sm:$0xff]
    %v2857 = vld [vmem:[%s13 + $0xe98] sm:$0xff]
    %v2858 = vld [vmem:[%s13 + $0xea0] sm:$0xff]
    %v2859 = vld [vmem:[%s13 + $0xea8] sm:$0xff]
    %v2860 = vld [vmem:[%s13 + $0xeb0] sm:$0xff]
    %v2861 = vld [vmem:[%s13 + $0xeb8] sm:$0xff]
    %v2862 = vld [vmem:[%s13 + $0xec0] sm:$0xff]
    %v2863 = vld [vmem:[%s13 + $0xec8] sm:$0xff]
    %v2864 = vld [vmem:[%s13 + $0xed0] sm:$0xff]
    %v2865 = vld [vmem:[%s13 + $0xed8] sm:$0xff]
    %v2866 = vld [vmem:[%s13 + $0xee0] sm:$0xff]
    %v2867 = vld [vmem:[%s13 + $0xee8] sm:$0xff]
    %v2868 = vld [vmem:[%s13 + $0xef0] sm:$0xff]
    %v2869 = vld [vmem:[%s13 + $0xef8] sm:$0xff]
    %v2870 = vld [vmem:[%s14] sm:$0x3f]
    %v2872 = vlaneseq
    %v2873 = vshrl.u32 %v2872, 7
    %v2874 = vsub.s32 0, %v2873
    %v2875 = vrot.slane %v2870, %v2874
    %v2876 = vlaneseq
    %v2877 = vshrl.u32 %v2876, 7
    %v2878 = vsub.s32 1, %v2877
    %v2879 = vrot.slane %v2870, %v2878
    %v2880 = vlaneseq
    %v2881 = vshrl.u32 %v2880, 7
    %v2882 = vsub.s32 2, %v2881
    %v2883 = vrot.slane %v2870, %v2882
    %v2884 = vlaneseq
    %v2885 = vshrl.u32 %v2884, 7
    %v2886 = vsub.s32 3, %v2885
    %v2887 = vrot.slane %v2870, %v2886
    %v2888 = vlaneseq
    %v2889 = vshrl.u32 %v2888, 7
    %v2890 = vsub.s32 4, %v2889
    %v2891 = vrot.slane %v2870, %v2890
    %v2892 = vlaneseq
    %v2893 = vshrl.u32 %v2892, 7
    %v2894 = vsub.s32 5, %v2893
    %v2895 = vrot.slane %v2870, %v2894
    %2902 = vmatprep.subr.mxu0 %v2391
    %2903 = vmatpush1.msra.mxu0 %v2390
    %2904 = vmatprep.subr.mxu0 %v2397
    %2905 = vmatpush1.msra.mxu0 %v2396
    %2906 = vmatprep.subr.mxu0 %v2403
    %2907 = vmatpush1.msra.mxu0 %v2402
    %2908 = vmatprep.subr.mxu0 %v2409
    %2909 = vmatpush1.msra.mxu0 %v2408
    %2910 = vmatprep.subr.mxu0 %v2415
    %2911 = vmatpush1.msra.mxu0 %v2414
    %2912 = vmatprep.subr.mxu0 %v2421
    %2913 = vmatpush1.msra.mxu0 %v2420
    %2914 = vmatprep.subr.mxu0 %v2427
    %2915 = vmatpush1.msra.mxu0 %v2426
    %2916 = vmatprep.subr.mxu0 %v2433
    %2917 = vmatpush1.msra.mxu0 %v2432
    %2918 = vmatprep.subr.mxu0 %v2439
    %2919 = vmatpush1.msra.mxu0 %v2438
    %2920 = vmatprep.subr.mxu0 %v2445
    %2921 = vmatpush1.msra.mxu0 %v2444
    %2922 = vmatprep.subr.mxu0 %v2451
    %2923 = vmatpush1.msra.mxu0 %v2450
    %2924 = vmatprep.subr.mxu0 %v2457
    %2925 = vmatpush1.msra.mxu0 %v2456
    %2926 = vmatprep.subr.mxu0 %v2463
    %2927 = vmatpush1.msra.mxu0 %v2462
    %2928 = vmatprep.subr.mxu0 %v2469
    %2929 = vmatpush1.msra.mxu0 %v2468
    %2930 = vmatprep.subr.mxu0 %v2475
    %2931 = vmatpush1.msra.mxu0 %v2474
    %2932 = vmatprep.subr.mxu0 %v2481
    %2933 = vmatpush1.msra.mxu0 %v2480
    %2934 = vmatprep.subr.mxu0 %v2487
    %2935 = vmatpush1.msra.mxu0 %v2486
    %2936 = vmatprep.subr.mxu0 %v2493
    %2937 = vmatpush1.msra.mxu0 %v2492
    %2938 = vmatprep.subr.mxu0 %v2499
    %2939 = vmatpush1.msra.mxu0 %v2498
    %2940 = vmatprep.subr.mxu0 %v2505
    %2941 = vmatpush1.msra.mxu0 %v2504
    %2942 = vmatprep.subr.mxu0 %v2511
    %2943 = vmatpush1.msra.mxu0 %v2510
    %2944 = vmatprep.subr.mxu0 %v2517
    %2945 = vmatpush1.msra.mxu0 %v2516
    %2946 = vmatprep.subr.mxu0 %v2523
    %2947 = vmatpush1.msra.mxu0 %v2522
    %2948 = vmatprep.subr.mxu0 %v2529
    %2949 = vmatpush1.msra.mxu0 %v2528
    %2950 = vmatprep.subr.mxu0 %v2535
    %2951 = vmatpush1.msra.mxu0 %v2534
    %2952 = vmatprep.subr.mxu0 %v2541
    %2953 = vmatpush1.msra.mxu0 %v2540
    %2954 = vmatprep.subr.mxu0 %v2547
    %2955 = vmatpush1.msra.mxu0 %v2546
    %2956 = vmatprep.subr.mxu0 %v2553
    %2957 = vmatpush1.msra.mxu0 %v2552
    %2958 = vmatprep.subr.mxu0 %v2559
    %2959 = vmatpush1.msra.mxu0 %v2558
    %2960 = vmatprep.subr.mxu0 %v2565
    %2961 = vmatpush1.msra.mxu0 %v2564
    %2962 = vmatprep.subr.mxu0 %v2571
    %2963 = vmatpush1.msra.mxu0 %v2570
    %2964 = vmatprep.subr.mxu0 %v2577
    %2965 = vmatpush1.msra.mxu0 %v2576
    %2966 = vmatprep.mubr.f32.mxu0 %v2386
    %2967 = vmatmul.mubr.f32.gmra.mrb[0].mxu0 %v2385
    %v2968 = vpop.f32.mrb[0].mxu0
    %v2969 = vadd.f32 %v2875, %v2968
    %v2970 = vpop.f32.mrb[0].mxu0
    %v2971 = vadd.f32 %v2879, %v2970
    %2972 = vdwg.mxu0
    %2973 = vmatprep.subr.mxu0 %v2583
    %2974 = vmatpush1.msra.mxu0 %v2582
    %2975 = vmatprep.subr.mxu0 %v2589
    %2976 = vmatpush1.msra.mxu0 %v2588
    %2977 = vmatprep.subr.mxu0 %v2595
    %2978 = vmatpush1.msra.mxu0 %v2594
    %2979 = vmatprep.subr.mxu0 %v2601
    %2980 = vmatpush1.msra.mxu0 %v2600
    %2981 = vmatprep.subr.mxu0 %v2607
    %2982 = vmatpush1.msra.mxu0 %v2606
    %2983 = vmatprep.subr.mxu0 %v2613
    %2984 = vmatpush1.msra.mxu0 %v2612
    %2985 = vmatprep.subr.mxu0 %v2619
    %2986 = vmatpush1.msra.mxu0 %v2618
    %2987 = vmatprep.subr.mxu0 %v2625
    %2988 = vmatpush1.msra.mxu0 %v2624
    %2989 = vmatprep.subr.mxu0 %v2631
    %2990 = vmatpush1.msra.mxu0 %v2630
    %2991 = vmatprep.subr.mxu0 %v2637
    %2992 = vmatpush1.msra.mxu0 %v2636
    %2993 = vmatprep.subr.mxu0 %v2643
    %2994 = vmatpush1.msra.mxu0 %v2642
    %2995 = vmatprep.subr.mxu0 %v2649
    %2996 = vmatpush1.msra.mxu0 %v2648
    %2997 = vmatprep.subr.mxu0 %v2655
    %2998 = vmatpush1.msra.mxu0 %v2654
    %2999 = vmatprep.subr.mxu0 %v2661
    %3000 = vmatpush1.msra.mxu0 %v2660
    %3001 = vmatprep.subr.mxu0 %v2667
    %3002 = vmatpush1.msra.mxu0 %v2666
    %3003 = vmatprep.subr.mxu0 %v2673
    %3004 = vmatpush1.msra.mxu0 %v2672
    %3005 = vmatprep.subr.mxu0 %v2679
    %3006 = vmatpush1.msra.mxu0 %v2678
    %3007 = vmatprep.subr.mxu0 %v2685
    %3008 = vmatpush1.msra.mxu0 %v2684
    %3009 = vmatprep.subr.mxu0 %v2691
    %3010 = vmatpush1.msra.mxu0 %v2690
    %3011 = vmatprep.subr.mxu0 %v2697
    %3012 = vmatpush1.msra.mxu0 %v2696
    %3013 = vmatprep.subr.mxu0 %v2703
    %3014 = vmatpush1.msra.mxu0 %v2702
    %3015 = vmatprep.subr.mxu0 %v2709
    %3016 = vmatpush1.msra.mxu0 %v2708
    %3017 = vmatprep.subr.mxu0 %v2715
    %3018 = vmatpush1.msra.mxu0 %v2714
    %3019 = vmatprep.subr.mxu0 %v2721
    %3020 = vmatpush1.msra.mxu0 %v2720
    %3021 = vmatprep.subr.mxu0 %v2727
    %3022 = vmatpush1.msra.mxu0 %v2726
    %3023 = vmatprep.subr.mxu0 %v2733
    %3024 = vmatpush1.msra.mxu0 %v2732
    %3025 = vmatprep.subr.mxu0 %v2739
    %3026 = vmatpush1.msra.mxu0 %v2738
    %3027 = vmatprep.subr.mxu0 %v2745
    %3028 = vmatpush1.msra.mxu0 %v2744
    %3029 = vmatprep.subr.mxu0 %v2751
    %3030 = vmatpush1.msra.mxu0 %v2750
    %3031 = vmatprep.subr.mxu0 %v2757
    %3032 = vmatpush1.msra.mxu0 %v2756
    %3033 = vmatprep.subr.mxu0 %v2763
    %3034 = vmatpush1.msra.mxu0 %v2762
    %3035 = vmatprep.subr.mxu0 %v2769
    %3036 = vmatpush1.msra.mxu0 %v2768
    %3037 = vmatprep.mubr.f32.mxu0 %v2388
    %3038 = vmatmul.mubr.f32.gmra.mrb[0].mxu0 %v2387
    %v3039 = vpop.f32.mrb[0].mxu0
    %v3040 = vadd.f32 %v2969, %v3039
    %v3041 = vpop.f32.mrb[0].mxu0
    %v3042 = vadd.f32 %v2971, %v3041
    %3043 = vdwg.mxu0
    %3044 = vmatprep.subr.mxu0 %v2775
    %3045 = vmatpush1.msra.mxu0 %v2774
    %3046 = vmatprep.subr.mxu0 %v2781
    %3047 = vmatpush1.msra.mxu0 %v2780
    %3048 = vmatprep.subr.mxu0 %v2787
    %3049 = vmatpush1.msra.mxu0 %v2786
    %3050 = vmatprep.subr.mxu0 %v2793
    %3051 = vmatpush1.msra.mxu0 %v2792
    %3052 = vmatprep.subr.mxu0 %v2799
    %3053 = vmatpush1.msra.mxu0 %v2798
    %3054 = vmatprep.subr.mxu0 %v2805
    %3055 = vmatpush1.msra.mxu0 %v2804
    %3056 = vmatprep.subr.mxu0 %v2811
    %3057 = vmatpush1.msra.mxu0 %v2810
    %3058 = vmatprep.subr.mxu0 %v2817
    %3059 = vmatpush1.msra.mxu0 %v2816
    %3060 = vmatprep.subr.mxu0 %v2823
    %3061 = vmatpush1.msra.mxu0 %v2822
    %3062 = vmatprep.subr.mxu0 %v2829
    %3063 = vmatpush1.msra.mxu0 %v2828
    %3064 = vmatprep.subr.mxu0 %v2835
    %3065 = vmatpush1.msra.mxu0 %v2834
    %3066 = vmatprep.subr.mxu0 %v2841
    %3067 = vmatpush1.msra.mxu0 %v2840
    %3068 = vmatprep.subr.mxu0 %v2847
    %3069 = vmatpush1.msra.mxu0 %v2846
    %3070 = vmatprep.subr.mxu0 %v2853
    %3071 = vmatpush1.msra.mxu0 %v2852
    %3072 = vmatprep.subr.mxu0 %v2859
    %3073 = vmatpush1.msra.mxu0 %v2858
    %3074 = vmatprep.subr.mxu0 %v2865
    %3075 = vmatpush1.msra.mxu0 %v2864
    %3076 = vmatprep.subr.mxu0 0.0
    %3077 = vmatpush1.msra.mxu0 0.0
    %3078 = vmatprep.subr.mxu0 0.0
    %3079 = vmatpush1.msra.mxu0 0.0
    %3080 = vmatprep.subr.mxu0 0.0
    %3081 = vmatpush1.msra.mxu0 0.0
    %3082 = vmatprep.subr.mxu0 0.0
    %3083 = vmatpush1.msra.mxu0 0.0
    %3084 = vmatprep.subr.mxu0 0.0
    %3085 = vmatpush1.msra.mxu0 0.0
    %3086 = vmatprep.subr.mxu0 0.0
    %3087 = vmatpush1.msra.mxu0 0.0
    %3088 = vmatprep.subr.mxu0 0.0
    %3089 = vmatpush1.msra.mxu0 0.0
    %3090 = vmatprep.subr.mxu0 0.0
    %3091 = vmatpush1.msra.mxu0 0.0
    %3092 = vmatprep.subr.mxu0 0.0
    %3093 = vmatpush1.msra.mxu0 0.0
    %3094 = vmatprep.subr.mxu0 0.0
    %3095 = vmatpush1.msra.mxu0 0.0
    %3096 = vmatprep.subr.mxu0 0.0
    %3097 = vmatpush1.msra.mxu0 0.0
    %3098 = vmatprep.subr.mxu0 0.0
    %3099 = vmatpush1.msra.mxu0 0.0
    %3100 = vmatprep.subr.mxu0 0.0
    %3101 = vmatpush1.msra.mxu0 0.0
    %3102 = vmatprep.subr.mxu0 0.0
    %3103 = vmatpush1.msra.mxu0 0.0
    %3104 = vmatprep.subr.mxu0 0.0
    %3105 = vmatpush1.msra.mxu0 0.0
    %3106 = vmatprep.subr.mxu0 0.0
    %3107 = vmatpush1.msra.mxu0 0.0
    %3108 = vmatprep.mubr.f32.mxu0 0.0
    %3109 = vmatmul.mubr.f32.gmra.mrb[0].mxu0 %v2389
    %v3110 = vpop.f32.mrb[0].mxu0
    %v3111 = vadd.f32 %v3040, %v3110
    %v3112 = vpop.f32.mrb[0].mxu0
    %v3113 = vadd.f32 %v3042, %v3112
    %3114 = vdwg.mxu0
    %3115 = vmatprep.subr.mxu0 %v2393
    %3116 = vmatpush1.msra.mxu0 %v2392
    %3117 = vmatprep.subr.mxu0 %v2399
    %3118 = vmatpush1.msra.mxu0 %v2398
    %3119 = vmatprep.subr.mxu0 %v2405
    %3120 = vmatpush1.msra.mxu0 %v2404
    %3121 = vmatprep.subr.mxu0 %v2411
    %3122 = vmatpush1.msra.mxu0 %v2410
    %3123 = vmatprep.subr.mxu0 %v2417
    %3124 = vmatpush1.msra.mxu0 %v2416
    %3125 = vmatprep.subr.mxu0 %v2423
    %3126 = vmatpush1.msra.mxu0 %v2422
    %3127 = vmatprep.subr.mxu0 %v2429
    %3128 = vmatpush1.msra.mxu0 %v2428
    %3129 = vmatprep.subr.mxu0 %v2435
    %3130 = vmatpush1.msra.mxu0 %v2434
    %3131 = vmatprep.subr.mxu0 %v2441
    %3132 = vmatpush1.msra.mxu0 %v2440
    %3133 = vmatprep.subr.mxu0 %v2447
    %3134 = vmatpush1.msra.mxu0 %v2446
    %3135 = vmatprep.subr.mxu0 %v2453
    %3136 = vmatpush1.msra.mxu0 %v2452
    %3137 = vmatprep.subr.mxu0 %v2459
    %3138 = vmatpush1.msra.mxu0 %v2458
    %3139 = vmatprep.subr.mxu0 %v2465
    %3140 = vmatpush1.msra.mxu0 %v2464
    %3141 = vmatprep.subr.mxu0 %v2471
    %3142 = vmatpush1.msra.mxu0 %v2470
    %3143 = vmatprep.subr.mxu0 %v2477
    %3144 = vmatpush1.msra.mxu0 %v2476
    %3145 = vmatprep.subr.mxu0 %v2483
    %3146 = vmatpush1.msra.mxu0 %v2482
    %3147 = vmatprep.subr.mxu0 %v2489
    %3148 = vmatpush1.msra.mxu0 %v2488
    %3149 = vmatprep.subr.mxu0 %v2495
    %3150 = vmatpush1.msra.mxu0 %v2494
    %3151 = vmatprep.subr.mxu0 %v2501
    %3152 = vmatpush1.msra.mxu0 %v2500
    %3153 = vmatprep.subr.mxu0 %v2507
    %3154 = vmatpush1.msra.mxu0 %v2506
    %3155 = vmatprep.subr.mxu0 %v2513
    %3156 = vmatpush1.msra.mxu0 %v2512
    %3157 = vmatprep.subr.mxu0 %v2519
    %3158 = vmatpush1.msra.mxu0 %v2518
    %3159 = vmatprep.subr.mxu0 %v2525
    %3160 = vmatpush1.msra.mxu0 %v2524
    %3161 = vmatprep.subr.mxu0 %v2531
    %3162 = vmatpush1.msra.mxu0 %v2530
    %3163 = vmatprep.subr.mxu0 %v2537
    %3164 = vmatpush1.msra.mxu0 %v2536
    %3165 = vmatprep.subr.mxu0 %v2543
    %3166 = vmatpush1.msra.mxu0 %v2542
    %3167 = vmatprep.subr.mxu0 %v2549
    %3168 = vmatpush1.msra.mxu0 %v2548
    %3169 = vmatprep.subr.mxu0 %v2555
    %3170 = vmatpush1.msra.mxu0 %v2554
    %3171 = vmatprep.subr.mxu0 %v2561
    %3172 = vmatpush1.msra.mxu0 %v2560
    %3173 = vmatprep.subr.mxu0 %v2567
    %3174 = vmatpush1.msra.mxu0 %v2566
    %3175 = vmatprep.subr.mxu0 %v2573
    %3176 = vmatpush1.msra.mxu0 %v2572
    %3177 = vmatprep.subr.mxu0 %v2579
    %3178 = vmatpush1.msra.mxu0 %v2578
    %3179 = vmatprep.mubr.f32.mxu0 %v2386
    %3180 = vmatmul.mubr.f32.gmra.mrb[0].mxu0 %v2385
    %v3181 = vpop.f32.mrb[0].mxu0
    %v3182 = vadd.f32 %v2883, %v3181
    %v3183 = vpop.f32.mrb[0].mxu0
    %v3184 = vadd.f32 %v2887, %v3183
    %3185 = vdwg.mxu0
    %3186 = vmatprep.subr.mxu0 %v2585
    %3187 = vmatpush1.msra.mxu0 %v2584
    %3188 = vmatprep.subr.mxu0 %v2591
    %3189 = vmatpush1.msra.mxu0 %v2590
    %3190 = vmatprep.subr.mxu0 %v2597
    %3191 = vmatpush1.msra.mxu0 %v2596
    %3192 = vmatprep.subr.mxu0 %v2603
    %3193 = vmatpush1.msra.mxu0 %v2602
    %3194 = vmatprep.subr.mxu0 %v2609
    %3195 = vmatpush1.msra.mxu0 %v2608
    %3196 = vmatprep.subr.mxu0 %v2615
    %3197 = vmatpush1.msra.mxu0 %v2614
    %3198 = vmatprep.subr.mxu0 %v2621
    %3199 = vmatpush1.msra.mxu0 %v2620
    %3200 = vmatprep.subr.mxu0 %v2627
    %3201 = vmatpush1.msra.mxu0 %v2626
    %3202 = vmatprep.subr.mxu0 %v2633
    %3203 = vmatpush1.msra.mxu0 %v2632
    %3204 = vmatprep.subr.mxu0 %v2639
    %3205 = vmatpush1.msra.mxu0 %v2638
    %3206 = vmatprep.subr.mxu0 %v2645
    %3207 = vmatpush1.msra.mxu0 %v2644
    %3208 = vmatprep.subr.mxu0 %v2651
    %3209 = vmatpush1.msra.mxu0 %v2650
    %3210 = vmatprep.subr.mxu0 %v2657
    %3211 = vmatpush1.msra.mxu0 %v2656
    %3212 = vmatprep.subr.mxu0 %v2663
    %3213 = vmatpush1.msra.mxu0 %v2662
    %3214 = vmatprep.subr.mxu0 %v2669
    %3215 = vmatpush1.msra.mxu0 %v2668
    %3216 = vmatprep.subr.mxu0 %v2675
    %3217 = vmatpush1.msra.mxu0 %v2674
    %3218 = vmatprep.subr.mxu0 %v2681
    %3219 = vmatpush1.msra.mxu0 %v2680
    %3220 = vmatprep.subr.mxu0 %v2687
    %3221 = vmatpush1.msra.mxu0 %v2686
    %3222 = vmatprep.subr.mxu0 %v2693
    %3223 = vmatpush1.msra.mxu0 %v2692
    %3224 = vmatprep.subr.mxu0 %v2699
    %3225 = vmatpush1.msra.mxu0 %v2698
    %3226 = vmatprep.subr.mxu0 %v2705
    %3227 = vmatpush1.msra.mxu0 %v2704
    %3228 = vmatprep.subr.mxu0 %v2711
    %3229 = vmatpush1.msra.mxu0 %v2710
    %3230 = vmatprep.subr.mxu0 %v2717
    %3231 = vmatpush1.msra.mxu0 %v2716
    %3232 = vmatprep.subr.mxu0 %v2723
    %3233 = vmatpush1.msra.mxu0 %v2722
    %3234 = vmatprep.subr.mxu0 %v2729
    %3235 = vmatpush1.msra.mxu0 %v2728
    %3236 = vmatprep.subr.mxu0 %v2735
    %3237 = vmatpush1.msra.mxu0 %v2734
    %3238 = vmatprep.subr.mxu0 %v2741
    %3239 = vmatpush1.msra.mxu0 %v2740
    %3240 = vmatprep.subr.mxu0 %v2747
    %3241 = vmatpush1.msra.mxu0 %v2746
    %3242 = vmatprep.subr.mxu0 %v2753
    %3243 = vmatpush1.msra.mxu0 %v2752
    %3244 = vmatprep.subr.mxu0 %v2759
    %3245 = vmatpush1.msra.mxu0 %v2758
    %3246 = vmatprep.subr.mxu0 %v2765
    %3247 = vmatpush1.msra.mxu0 %v2764
    %3248 = vmatprep.subr.mxu0 %v2771
    %3249 = vmatpush1.msra.mxu0 %v2770
    %3250 = vmatprep.mubr.f32.mxu0 %v2388
    %3251 = vmatmul.mubr.f32.gmra.mrb[0].mxu0 %v2387
    %v3252 = vpop.f32.mrb[0].mxu0
    %v3253 = vadd.f32 %v3182, %v3252
    %v3254 = vpop.f32.mrb[0].mxu0
    %v3255 = vadd.f32 %v3184, %v3254
    %3256 = vdwg.mxu0
    %3257 = vmatprep.subr.mxu0 %v2777
    %3258 = vmatpush1.msra.mxu0 %v2776
    %3259 = vmatprep.subr.mxu0 %v2783
    %3260 = vmatpush1.msra.mxu0 %v2782
    %3261 = vmatprep.subr.mxu0 %v2789
    %3262 = vmatpush1.msra.mxu0 %v2788
    %3263 = vmatprep.subr.mxu0 %v2795
    %3264 = vmatpush1.msra.mxu0 %v2794
    %3265 = vmatprep.subr.mxu0 %v2801
    %3266 = vmatpush1.msra.mxu0 %v2800
    %3267 = vmatprep.subr.mxu0 %v2807
    %3268 = vmatpush1.msra.mxu0 %v2806
    %3269 = vmatprep.subr.mxu0 %v2813
    %3270 = vmatpush1.msra.mxu0 %v2812
    %3271 = vmatprep.subr.mxu0 %v2819
    %3272 = vmatpush1.msra.mxu0 %v2818
    %3273 = vmatprep.subr.mxu0 %v2825
    %3274 = vmatpush1.msra.mxu0 %v2824
    %3275 = vmatprep.subr.mxu0 %v2831
    %3276 = vmatpush1.msra.mxu0 %v2830
    %3277 = vmatprep.subr.mxu0 %v2837
    %3278 = vmatpush1.msra.mxu0 %v2836
    %3279 = vmatprep.subr.mxu0 %v2843
    %3280 = vmatpush1.msra.mxu0 %v2842
    %3281 = vmatprep.subr.mxu0 %v2849
    %3282 = vmatpush1.msra.mxu0 %v2848
    %3283 = vmatprep.subr.mxu0 %v2855
    %3284 = vmatpush1.msra.mxu0 %v2854
    %3285 = vmatprep.subr.mxu0 %v2861
    %3286 = vmatpush1.msra.mxu0 %v2860
    %3287 = vmatprep.subr.mxu0 %v2867
    %3288 = vmatpush1.msra.mxu0 %v2866
    %3289 = vmatprep.subr.mxu0 0.0
    %3290 = vmatpush1.msra.mxu0 0.0
    %3291 = vmatprep.subr.mxu0 0.0
    %3292 = vmatpush1.msra.mxu0 0.0
    %3293 = vmatprep.subr.mxu0 0.0
    %3294 = vmatpush1.msra.mxu0 0.0
    %3295 = vmatprep.subr.mxu0 0.0
    %3296 = vmatpush1.msra.mxu0 0.0
    %3297 = vmatprep.subr.mxu0 0.0
    %3298 = vmatpush1.msra.mxu0 0.0
    %3299 = vmatprep.subr.mxu0 0.0
    %3300 = vmatpush1.msra.mxu0 0.0
    %3301 = vmatprep.subr.mxu0 0.0
    %3302 = vmatpush1.msra.mxu0 0.0
    %3303 = vmatprep.subr.mxu0 0.0
    %3304 = vmatpush1.msra.mxu0 0.0
    %3305 = vmatprep.subr.mxu0 0.0
    %3306 = vmatpush1.msra.mxu0 0.0
    %3307 = vmatprep.subr.mxu0 0.0
    %3308 = vmatpush1.msra.mxu0 0.0
    %3309 = vmatprep.subr.mxu0 0.0
    %3310 = vmatpush1.msra.mxu0 0.0
    %3311 = vmatprep.subr.mxu0 0.0
    %3312 = vmatpush1.msra.mxu0 0.0
    %3313 = vmatprep.subr.mxu0 0.0
    %3314 = vmatpush1.msra.mxu0 0.0
    %3315 = vmatprep.subr.mxu0 0.0
    %3316 = vmatpush1.msra.mxu0 0.0
    %3317 = vmatprep.subr.mxu0 0.0
    %3318 = vmatpush1.msra.mxu0 0.0
    %3319 = vmatprep.subr.mxu0 0.0
    %3320 = vmatpush1.msra.mxu0 0.0
    %3321 = vmatprep.mubr.f32.mxu0 0.0
    %3322 = vmatmul.mubr.f32.gmra.mrb[0].mxu0 %v2389
    %v3323 = vpop.f32.mrb[0].mxu0
    %v3324 = vadd.f32 %v3253, %v3323
    %v3325 = vpop.f32.mrb[0].mxu0
    %v3326 = vadd.f32 %v3255, %v3325
    %3327 = vdwg.mxu0
    %3328 = vmatprep.subr.mxu0 %v2395
    %3329 = vmatpush1.msra.mxu0 %v2394
    %3330 = vmatprep.subr.mxu0 %v2401
    %3331 = vmatpush1.msra.mxu0 %v2400
    %3332 = vmatprep.subr.mxu0 %v2407
    %3333 = vmatpush1.msra.mxu0 %v2406
    %3334 = vmatprep.subr.mxu0 %v2413
    %3335 = vmatpush1.msra.mxu0 %v2412
    %3336 = vmatprep.subr.mxu0 %v2419
    %3337 = vmatpush1.msra.mxu0 %v2418
    %3338 = vmatprep.subr.mxu0 %v2425
    %3339 = vmatpush1.msra.mxu0 %v2424
    %3340 = vmatprep.subr.mxu0 %v2431
    %3341 = vmatpush1.msra.mxu0 %v2430
    %3342 = vmatprep.subr.mxu0 %v2437
    %3343 = vmatpush1.msra.mxu0 %v2436
    %3344 = vmatprep.subr.mxu0 %v2443
    %3345 = vmatpush1.msra.mxu0 %v2442
    %3346 = vmatprep.subr.mxu0 %v2449
    %3347 = vmatpush1.msra.mxu0 %v2448
    %3348 = vmatprep.subr.mxu0 %v2455
    %3349 = vmatpush1.msra.mxu0 %v2454
    %3350 = vmatprep.subr.mxu0 %v2461
    %3351 = vmatpush1.msra.mxu0 %v2460
    %3352 = vmatprep.subr.mxu0 %v2467
    %3353 = vmatpush1.msra.mxu0 %v2466
    %3354 = vmatprep.subr.mxu0 %v2473
    %3355 = vmatpush1.msra.mxu0 %v2472
    %3356 = vmatprep.subr.mxu0 %v2479
    %3357 = vmatpush1.msra.mxu0 %v2478
    %3358 = vmatprep.subr.mxu0 %v2485
    %3359 = vmatpush1.msra.mxu0 %v2484
    %3360 = vmatprep.subr.mxu0 %v2491
    %3361 = vmatpush1.msra.mxu0 %v2490
    %3362 = vmatprep.subr.mxu0 %v2497
    %3363 = vmatpush1.msra.mxu0 %v2496
    %3364 = vmatprep.subr.mxu0 %v2503
    %3365 = vmatpush1.msra.mxu0 %v2502
    %3366 = vmatprep.subr.mxu0 %v2509
    %3367 = vmatpush1.msra.mxu0 %v2508
    %3368 = vmatprep.subr.mxu0 %v2515
    %3369 = vmatpush1.msra.mxu0 %v2514
    %3370 = vmatprep.subr.mxu0 %v2521
    %3371 = vmatpush1.msra.mxu0 %v2520
    %3372 = vmatprep.subr.mxu0 %v2527
    %3373 = vmatpush1.msra.mxu0 %v2526
    %3374 = vmatprep.subr.mxu0 %v2533
    %3375 = vmatpush1.msra.mxu0 %v2532
    %3376 = vmatprep.subr.mxu0 %v2539
    %3377 = vmatpush1.msra.mxu0 %v2538
    %3378 = vmatprep.subr.mxu0 %v2545
    %3379 = vmatpush1.msra.mxu0 %v2544
    %3380 = vmatprep.subr.mxu0 %v2551
    %3381 = vmatpush1.msra.mxu0 %v2550
    %3382 = vmatprep.subr.mxu0 %v2557
    %3383 = vmatpush1.msra.mxu0 %v2556
    %3384 = vmatprep.subr.mxu0 %v2563
    %3385 = vmatpush1.msra.mxu0 %v2562
    %3386 = vmatprep.subr.mxu0 %v2569
    %3387 = vmatpush1.msra.mxu0 %v2568
    %3388 = vmatprep.subr.mxu0 %v2575
    %3389 = vmatpush1.msra.mxu0 %v2574
    %3390 = vmatprep.subr.mxu0 %v2581
    %3391 = vmatpush1.msra.mxu0 %v2580
    %3392 = vmatprep.mubr.f32.mxu0 %v2386
    %3393 = vmatmul.mubr.f32.gmra.mrb[0].mxu0 %v2385
    %v3394 = vpop.f32.mrb[0].mxu0
    %v3395 = vadd.f32 %v2891, %v3394
    %v3396 = vpop.f32.mrb[0].mxu0
    %v3397 = vadd.f32 %v2895, %v3396
    %3398 = vdwg.mxu0
    %3399 = vmatprep.subr.mxu0 %v2587
    %3400 = vmatpush1.msra.mxu0 %v2586
    %3401 = vmatprep.subr.mxu0 %v2593
    %3402 = vmatpush1.msra.mxu0 %v2592
    %3403 = vmatprep.subr.mxu0 %v2599
    %3404 = vmatpush1.msra.mxu0 %v2598
    %3405 = vmatprep.subr.mxu0 %v2605
    %3406 = vmatpush1.msra.mxu0 %v2604
    %3407 = vmatprep.subr.mxu0 %v2611
    %3408 = vmatpush1.msra.mxu0 %v2610
    %3409 = vmatprep.subr.mxu0 %v2617
    %3410 = vmatpush1.msra.mxu0 %v2616
    %3411 = vmatprep.subr.mxu0 %v2623
    %3412 = vmatpush1.msra.mxu0 %v2622
    %3413 = vmatprep.subr.mxu0 %v2629
    %3414 = vmatpush1.msra.mxu0 %v2628
    %3415 = vmatprep.subr.mxu0 %v2635
    %3416 = vmatpush1.msra.mxu0 %v2634
    %3417 = vmatprep.subr.mxu0 %v2641
    %3418 = vmatpush1.msra.mxu0 %v2640
    %3419 = vmatprep.subr.mxu0 %v2647
    %3420 = vmatpush1.msra.mxu0 %v2646
    %3421 = vmatprep.subr.mxu0 %v2653
    %3422 = vmatpush1.msra.mxu0 %v2652
    %3423 = vmatprep.subr.mxu0 %v2659
    %3424 = vmatpush1.msra.mxu0 %v2658
    %3425 = vmatprep.subr.mxu0 %v2665
    %3426 = vmatpush1.msra.mxu0 %v2664
    %3427 = vmatprep.subr.mxu0 %v2671
    %3428 = vmatpush1.msra.mxu0 %v2670
    %3429 = vmatprep.subr.mxu0 %v2677
    %3430 = vmatpush1.msra.mxu0 %v2676
    %3431 = vmatprep.subr.mxu0 %v2683
    %3432 = vmatpush1.msra.mxu0 %v2682
    %3433 = vmatprep.subr.mxu0 %v2689
    %3434 = vmatpush1.msra.mxu0 %v2688
    %3435 = vmatprep.subr.mxu0 %v2695
    %3436 = vmatpush1.msra.mxu0 %v2694
    %3437 = vmatprep.subr.mxu0 %v2701
    %3438 = vmatpush1.msra.mxu0 %v2700
    %3439 = vmatprep.subr.mxu0 %v2707
    %3440 = vmatpush1.msra.mxu0 %v2706
    %3441 = vmatprep.subr.mxu0 %v2713
    %3442 = vmatpush1.msra.mxu0 %v2712
    %3443 = vmatprep.subr.mxu0 %v2719
    %3444 = vmatpush1.msra.mxu0 %v2718
    %3445 = vmatprep.subr.mxu0 %v2725
    %3446 = vmatpush1.msra.mxu0 %v2724
    %3447 = vmatprep.subr.mxu0 %v2731
    %3448 = vmatpush1.msra.mxu0 %v2730
    %3449 = vmatprep.subr.mxu0 %v2737
    %3450 = vmatpush1.msra.mxu0 %v2736
    %3451 = vmatprep.subr.mxu0 %v2743
    %3452 = vmatpush1.msra.mxu0 %v2742
    %3453 = vmatprep.subr.mxu0 %v2749
    %3454 = vmatpush1.msra.mxu0 %v2748
    %3455 = vmatprep.subr.mxu0 %v2755
    %3456 = vmatpush1.msra.mxu0 %v2754
    %3457 = vmatprep.subr.mxu0 %v2761
    %3458 = vmatpush1.msra.mxu0 %v2760
    %3459 = vmatprep.subr.mxu0 %v2767
    %3460 = vmatpush1.msra.mxu0 %v2766
    %3461 = vmatprep.subr.mxu0 %v2773
    %3462 = vmatpush1.msra.mxu0 %v2772
    %3463 = vmatprep.mubr.f32.mxu0 %v2388
    %3464 = vmatmul.mubr.f32.gmra.mrb[0].mxu0 %v2387
    %v3465 = vpop.f32.mrb[0].mxu0
    %v3466 = vadd.f32 %v3395, %v3465
    %v3467 = vpop.f32.mrb[0].mxu0
    %v3468 = vadd.f32 %v3397, %v3467
    %3469 = vdwg.mxu0
    %3470 = vmatprep.subr.mxu0 %v2779
    %3471 = vmatpush1.msra.mxu0 %v2778
    %3472 = vmatprep.subr.mxu0 %v2785
    %3473 = vmatpush1.msra.mxu0 %v2784
    %3474 = vmatprep.subr.mxu0 %v2791
    %3475 = vmatpush1.msra.mxu0 %v2790
    %3476 = vmatprep.subr.mxu0 %v2797
    %3477 = vmatpush1.msra.mxu0 %v2796
    %3478 = vmatprep.subr.mxu0 %v2803
    %3479 = vmatpush1.msra.mxu0 %v2802
    %3480 = vmatprep.subr.mxu0 %v2809
    %3481 = vmatpush1.msra.mxu0 %v2808
    %3482 = vmatprep.subr.mxu0 %v2815
    %3483 = vmatpush1.msra.mxu0 %v2814
    %3484 = vmatprep.subr.mxu0 %v2821
    %3485 = vmatpush1.msra.mxu0 %v2820
    %3486 = vmatprep.subr.mxu0 %v2827
    %3487 = vmatpush1.msra.mxu0 %v2826
    %3488 = vmatprep.subr.mxu0 %v2833
    %3489 = vmatpush1.msra.mxu0 %v2832
    %3490 = vmatprep.subr.mxu0 %v2839
    %3491 = vmatpush1.msra.mxu0 %v2838
    %3492 = vmatprep.subr.mxu0 %v2845
    %3493 = vmatpush1.msra.mxu0 %v2844
    %3494 = vmatprep.subr.mxu0 %v2851
    %3495 = vmatpush1.msra.mxu0 %v2850
    %3496 = vmatprep.subr.mxu0 %v2857
    %3497 = vmatpush1.msra.mxu0 %v2856
    %3498 = vmatprep.subr.mxu0 %v2863
    %3499 = vmatpush1.msra.mxu0 %v2862
    %3500 = vmatprep.subr.mxu0 %v2869
    %3501 = vmatpush1.msra.mxu0 %v2868
    %3502 = vmatprep.subr.mxu0 0.0
    %3503 = vmatpush1.msra.mxu0 0.0
    %3504 = vmatprep.subr.mxu0 0.0
    %3505 = vmatpush1.msra.mxu0 0.0
    %3506 = vmatprep.subr.mxu0 0.0
    %3507 = vmatpush1.msra.mxu0 0.0
    %3508 = vmatprep.subr.mxu0 0.0
    %3509 = vmatpush1.msra.mxu0 0.0
    %3510 = vmatprep.subr.mxu0 0.0
    %3511 = vmatpush1.msra.mxu0 0.0
    %3512 = vmatprep.subr.mxu0 0.0
    %3513 = vmatpush1.msra.mxu0 0.0
    %3514 = vmatprep.subr.mxu0 0.0
    %3515 = vmatpush1.msra.mxu0 0.0
    %3516 = vmatprep.subr.mxu0 0.0
    %3517 = vmatpush1.msra.mxu0 0.0
    %3518 = vmatprep.subr.mxu0 0.0
    %3519 = vmatpush1.msra.mxu0 0.0
    %3520 = vmatprep.subr.mxu0 0.0
    %3521 = vmatpush1.msra.mxu0 0.0
    %3522 = vmatprep.subr.mxu0 0.0
    %3523 = vmatpush1.msra.mxu0 0.0
    %3524 = vmatprep.subr.mxu0 0.0
    %3525 = vmatpush1.msra.mxu0 0.0
    %3526 = vmatprep.subr.mxu0 0.0
    %3527 = vmatpush1.msra.mxu0 0.0
    %3528 = vmatprep.subr.mxu0 0.0
    %3529 = vmatpush1.msra.mxu0 0.0
    %3530 = vmatprep.subr.mxu0 0.0
    %3531 = vmatpush1.msra.mxu0 0.0
    %3532 = vmatprep.subr.mxu0 0.0
    %3533 = vmatpush1.msra.mxu0 0.0
    %3534 = vmatprep.mubr.f32.mxu0 0.0
    %3535 = vmatmul.mubr.f32.gmra.mrb[0].mxu0 %v2389
    %v3536 = vpop.f32.mrb[0].mxu0
    %v3537 = vadd.f32 %v3466, %v3536
    %v3538 = vpop.f32.mrb[0].mxu0
    %v3539 = vadd.f32 %v3468, %v3538
    %3540 = vdwg.mxu0
    %3541 = vst [vmem:[#allocation5] sm:$0xff] %v3111
    %3542 = vst [vmem:[#allocation5 + $0x8] sm:$0xff] %v3113
    %3543 = vst [vmem:[#allocation5 + $0x10] sm:$0xff] %v3324
    %3544 = vst [vmem:[#allocation5 + $0x18] sm:$0xff] %v3326
    %3545 = vst [vmem:[#allocation5 + $0x20] sm:$0xff] %v3537
    %vm3546 = vcmask 162816
    %3547 = vst.msk [vmem:[#allocation5 + $0x28] sm:$0xff] %vm3546, %v3539
    // Predicated region
    $region66: #{tpu_custom_call.1} parent=1 // pred_check
      _
    $region67: #{tpu_custom_call.1} parent=1 // pred_check_branch
      %3549 = sbr.rel (0) target = $region69
    $region68: #{tpu_custom_call.1} parent=1 // pred_region
      %s3551 = ssub.s32 768, 768
      %3552 = vsyncadd [#allocation4], %s3551
      %s3554 = sshll.u32 [#allocation5], 4
      %s3555 = int_to_ptr.vmem [resolvable:$true] %s3554
      %3557 = dma.vmem_to_hbm [thread:$0]  %s3555, 768, %s15, [#allocation4]
    $region69: #{tpu_custom_call.1} parent=1 // pred_fallthru
      _
    // Predicated region
    $region70: #{tpu_custom_call.1} parent=1 // pred_check
      _
    $region71: #{tpu_custom_call.1} parent=1 // pred_check_branch
      %3559 = sbr.rel (0) target = $region73
    $region72: #{tpu_custom_call.1} parent=1 // pred_region
      %3560 = dma.done [#allocation4], 768
    $region73: #{tpu_custom_call.1} parent=1 // pred_fallthru
      _
    %3561 = vsyncpa [#allocation3], 1
    %3562 = vsyncpa [#allocation4], 1

</llo_original>
